<compile_context>
chip_gen: v7x
topology: tpu7x:2x2x1
jax: 0.10.0
libtpu: 0.0.40
codegen_flags: <defaults>
</compile_context>

<pallas_src>
import jax
import jax.numpy as jnp
from jax.experimental import pallas as pl
from jax.experimental.pallas import tpu as pltpu

NUM_LAYERS = 3
H = 6            # logical hidden size (PyTorch)
G = 4 * H        # logical gate dim
HP = 8           # hidden size padded to the f32 sublane quantum
GP = 4 * HP      # padded gate dim (each gate is an aligned 8-lane block)


def lstm_kernel(x_ref, wih_ref, whh_ref, b_ref, fcw_ref, fcb_ref,
                out_ref, seq_ref, gx_ref):
    # x_ref:   (T*Bp, Hp)   time-major, batch- & feature-padded layer-0 input
    # wih_ref: (L, Hp, GP)  padded/transposed input->gate weights
    # whh_ref: (L, Hp, GP)  padded/transposed hidden->gate weights
    # b_ref:   (L, 1, GP)   combined bias (b_ih + b_hh), per-gate padded
    # fcw_ref: (Hp, 1), fcb_ref: (1, 1)
    # out_ref: (Bp, 1)
    # seq_ref: (T*Bp, Hp)   scratch: previous layer's output sequence
    # gx_ref:  (T*Bp, GP)   scratch: hoisted input projection of current layer
    TBp, Hp = seq_ref.shape
    Bp = out_ref.shape[0]
    T = TBp // Bp

    h = jnp.zeros((Bp, Hp), jnp.float32)
    for layer in range(NUM_LAYERS):
        src = x_ref if layer == 0 else seq_ref
        # Hoisted input projection: one tall matmul, off the h/c critical path.
        gx_ref[...] = (jnp.dot(src[...], wih_ref[layer],
                               preferred_element_type=jnp.float32)
                       + b_ref[layer])
        whh_t = whh_ref[layer]                               # (Hp, GP)
        h = jnp.zeros((Bp, Hp), jnp.float32)
        c = jnp.zeros((Bp, Hp), jnp.float32)
        write_seq = layer < NUM_LAYERS - 1
        for t in range(T):                                   # static T: fully unrolled
            row = t * Bp                                     # multiple of 8 -> aligned sublane block
            gates = gx_ref[pl.ds(row, Bp), :] + jnp.dot(
                h, whh_t, preferred_element_type=jnp.float32)    # (Bp, GP)
            # PyTorch gate order i, f, g, o; each slice is an aligned 8-lane block.
            i_g = jax.nn.sigmoid(gates[:, 0 * Hp:1 * Hp])
            f_g = jax.nn.sigmoid(gates[:, 1 * Hp:2 * Hp])
            g_g = jnp.tanh(gates[:, 2 * Hp:3 * Hp])
            o_g = jax.nn.sigmoid(gates[:, 3 * Hp:4 * Hp])
            c = f_g * c + i_g * g_g
            h = o_g * jnp.tanh(c)
            if write_seq:
                seq_ref[pl.ds(row, Bp), :] = h               # next layer's input
    # fc on the top layer's last-timestep hidden state.
    out_ref[...] = (jnp.dot(h, fcw_ref[...],
                            preferred_element_type=jnp.float32) + fcb_ref[...])


def _pack_gate_matrix(W, in_pad):
    """W: (4H, in) PyTorch gate-stacked (i,f,g,o). Returns (in_pad, GP) padded W^T."""
    in_dim = W.shape[1]
    blocks = []
    for k in range(4):
        blk = W[k * H:(k + 1) * H, :]                        # (H, in)
        blocks.append(jnp.pad(blk, ((0, HP - H), (0, in_pad - in_dim))))
    return jnp.concatenate(blocks, axis=0).T.astype(jnp.float32)   # (in_pad, GP)


def _pack_gate_bias(bih, bhh):
    b = bih + bhh
    blocks = [jnp.pad(b[k * H:(k + 1) * H], (0, HP - H)) for k in range(4)]
    return jnp.concatenate(blocks)[None, :].astype(jnp.float32)    # (1, GP)


def lstm_net_forward(x, params):
    """x: (B, T, 1) float32 (batch_first, like the PyTorch module). Returns (B, 1, 1)."""
    B, T, F = x.shape
    assert F == 1
    Bp = max(8, ((B + 7) // 8) * 8)       # pad batch to the f32 sublane quantum

    wih = jnp.stack([_pack_gate_matrix(params["layers"][l][0], HP)
                     for l in range(NUM_LAYERS)])            # (L, HP, GP)
    whh = jnp.stack([_pack_gate_matrix(params["layers"][l][1], HP)
                     for l in range(NUM_LAYERS)])            # (L, HP, GP)
    b = jnp.stack([_pack_gate_bias(params["layers"][l][2], params["layers"][l][3])
                   for l in range(NUM_LAYERS)])              # (L, 1, GP)
    fcw = jnp.pad(params["fc_w"], ((0, 0), (0, HP - H))).T.astype(jnp.float32)  # (HP, 1)
    fcb = params["fc_b"].reshape(1, 1).astype(jnp.float32)                      # (1, 1)

    # Time-major, batch/feature padded, flattened so each timestep occupies an
    # aligned 8-row block of a (T*Bp, HP) slab.
    x_pad = jnp.pad(x.astype(jnp.float32), ((0, Bp - B), (0, 0), (0, HP - F)))  # (Bp, T, HP)
    x_tm = jnp.transpose(x_pad, (1, 0, 2)).reshape(T * Bp, HP)                  # (T*Bp, HP)

    vmem = pl.BlockSpec(memory_space=pltpu.MemorySpace.VMEM)
    out = pl.pallas_call(
        lstm_kernel,
        out_shape=jax.ShapeDtypeStruct((Bp, 1), jnp.float32),
        in_specs=[vmem] * 6,
        out_specs=vmem,
        scratch_shapes=[
            pltpu.VMEM((T * Bp, HP), jnp.float32),   # inter-layer output sequence
            pltpu.VMEM((T * Bp, GP), jnp.float32),   # hoisted input-projection gates
        ],
    )(x_tm, wih, whh, b, fcw, fcb)

    return out[:B].reshape(-1, 1, 1)


def init_params(key):
    """Deterministic synthetic init matching nn.LSTM / nn.Linear parameter shapes."""
    s = 1.0 / jnp.sqrt(jnp.float32(H))
    keys = jax.random.split(key, 4 * NUM_LAYERS + 2)
    params = {"layers": []}
    k = 0
    for l in range(NUM_LAYERS):
        in_f = 1 if l == 0 else H
        Wih = jax.random.uniform(keys[k], (G, in_f), minval=-s, maxval=s); k += 1
        Whh = jax.random.uniform(keys[k], (G, H), minval=-s, maxval=s); k += 1
        bih = jax.random.uniform(keys[k], (G,), minval=-s, maxval=s); k += 1
        bhh = jax.random.uniform(keys[k], (G,), minval=-s, maxval=s); k += 1
        params["layers"].append((Wih, Whh, bih, bhh))
    params["fc_w"] = jax.random.uniform(keys[k], (1, H), minval=-s, maxval=s); k += 1
    params["fc_b"] = jax.random.uniform(keys[k], (1,), minval=-s, maxval=s)
    return params


def lstm_net_reference(x, params):
    """Pure-JAX reference reproducing PyTorch LSTM semantics, for verification."""
    B, T, _ = x.shape
    h_seq = x.astype(jnp.float32)
    for l in range(NUM_LAYERS):
        Wih, Whh, bih, bhh = params["layers"][l]
        h = jnp.zeros((B, H), jnp.float32)
        c = jnp.zeros((B, H), jnp.float32)
        outs = []
        for t in range(T):
            xt = h_seq[:, t, :]
            gates = xt @ Wih.T + bih + h @ Whh.T + bhh
            i_g = jax.nn.sigmoid(gates[:, 0 * H:1 * H])
            f_g = jax.nn.sigmoid(gates[:, 1 * H:2 * H])
            g_g = jnp.tanh(gates[:, 2 * H:3 * H])
            o_g = jax.nn.sigmoid(gates[:, 3 * H:4 * H])
            c = f_g * c + i_g * g_g
            h = o_g * jnp.tanh(c)
            outs.append(h)
        h_seq = jnp.stack(outs, axis=1)
    y = h_seq[:, -1, :] @ params["fc_w"].T + params["fc_b"]
    return y.reshape(-1, 1, 1)


if __name__ == "__main__":
    key = jax.random.PRNGKey(0)
    pkey, xkey = jax.random.split(key)
    params = init_params(pkey)

    B, T = 2, 8
    x = jax.random.normal(xkey, (B, T, 1), dtype=jnp.float32)

    out = lstm_net_forward(x, params)
    out = jax.block_until_ready(out)

    ref = lstm_net_reference(x, params)
    assert out.shape == (B, 1, 1)
    assert jnp.allclose(out, ref, atol=1e-5, rtol=1e-5)

    print("KERNEL_OK")
</pallas_src>

<mosaic_0001>
module attributes {stable_mosaic.version = 11 : i64} {
  func.func @lstm_kernel(%arg0: memref<64x8xf32, #tpu.memory_space<vmem>>, %arg1: memref<3x8x32xf32, #tpu.memory_space<vmem>>, %arg2: memref<3x8x32xf32, #tpu.memory_space<vmem>>, %arg3: memref<3x1x32xf32, #tpu.memory_space<vmem>>, %arg4: memref<8x1xf32, #tpu.memory_space<vmem>>, %arg5: memref<1x1xf32, #tpu.memory_space<vmem>>, %arg6: memref<8x1xf32, #tpu.memory_space<vmem>>, %arg7: memref<64x8xf32, #tpu.memory_space<vmem>>, %arg8: memref<64x32xf32, #tpu.memory_space<vmem>>) attributes {dimension_semantics = [], scalar_prefetch = 0 : i64, scratch_operands = 2 : i64, tpu.core_type = #tpu.core_type<tc>} {
    %c0 = arith.constant 0 : index
    %c0_0 = arith.constant 0 : index
    %0 = vector.load %arg0[%c0, %c0_0] : memref<64x8xf32, #tpu.memory_space<vmem>>, vector<64x8xf32>
    %c0_1 = arith.constant 0 : index
    %c0_2 = arith.constant 0 : index
    %c0_3 = arith.constant 0 : index
    %1 = vector.load %arg1[%c0_1, %c0_2, %c0_3] : memref<3x8x32xf32, #tpu.memory_space<vmem>>, vector<1x8x32xf32>
    %2 = vector.shape_cast %1 : vector<1x8x32xf32> to vector<8x32xf32>
    %cst = arith.constant dense<0.000000e+00> : vector<64x32xf32>
    %3 = tpu.matmul %0, %2, %cst {dimension_numbers = #tpu.dot_dimension_numbers<[1], [0], [0], [1], [0, 0, 1, 1], [], []>} : vector<64x8xf32>, vector<8x32xf32>, vector<64x32xf32> -> vector<64x32xf32>
    %c0_4 = arith.constant 0 : index
    %c0_5 = arith.constant 0 : index
    %c0_6 = arith.constant 0 : index
    %4 = vector.load %arg3[%c0_4, %c0_5, %c0_6] : memref<3x1x32xf32, #tpu.memory_space<vmem>>, vector<1x1x32xf32>
    %5 = vector.shape_cast %4 : vector<1x1x32xf32> to vector<1x32xf32>
    %6 = vector.broadcast %5 : vector<1x32xf32> to vector<64x32xf32>
    %7 = arith.addf %3, %6 : vector<64x32xf32>
    %c0_7 = arith.constant 0 : index
    %c0_8 = arith.constant 0 : index
    %8 = vector.load %arg8[%c0_7, %c0_8] : memref<64x32xf32, #tpu.memory_space<vmem>>, vector<64x32xf32>
    tpu.vector_store %arg8[%c0_7, %c0_8], %7 {strides = array<i32>} : memref<64x32xf32, #tpu.memory_space<vmem>>, vector<64x32xf32>,
    %c0_9 = arith.constant 0 : index
    %c0_10 = arith.constant 0 : index
    %c0_11 = arith.constant 0 : index
    %9 = vector.load %arg2[%c0_9, %c0_10, %c0_11] : memref<3x8x32xf32, #tpu.memory_space<vmem>>, vector<1x8x32xf32>
    %10 = vector.shape_cast %9 : vector<1x8x32xf32> to vector<8x32xf32>
    %cst_12 = arith.constant 0.000000e+00 : f32
    %11 = vector.broadcast %cst_12 : f32 to vector<8x8xf32>
    %cst_13 = arith.constant 0.000000e+00 : f32
    %12 = vector.broadcast %cst_13 : f32 to vector<8x8xf32>
    %c0_14 = arith.constant 0 : index
    %c0_15 = arith.constant 0 : index
    %13 = vector.load %arg8[%c0_14, %c0_15] : memref<64x32xf32, #tpu.memory_space<vmem>>, vector<8x32xf32>
    %cst_16 = arith.constant dense<0.000000e+00> : vector<8x32xf32>
    %14 = tpu.matmul %11, %10, %cst_16 {dimension_numbers = #tpu.dot_dimension_numbers<[1], [0], [0], [1], [0, 0, 1, 1], [], []>} : vector<8x8xf32>, vector<8x32xf32>, vector<8x32xf32> -> vector<8x32xf32>
    %15 = arith.addf %13, %14 : vector<8x32xf32>
    %16 = vector.extract_strided_slice %15 {offsets = [0, 0], sizes = [8, 8], strides = [1, 1]} : vector<8x32xf32> to vector<8x8xf32>
    %17 = arith.negf %16 : vector<8x8xf32>
    %18 = math.exp %17 : vector<8x8xf32>
    %cst_17 = arith.constant 1.000000e+00 : f32
    %19 = vector.broadcast %cst_17 : f32 to vector<8x8xf32>
    %20 = arith.addf %19, %18 : vector<8x8xf32>
    %21 = arith.divf %19, %20 : vector<8x8xf32>
    %22 = vector.extract_strided_slice %15 {offsets = [0, 8], sizes = [8, 8], strides = [1, 1]} : vector<8x32xf32> to vector<8x8xf32>
    %23 = arith.negf %22 : vector<8x8xf32>
    %24 = math.exp %23 : vector<8x8xf32>
    %cst_18 = arith.constant 1.000000e+00 : f32
    %25 = vector.broadcast %cst_18 : f32 to vector<8x8xf32>
    %26 = arith.addf %25, %24 : vector<8x8xf32>
    %27 = arith.divf %25, %26 : vector<8x8xf32>
    %28 = vector.extract_strided_slice %15 {offsets = [0, 16], sizes = [8, 8], strides = [1, 1]} : vector<8x32xf32> to vector<8x8xf32>
    %29 = math.tanh %28 : vector<8x8xf32>
    %30 = vector.extract_strided_slice %15 {offsets = [0, 24], sizes = [8, 8], strides = [1, 1]} : vector<8x32xf32> to vector<8x8xf32>
    %31 = arith.negf %30 : vector<8x8xf32>
    %32 = math.exp %31 : vector<8x8xf32>
    %cst_19 = arith.constant 1.000000e+00 : f32
    %33 = vector.broadcast %cst_19 : f32 to vector<8x8xf32>
    %34 = arith.addf %33, %32 : vector<8x8xf32>
    %35 = arith.divf %33, %34 : vector<8x8xf32>
    %36 = arith.mulf %27, %12 : vector<8x8xf32>
    %37 = arith.mulf %21, %29 : vector<8x8xf32>
    %38 = arith.addf %36, %37 : vector<8x8xf32>
    %39 = math.tanh %38 : vector<8x8xf32>
    %40 = arith.mulf %35, %39 : vector<8x8xf32>
    %c0_20 = arith.constant 0 : index
    %c0_21 = arith.constant 0 : index
    %41 = vector.load %arg7[%c0_20, %c0_21] : memref<64x8xf32, #tpu.memory_space<vmem>>, vector<8x8xf32>
    tpu.vector_store %arg7[%c0_20, %c0_21], %40 {strides = array<i32>} : memref<64x8xf32, #tpu.memory_space<vmem>>, vector<8x8xf32>,
    %c8 = arith.constant 8 : index
    %c0_22 = arith.constant 0 : index
    %42 = vector.load %arg8[%c8, %c0_22] : memref<64x32xf32, #tpu.memory_space<vmem>>, vector<8x32xf32>
    %cst_23 = arith.constant dense<0.000000e+00> : vector<8x32xf32>
    %43 = tpu.matmul %40, %10, %cst_23 {dimension_numbers = #tpu.dot_dimension_numbers<[1], [0], [0], [1], [0, 0, 1, 1], [], []>} : vector<8x8xf32>, vector<8x32xf32>, vector<8x32xf32> -> vector<8x32xf32>
    %44 = arith.addf %42, %43 : vector<8x32xf32>
    %45 = vector.extract_strided_slice %44 {offsets = [0, 0], sizes = [8, 8], strides = [1, 1]} : vector<8x32xf32> to vector<8x8xf32>
    %46 = arith.negf %45 : vector<8x8xf32>
    %47 = math.exp %46 : vector<8x8xf32>
    %cst_24 = arith.constant 1.000000e+00 : f32
    %48 = vector.broadcast %cst_24 : f32 to vector<8x8xf32>
    %49 = arith.addf %48, %47 : vector<8x8xf32>
    %50 = arith.divf %48, %49 : vector<8x8xf32>
    %51 = vector.extract_strided_slice %44 {offsets = [0, 8], sizes = [8, 8], strides = [1, 1]} : vector<8x32xf32> to vector<8x8xf32>
    %52 = arith.negf %51 : vector<8x8xf32>
    %53 = math.exp %52 : vector<8x8xf32>
    %cst_25 = arith.constant 1.000000e+00 : f32
    %54 = vector.broadcast %cst_25 : f32 to vector<8x8xf32>
    %55 = arith.addf %54, %53 : vector<8x8xf32>
    %56 = arith.divf %54, %55 : vector<8x8xf32>
    %57 = vector.extract_strided_slice %44 {offsets = [0, 16], sizes = [8, 8], strides = [1, 1]} : vector<8x32xf32> to vector<8x8xf32>
    %58 = math.tanh %57 : vector<8x8xf32>
    %59 = vector.extract_strided_slice %44 {offsets = [0, 24], sizes = [8, 8], strides = [1, 1]} : vector<8x32xf32> to vector<8x8xf32>
    %60 = arith.negf %59 : vector<8x8xf32>
    %61 = math.exp %60 : vector<8x8xf32>
    %cst_26 = arith.constant 1.000000e+00 : f32
    %62 = vector.broadcast %cst_26 : f32 to vector<8x8xf32>
    %63 = arith.addf %62, %61 : vector<8x8xf32>
    %64 = arith.divf %62, %63 : vector<8x8xf32>
    %65 = arith.mulf %56, %38 : vector<8x8xf32>
    %66 = arith.mulf %50, %58 : vector<8x8xf32>
    %67 = arith.addf %65, %66 : vector<8x8xf32>
    %68 = math.tanh %67 : vector<8x8xf32>
    %69 = arith.mulf %64, %68 : vector<8x8xf32>
    %c8_27 = arith.constant 8 : index
    %c0_28 = arith.constant 0 : index
    %70 = vector.load %arg7[%c8_27, %c0_28] : memref<64x8xf32, #tpu.memory_space<vmem>>, vector<8x8xf32>
    tpu.vector_store %arg7[%c8_27, %c0_28], %69 {strides = array<i32>} : memref<64x8xf32, #tpu.memory_space<vmem>>, vector<8x8xf32>,
    %c16 = arith.constant 16 : index
    %c0_29 = arith.constant 0 : index
    %71 = vector.load %arg8[%c16, %c0_29] : memref<64x32xf32, #tpu.memory_space<vmem>>, vector<8x32xf32>
    %cst_30 = arith.constant dense<0.000000e+00> : vector<8x32xf32>
    %72 = tpu.matmul %69, %10, %cst_30 {dimension_numbers = #tpu.dot_dimension_numbers<[1], [0], [0], [1], [0, 0, 1, 1], [], []>} : vector<8x8xf32>, vector<8x32xf32>, vector<8x32xf32> -> vector<8x32xf32>
    %73 = arith.addf %71, %72 : vector<8x32xf32>
    %74 = vector.extract_strided_slice %73 {offsets = [0, 0], sizes = [8, 8], strides = [1, 1]} : vector<8x32xf32> to vector<8x8xf32>
    %75 = arith.negf %74 : vector<8x8xf32>
    %76 = math.exp %75 : vector<8x8xf32>
    %cst_31 = arith.constant 1.000000e+00 : f32
    %77 = vector.broadcast %cst_31 : f32 to vector<8x8xf32>
    %78 = arith.addf %77, %76 : vector<8x8xf32>
    %79 = arith.divf %77, %78 : vector<8x8xf32>
    %80 = vector.extract_strided_slice %73 {offsets = [0, 8], sizes = [8, 8], strides = [1, 1]} : vector<8x32xf32> to vector<8x8xf32>
    %81 = arith.negf %80 : vector<8x8xf32>
    %82 = math.exp %81 : vector<8x8xf32>
    %cst_32 = arith.constant 1.000000e+00 : f32
    %83 = vector.broadcast %cst_32 : f32 to vector<8x8xf32>
    %84 = arith.addf %83, %82 : vector<8x8xf32>
    %85 = arith.divf %83, %84 : vector<8x8xf32>
    %86 = vector.extract_strided_slice %73 {offsets = [0, 16], sizes = [8, 8], strides = [1, 1]} : vector<8x32xf32> to vector<8x8xf32>
    %87 = math.tanh %86 : vector<8x8xf32>
    %88 = vector.extract_strided_slice %73 {offsets = [0, 24], sizes = [8, 8], strides = [1, 1]} : vector<8x32xf32> to vector<8x8xf32>
    %89 = arith.negf %88 : vector<8x8xf32>
    %90 = math.exp %89 : vector<8x8xf32>
    %cst_33 = arith.constant 1.000000e+00 : f32
    %91 = vector.broadcast %cst_33 : f32 to vector<8x8xf32>
    %92 = arith.addf %91, %90 : vector<8x8xf32>
    %93 = arith.divf %91, %92 : vector<8x8xf32>
    %94 = arith.mulf %85, %67 : vector<8x8xf32>
    %95 = arith.mulf %79, %87 : vector<8x8xf32>
    %96 = arith.addf %94, %95 : vector<8x8xf32>
    %97 = math.tanh %96 : vector<8x8xf32>
    %98 = arith.mulf %93, %97 : vector<8x8xf32>
    %c16_34 = arith.constant 16 : index
    %c0_35 = arith.constant 0 : index
    %99 = vector.load %arg7[%c16_34, %c0_35] : memref<64x8xf32, #tpu.memory_space<vmem>>, vector<8x8xf32>
    tpu.vector_store %arg7[%c16_34, %c0_35], %98 {strides = array<i32>} : memref<64x8xf32, #tpu.memory_space<vmem>>, vector<8x8xf32>,
    %c24 = arith.constant 24 : index
    %c0_36 = arith.constant 0 : index
    %100 = vector.load %arg8[%c24, %c0_36] : memref<64x32xf32, #tpu.memory_space<vmem>>, vector<8x32xf32>
    %cst_37 = arith.constant dense<0.000000e+00> : vector<8x32xf32>
    %101 = tpu.matmul %98, %10, %cst_37 {dimension_numbers = #tpu.dot_dimension_numbers<[1], [0], [0], [1], [0, 0, 1, 1], [], []>} : vector<8x8xf32>, vector<8x32xf32>, vector<8x32xf32> -> vector<8x32xf32>
    %102 = arith.addf %100, %101 : vector<8x32xf32>
    %103 = vector.extract_strided_slice %102 {offsets = [0, 0], sizes = [8, 8], strides = [1, 1]} : vector<8x32xf32> to vector<8x8xf32>
    %104 = arith.negf %103 : vector<8x8xf32>
    %105 = math.exp %104 : vector<8x8xf32>
    %cst_38 = arith.constant 1.000000e+00 : f32
    %106 = vector.broadcast %cst_38 : f32 to vector<8x8xf32>
    %107 = arith.addf %106, %105 : vector<8x8xf32>
    %108 = arith.divf %106, %107 : vector<8x8xf32>
    %109 = vector.extract_strided_slice %102 {offsets = [0, 8], sizes = [8, 8], strides = [1, 1]} : vector<8x32xf32> to vector<8x8xf32>
    %110 = arith.negf %109 : vector<8x8xf32>
    %111 = math.exp %110 : vector<8x8xf32>
    %cst_39 = arith.constant 1.000000e+00 : f32
    %112 = vector.broadcast %cst_39 : f32 to vector<8x8xf32>
    %113 = arith.addf %112, %111 : vector<8x8xf32>
    %114 = arith.divf %112, %113 : vector<8x8xf32>
    %115 = vector.extract_strided_slice %102 {offsets = [0, 16], sizes = [8, 8], strides = [1, 1]} : vector<8x32xf32> to vector<8x8xf32>
    %116 = math.tanh %115 : vector<8x8xf32>
    %117 = vector.extract_strided_slice %102 {offsets = [0, 24], sizes = [8, 8], strides = [1, 1]} : vector<8x32xf32> to vector<8x8xf32>
    %118 = arith.negf %117 : vector<8x8xf32>
    %119 = math.exp %118 : vector<8x8xf32>
    %cst_40 = arith.constant 1.000000e+00 : f32
    %120 = vector.broadcast %cst_40 : f32 to vector<8x8xf32>
    %121 = arith.addf %120, %119 : vector<8x8xf32>
    %122 = arith.divf %120, %121 : vector<8x8xf32>
    %123 = arith.mulf %114, %96 : vector<8x8xf32>
    %124 = arith.mulf %108, %116 : vector<8x8xf32>
    %125 = arith.addf %123, %124 : vector<8x8xf32>
    %126 = math.tanh %125 : vector<8x8xf32>
    %127 = arith.mulf %122, %126 : vector<8x8xf32>
    %c24_41 = arith.constant 24 : index
    %c0_42 = arith.constant 0 : index
    %128 = vector.load %arg7[%c24_41, %c0_42] : memref<64x8xf32, #tpu.memory_space<vmem>>, vector<8x8xf32>
    tpu.vector_store %arg7[%c24_41, %c0_42], %127 {strides = array<i32>} : memref<64x8xf32, #tpu.memory_space<vmem>>, vector<8x8xf32>,
    %c32 = arith.constant 32 : index
    %c0_43 = arith.constant 0 : index
    %129 = vector.load %arg8[%c32, %c0_43] : memref<64x32xf32, #tpu.memory_space<vmem>>, vector<8x32xf32>
    %cst_44 = arith.constant dense<0.000000e+00> : vector<8x32xf32>
    %130 = tpu.matmul %127, %10, %cst_44 {dimension_numbers = #tpu.dot_dimension_numbers<[1], [0], [0], [1], [0, 0, 1, 1], [], []>} : vector<8x8xf32>, vector<8x32xf32>, vector<8x32xf32> -> vector<8x32xf32>
    %131 = arith.addf %129, %130 : vector<8x32xf32>
    %132 = vector.extract_strided_slice %131 {offsets = [0, 0], sizes = [8, 8], strides = [1, 1]} : vector<8x32xf32> to vector<8x8xf32>
    %133 = arith.negf %132 : vector<8x8xf32>
    %134 = math.exp %133 : vector<8x8xf32>
    %cst_45 = arith.constant 1.000000e+00 : f32
    %135 = vector.broadcast %cst_45 : f32 to vector<8x8xf32>
    %136 = arith.addf %135, %134 : vector<8x8xf32>
    %137 = arith.divf %135, %136 : vector<8x8xf32>
    %138 = vector.extract_strided_slice %131 {offsets = [0, 8], sizes = [8, 8], strides = [1, 1]} : vector<8x32xf32> to vector<8x8xf32>
    %139 = arith.negf %138 : vector<8x8xf32>
    %140 = math.exp %139 : vector<8x8xf32>
    %cst_46 = arith.constant 1.000000e+00 : f32
    %141 = vector.broadcast %cst_46 : f32 to vector<8x8xf32>
    %142 = arith.addf %141, %140 : vector<8x8xf32>
    %143 = arith.divf %141, %142 : vector<8x8xf32>
    %144 = vector.extract_strided_slice %131 {offsets = [0, 16], sizes = [8, 8], strides = [1, 1]} : vector<8x32xf32> to vector<8x8xf32>
    %145 = math.tanh %144 : vector<8x8xf32>
    %146 = vector.extract_strided_slice %131 {offsets = [0, 24], sizes = [8, 8], strides = [1, 1]} : vector<8x32xf32> to vector<8x8xf32>
    %147 = arith.negf %146 : vector<8x8xf32>
    %148 = math.exp %147 : vector<8x8xf32>
    %cst_47 = arith.constant 1.000000e+00 : f32
    %149 = vector.broadcast %cst_47 : f32 to vector<8x8xf32>
    %150 = arith.addf %149, %148 : vector<8x8xf32>
    %151 = arith.divf %149, %150 : vector<8x8xf32>
    %152 = arith.mulf %143, %125 : vector<8x8xf32>
    %153 = arith.mulf %137, %145 : vector<8x8xf32>
    %154 = arith.addf %152, %153 : vector<8x8xf32>
    %155 = math.tanh %154 : vector<8x8xf32>
    %156 = arith.mulf %151, %155 : vector<8x8xf32>
    %c32_48 = arith.constant 32 : index
    %c0_49 = arith.constant 0 : index
    %157 = vector.load %arg7[%c32_48, %c0_49] : memref<64x8xf32, #tpu.memory_space<vmem>>, vector<8x8xf32>
    tpu.vector_store %arg7[%c32_48, %c0_49], %156 {strides = array<i32>} : memref<64x8xf32, #tpu.memory_space<vmem>>, vector<8x8xf32>,
    %c40 = arith.constant 40 : index
    %c0_50 = arith.constant 0 : index
    %158 = vector.load %arg8[%c40, %c0_50] : memref<64x32xf32, #tpu.memory_space<vmem>>, vector<8x32xf32>
    %cst_51 = arith.constant dense<0.000000e+00> : vector<8x32xf32>
    %159 = tpu.matmul %156, %10, %cst_51 {dimension_numbers = #tpu.dot_dimension_numbers<[1], [0], [0], [1], [0, 0, 1, 1], [], []>} : vector<8x8xf32>, vector<8x32xf32>, vector<8x32xf32> -> vector<8x32xf32>
    %160 = arith.addf %158, %159 : vector<8x32xf32>
    %161 = vector.extract_strided_slice %160 {offsets = [0, 0], sizes = [8, 8], strides = [1, 1]} : vector<8x32xf32> to vector<8x8xf32>
    %162 = arith.negf %161 : vector<8x8xf32>
    %163 = math.exp %162 : vector<8x8xf32>
    %cst_52 = arith.constant 1.000000e+00 : f32
    %164 = vector.broadcast %cst_52 : f32 to vector<8x8xf32>
    %165 = arith.addf %164, %163 : vector<8x8xf32>
    %166 = arith.divf %164, %165 : vector<8x8xf32>
    %167 = vector.extract_strided_slice %160 {offsets = [0, 8], sizes = [8, 8], strides = [1, 1]} : vector<8x32xf32> to vector<8x8xf32>
    %168 = arith.negf %167 : vector<8x8xf32>
    %169 = math.exp %168 : vector<8x8xf32>
    %cst_53 = arith.constant 1.000000e+00 : f32
    %170 = vector.broadcast %cst_53 : f32 to vector<8x8xf32>
    %171 = arith.addf %170, %169 : vector<8x8xf32>
    %172 = arith.divf %170, %171 : vector<8x8xf32>
    %173 = vector.extract_strided_slice %160 {offsets = [0, 16], sizes = [8, 8], strides = [1, 1]} : vector<8x32xf32> to vector<8x8xf32>
    %174 = math.tanh %173 : vector<8x8xf32>
    %175 = vector.extract_strided_slice %160 {offsets = [0, 24], sizes = [8, 8], strides = [1, 1]} : vector<8x32xf32> to vector<8x8xf32>
    %176 = arith.negf %175 : vector<8x8xf32>
    %177 = math.exp %176 : vector<8x8xf32>
    %cst_54 = arith.constant 1.000000e+00 : f32
    %178 = vector.broadcast %cst_54 : f32 to vector<8x8xf32>
    %179 = arith.addf %178, %177 : vector<8x8xf32>
    %180 = arith.divf %178, %179 : vector<8x8xf32>
    %181 = arith.mulf %172, %154 : vector<8x8xf32>
    %182 = arith.mulf %166, %174 : vector<8x8xf32>
    %183 = arith.addf %181, %182 : vector<8x8xf32>
    %184 = math.tanh %183 : vector<8x8xf32>
    %185 = arith.mulf %180, %184 : vector<8x8xf32>
    %c40_55 = arith.constant 40 : index
    %c0_56 = arith.constant 0 : index
    %186 = vector.load %arg7[%c40_55, %c0_56] : memref<64x8xf32, #tpu.memory_space<vmem>>, vector<8x8xf32>
    tpu.vector_store %arg7[%c40_55, %c0_56], %185 {strides = array<i32>} : memref<64x8xf32, #tpu.memory_space<vmem>>, vector<8x8xf32>,
    %c48 = arith.constant 48 : index
    %c0_57 = arith.constant 0 : index
    %187 = vector.load %arg8[%c48, %c0_57] : memref<64x32xf32, #tpu.memory_space<vmem>>, vector<8x32xf32>
    %cst_58 = arith.constant dense<0.000000e+00> : vector<8x32xf32>
    %188 = tpu.matmul %185, %10, %cst_58 {dimension_numbers = #tpu.dot_dimension_numbers<[1], [0], [0], [1], [0, 0, 1, 1], [], []>} : vector<8x8xf32>, vector<8x32xf32>, vector<8x32xf32> -> vector<8x32xf32>
    %189 = arith.addf %187, %188 : vector<8x32xf32>
    %190 = vector.extract_strided_slice %189 {offsets = [0, 0], sizes = [8, 8], strides = [1, 1]} : vector<8x32xf32> to vector<8x8xf32>
    %191 = arith.negf %190 : vector<8x8xf32>
    %192 = math.exp %191 : vector<8x8xf32>
    %cst_59 = arith.constant 1.000000e+00 : f32
    %193 = vector.broadcast %cst_59 : f32 to vector<8x8xf32>
    %194 = arith.addf %193, %192 : vector<8x8xf32>
    %195 = arith.divf %193, %194 : vector<8x8xf32>
    %196 = vector.extract_strided_slice %189 {offsets = [0, 8], sizes = [8, 8], strides = [1, 1]} : vector<8x32xf32> to vector<8x8xf32>
    %197 = arith.negf %196 : vector<8x8xf32>
    %198 = math.exp %197 : vector<8x8xf32>
    %cst_60 = arith.constant 1.000000e+00 : f32
    %199 = vector.broadcast %cst_60 : f32 to vector<8x8xf32>
    %200 = arith.addf %199, %198 : vector<8x8xf32>
    %201 = arith.divf %199, %200 : vector<8x8xf32>
    %202 = vector.extract_strided_slice %189 {offsets = [0, 16], sizes = [8, 8], strides = [1, 1]} : vector<8x32xf32> to vector<8x8xf32>
    %203 = math.tanh %202 : vector<8x8xf32>
    %204 = vector.extract_strided_slice %189 {offsets = [0, 24], sizes = [8, 8], strides = [1, 1]} : vector<8x32xf32> to vector<8x8xf32>
    %205 = arith.negf %204 : vector<8x8xf32>
    %206 = math.exp %205 : vector<8x8xf32>
    %cst_61 = arith.constant 1.000000e+00 : f32
    %207 = vector.broadcast %cst_61 : f32 to vector<8x8xf32>
    %208 = arith.addf %207, %206 : vector<8x8xf32>
    %209 = arith.divf %207, %208 : vector<8x8xf32>
    %210 = arith.mulf %201, %183 : vector<8x8xf32>
    %211 = arith.mulf %195, %203 : vector<8x8xf32>
    %212 = arith.addf %210, %211 : vector<8x8xf32>
    %213 = math.tanh %212 : vector<8x8xf32>
    %214 = arith.mulf %209, %213 : vector<8x8xf32>
    %c48_62 = arith.constant 48 : index
    %c0_63 = arith.constant 0 : index
    %215 = vector.load %arg7[%c48_62, %c0_63] : memref<64x8xf32, #tpu.memory_space<vmem>>, vector<8x8xf32>
    tpu.vector_store %arg7[%c48_62, %c0_63], %214 {strides = array<i32>} : memref<64x8xf32, #tpu.memory_space<vmem>>, vector<8x8xf32>,
    %c56 = arith.constant 56 : index
    %c0_64 = arith.constant 0 : index
    %216 = vector.load %arg8[%c56, %c0_64] : memref<64x32xf32, #tpu.memory_space<vmem>>, vector<8x32xf32>
    %cst_65 = arith.constant dense<0.000000e+00> : vector<8x32xf32>
    %217 = tpu.matmul %214, %10, %cst_65 {dimension_numbers = #tpu.dot_dimension_numbers<[1], [0], [0], [1], [0, 0, 1, 1], [], []>} : vector<8x8xf32>, vector<8x32xf32>, vector<8x32xf32> -> vector<8x32xf32>
    %218 = arith.addf %216, %217 : vector<8x32xf32>
    %219 = vector.extract_strided_slice %218 {offsets = [0, 0], sizes = [8, 8], strides = [1, 1]} : vector<8x32xf32> to vector<8x8xf32>
    %220 = arith.negf %219 : vector<8x8xf32>
    %221 = math.exp %220 : vector<8x8xf32>
    %cst_66 = arith.constant 1.000000e+00 : f32
    %222 = vector.broadcast %cst_66 : f32 to vector<8x8xf32>
    %223 = arith.addf %222, %221 : vector<8x8xf32>
    %224 = arith.divf %222, %223 : vector<8x8xf32>
    %225 = vector.extract_strided_slice %218 {offsets = [0, 8], sizes = [8, 8], strides = [1, 1]} : vector<8x32xf32> to vector<8x8xf32>
    %226 = arith.negf %225 : vector<8x8xf32>
    %227 = math.exp %226 : vector<8x8xf32>
    %cst_67 = arith.constant 1.000000e+00 : f32
    %228 = vector.broadcast %cst_67 : f32 to vector<8x8xf32>
    %229 = arith.addf %228, %227 : vector<8x8xf32>
    %230 = arith.divf %228, %229 : vector<8x8xf32>
    %231 = vector.extract_strided_slice %218 {offsets = [0, 16], sizes = [8, 8], strides = [1, 1]} : vector<8x32xf32> to vector<8x8xf32>
    %232 = math.tanh %231 : vector<8x8xf32>
    %233 = vector.extract_strided_slice %218 {offsets = [0, 24], sizes = [8, 8], strides = [1, 1]} : vector<8x32xf32> to vector<8x8xf32>
    %234 = arith.negf %233 : vector<8x8xf32>
    %235 = math.exp %234 : vector<8x8xf32>
    %cst_68 = arith.constant 1.000000e+00 : f32
    %236 = vector.broadcast %cst_68 : f32 to vector<8x8xf32>
    %237 = arith.addf %236, %235 : vector<8x8xf32>
    %238 = arith.divf %236, %237 : vector<8x8xf32>
    %239 = arith.mulf %230, %212 : vector<8x8xf32>
    %240 = arith.mulf %224, %232 : vector<8x8xf32>
    %241 = arith.addf %239, %240 : vector<8x8xf32>
    %242 = math.tanh %241 : vector<8x8xf32>
    %243 = arith.mulf %238, %242 : vector<8x8xf32>
    %c56_69 = arith.constant 56 : index
    %c0_70 = arith.constant 0 : index
    %244 = vector.load %arg7[%c56_69, %c0_70] : memref<64x8xf32, #tpu.memory_space<vmem>>, vector<8x8xf32>
    tpu.vector_store %arg7[%c56_69, %c0_70], %243 {strides = array<i32>} : memref<64x8xf32, #tpu.memory_space<vmem>>, vector<8x8xf32>,
    %c0_71 = arith.constant 0 : index
    %c0_72 = arith.constant 0 : index
    %245 = vector.load %arg7[%c0_71, %c0_72] : memref<64x8xf32, #tpu.memory_space<vmem>>, vector<64x8xf32>
    %c1 = arith.constant 1 : index
    %c0_73 = arith.constant 0 : index
    %c0_74 = arith.constant 0 : index
    %246 = vector.load %arg1[%c1, %c0_73, %c0_74] : memref<3x8x32xf32, #tpu.memory_space<vmem>>, vector<1x8x32xf32>
    %247 = vector.shape_cast %246 : vector<1x8x32xf32> to vector<8x32xf32>
    %cst_75 = arith.constant dense<0.000000e+00> : vector<64x32xf32>
    %248 = tpu.matmul %245, %247, %cst_75 {dimension_numbers = #tpu.dot_dimension_numbers<[1], [0], [0], [1], [0, 0, 1, 1], [], []>} : vector<64x8xf32>, vector<8x32xf32>, vector<64x32xf32> -> vector<64x32xf32>
    %c1_76 = arith.constant 1 : index
    %c0_77 = arith.constant 0 : index
    %c0_78 = arith.constant 0 : index
    %249 = vector.load %arg3[%c1_76, %c0_77, %c0_78] : memref<3x1x32xf32, #tpu.memory_space<vmem>>, vector<1x1x32xf32>
    %250 = vector.shape_cast %249 : vector<1x1x32xf32> to vector<1x32xf32>
    %251 = vector.broadcast %250 : vector<1x32xf32> to vector<64x32xf32>
    %252 = arith.addf %248, %251 : vector<64x32xf32>
    %c0_79 = arith.constant 0 : index
    %c0_80 = arith.constant 0 : index
    %253 = vector.load %arg8[%c0_79, %c0_80] : memref<64x32xf32, #tpu.memory_space<vmem>>, vector<64x32xf32>
    tpu.vector_store %arg8[%c0_79, %c0_80], %252 {strides = array<i32>} : memref<64x32xf32, #tpu.memory_space<vmem>>, vector<64x32xf32>,
    %c1_81 = arith.constant 1 : index
    %c0_82 = arith.constant 0 : index
    %c0_83 = arith.constant 0 : index
    %254 = vector.load %arg2[%c1_81, %c0_82, %c0_83] : memref<3x8x32xf32, #tpu.memory_space<vmem>>, vector<1x8x32xf32>
    %255 = vector.shape_cast %254 : vector<1x8x32xf32> to vector<8x32xf32>
    %cst_84 = arith.constant 0.000000e+00 : f32
    %256 = vector.broadcast %cst_84 : f32 to vector<8x8xf32>
    %cst_85 = arith.constant 0.000000e+00 : f32
    %257 = vector.broadcast %cst_85 : f32 to vector<8x8xf32>
    %c0_86 = arith.constant 0 : index
    %c0_87 = arith.constant 0 : index
    %258 = vector.load %arg8[%c0_86, %c0_87] : memref<64x32xf32, #tpu.memory_space<vmem>>, vector<8x32xf32>
    %cst_88 = arith.constant dense<0.000000e+00> : vector<8x32xf32>
    %259 = tpu.matmul %256, %255, %cst_88 {dimension_numbers = #tpu.dot_dimension_numbers<[1], [0], [0], [1], [0, 0, 1, 1], [], []>} : vector<8x8xf32>, vector<8x32xf32>, vector<8x32xf32> -> vector<8x32xf32>
    %260 = arith.addf %258, %259 : vector<8x32xf32>
    %261 = vector.extract_strided_slice %260 {offsets = [0, 0], sizes = [8, 8], strides = [1, 1]} : vector<8x32xf32> to vector<8x8xf32>
    %262 = arith.negf %261 : vector<8x8xf32>
    %263 = math.exp %262 : vector<8x8xf32>
    %cst_89 = arith.constant 1.000000e+00 : f32
    %264 = vector.broadcast %cst_89 : f32 to vector<8x8xf32>
    %265 = arith.addf %264, %263 : vector<8x8xf32>
    %266 = arith.divf %264, %265 : vector<8x8xf32>
    %267 = vector.extract_strided_slice %260 {offsets = [0, 8], sizes = [8, 8], strides = [1, 1]} : vector<8x32xf32> to vector<8x8xf32>
    %268 = arith.negf %267 : vector<8x8xf32>
    %269 = math.exp %268 : vector<8x8xf32>
    %cst_90 = arith.constant 1.000000e+00 : f32
    %270 = vector.broadcast %cst_90 : f32 to vector<8x8xf32>
    %271 = arith.addf %270, %269 : vector<8x8xf32>
    %272 = arith.divf %270, %271 : vector<8x8xf32>
    %273 = vector.extract_strided_slice %260 {offsets = [0, 16], sizes = [8, 8], strides = [1, 1]} : vector<8x32xf32> to vector<8x8xf32>
    %274 = math.tanh %273 : vector<8x8xf32>
    %275 = vector.extract_strided_slice %260 {offsets = [0, 24], sizes = [8, 8], strides = [1, 1]} : vector<8x32xf32> to vector<8x8xf32>
    %276 = arith.negf %275 : vector<8x8xf32>
    %277 = math.exp %276 : vector<8x8xf32>
    %cst_91 = arith.constant 1.000000e+00 : f32
    %278 = vector.broadcast %cst_91 : f32 to vector<8x8xf32>
    %279 = arith.addf %278, %277 : vector<8x8xf32>
    %280 = arith.divf %278, %279 : vector<8x8xf32>
    %281 = arith.mulf %272, %257 : vector<8x8xf32>
    %282 = arith.mulf %266, %274 : vector<8x8xf32>
    %283 = arith.addf %281, %282 : vector<8x8xf32>
    %284 = math.tanh %283 : vector<8x8xf32>
    %285 = arith.mulf %280, %284 : vector<8x8xf32>
    %c0_92 = arith.constant 0 : index
    %c0_93 = arith.constant 0 : index
    %286 = vector.load %arg7[%c0_92, %c0_93] : memref<64x8xf32, #tpu.memory_space<vmem>>, vector<8x8xf32>
    tpu.vector_store %arg7[%c0_92, %c0_93], %285 {strides = array<i32>} : memref<64x8xf32, #tpu.memory_space<vmem>>, vector<8x8xf32>,
    %c8_94 = arith.constant 8 : index
    %c0_95 = arith.constant 0 : index
    %287 = vector.load %arg8[%c8_94, %c0_95] : memref<64x32xf32, #tpu.memory_space<vmem>>, vector<8x32xf32>
    %cst_96 = arith.constant dense<0.000000e+00> : vector<8x32xf32>
    %288 = tpu.matmul %285, %255, %cst_96 {dimension_numbers = #tpu.dot_dimension_numbers<[1], [0], [0], [1], [0, 0, 1, 1], [], []>} : vector<8x8xf32>, vector<8x32xf32>, vector<8x32xf32> -> vector<8x32xf32>
    %289 = arith.addf %287, %288 : vector<8x32xf32>
    %290 = vector.extract_strided_slice %289 {offsets = [0, 0], sizes = [8, 8], strides = [1, 1]} : vector<8x32xf32> to vector<8x8xf32>
    %291 = arith.negf %290 : vector<8x8xf32>
    %292 = math.exp %291 : vector<8x8xf32>
    %cst_97 = arith.constant 1.000000e+00 : f32
    %293 = vector.broadcast %cst_97 : f32 to vector<8x8xf32>
    %294 = arith.addf %293, %292 : vector<8x8xf32>
    %295 = arith.divf %293, %294 : vector<8x8xf32>
    %296 = vector.extract_strided_slice %289 {offsets = [0, 8], sizes = [8, 8], strides = [1, 1]} : vector<8x32xf32> to vector<8x8xf32>
    %297 = arith.negf %296 : vector<8x8xf32>
    %298 = math.exp %297 : vector<8x8xf32>
    %cst_98 = arith.constant 1.000000e+00 : f32
    %299 = vector.broadcast %cst_98 : f32 to vector<8x8xf32>
    %300 = arith.addf %299, %298 : vector<8x8xf32>
    %301 = arith.divf %299, %300 : vector<8x8xf32>
    %302 = vector.extract_strided_slice %289 {offsets = [0, 16], sizes = [8, 8], strides = [1, 1]} : vector<8x32xf32> to vector<8x8xf32>
    %303 = math.tanh %302 : vector<8x8xf32>
    %304 = vector.extract_strided_slice %289 {offsets = [0, 24], sizes = [8, 8], strides = [1, 1]} : vector<8x32xf32> to vector<8x8xf32>
    %305 = arith.negf %304 : vector<8x8xf32>
    %306 = math.exp %305 : vector<8x8xf32>
    %cst_99 = arith.constant 1.000000e+00 : f32
    %307 = vector.broadcast %cst_99 : f32 to vector<8x8xf32>
    %308 = arith.addf %307, %306 : vector<8x8xf32>
    %309 = arith.divf %307, %308 : vector<8x8xf32>
    %310 = arith.mulf %301, %283 : vector<8x8xf32>
    %311 = arith.mulf %295, %303 : vector<8x8xf32>
    %312 = arith.addf %310, %311 : vector<8x8xf32>
    %313 = math.tanh %312 : vector<8x8xf32>
    %314 = arith.mulf %309, %313 : vector<8x8xf32>
    %c8_100 = arith.constant 8 : index
    %c0_101 = arith.constant 0 : index
    %315 = vector.load %arg7[%c8_100, %c0_101] : memref<64x8xf32, #tpu.memory_space<vmem>>, vector<8x8xf32>
    tpu.vector_store %arg7[%c8_100, %c0_101], %314 {strides = array<i32>} : memref<64x8xf32, #tpu.memory_space<vmem>>, vector<8x8xf32>,
    %c16_102 = arith.constant 16 : index
    %c0_103 = arith.constant 0 : index
    %316 = vector.load %arg8[%c16_102, %c0_103] : memref<64x32xf32, #tpu.memory_space<vmem>>, vector<8x32xf32>
    %cst_104 = arith.constant dense<0.000000e+00> : vector<8x32xf32>
    %317 = tpu.matmul %314, %255, %cst_104 {dimension_numbers = #tpu.dot_dimension_numbers<[1], [0], [0], [1], [0, 0, 1, 1], [], []>} : vector<8x8xf32>, vector<8x32xf32>, vector<8x32xf32> -> vector<8x32xf32>
    %318 = arith.addf %316, %317 : vector<8x32xf32>
    %319 = vector.extract_strided_slice %318 {offsets = [0, 0], sizes = [8, 8], strides = [1, 1]} : vector<8x32xf32> to vector<8x8xf32>
    %320 = arith.negf %319 : vector<8x8xf32>
    %321 = math.exp %320 : vector<8x8xf32>
    %cst_105 = arith.constant 1.000000e+00 : f32
    %322 = vector.broadcast %cst_105 : f32 to vector<8x8xf32>
    %323 = arith.addf %322, %321 : vector<8x8xf32>
    %324 = arith.divf %322, %323 : vector<8x8xf32>
    %325 = vector.extract_strided_slice %318 {offsets = [0, 8], sizes = [8, 8], strides = [1, 1]} : vector<8x32xf32> to vector<8x8xf32>
    %326 = arith.negf %325 : vector<8x8xf32>
    %327 = math.exp %326 : vector<8x8xf32>
    %cst_106 = arith.constant 1.000000e+00 : f32
    %328 = vector.broadcast %cst_106 : f32 to vector<8x8xf32>
    %329 = arith.addf %328, %327 : vector<8x8xf32>
    %330 = arith.divf %328, %329 : vector<8x8xf32>
    %331 = vector.extract_strided_slice %318 {offsets = [0, 16], sizes = [8, 8], strides = [1, 1]} : vector<8x32xf32> to vector<8x8xf32>
    %332 = math.tanh %331 : vector<8x8xf32>
    %333 = vector.extract_strided_slice %318 {offsets = [0, 24], sizes = [8, 8], strides = [1, 1]} : vector<8x32xf32> to vector<8x8xf32>
    %334 = arith.negf %333 : vector<8x8xf32>
    %335 = math.exp %334 : vector<8x8xf32>
    %cst_107 = arith.constant 1.000000e+00 : f32
    %336 = vector.broadcast %cst_107 : f32 to vector<8x8xf32>
    %337 = arith.addf %336, %335 : vector<8x8xf32>
    %338 = arith.divf %336, %337 : vector<8x8xf32>
    %339 = arith.mulf %330, %312 : vector<8x8xf32>
    %340 = arith.mulf %324, %332 : vector<8x8xf32>
    %341 = arith.addf %339, %340 : vector<8x8xf32>
    %342 = math.tanh %341 : vector<8x8xf32>
    %343 = arith.mulf %338, %342 : vector<8x8xf32>
    %c16_108 = arith.constant 16 : index
    %c0_109 = arith.constant 0 : index
    %344 = vector.load %arg7[%c16_108, %c0_109] : memref<64x8xf32, #tpu.memory_space<vmem>>, vector<8x8xf32>
    tpu.vector_store %arg7[%c16_108, %c0_109], %343 {strides = array<i32>} : memref<64x8xf32, #tpu.memory_space<vmem>>, vector<8x8xf32>,
    %c24_110 = arith.constant 24 : index
    %c0_111 = arith.constant 0 : index
    %345 = vector.load %arg8[%c24_110, %c0_111] : memref<64x32xf32, #tpu.memory_space<vmem>>, vector<8x32xf32>
    %cst_112 = arith.constant dense<0.000000e+00> : vector<8x32xf32>
    %346 = tpu.matmul %343, %255, %cst_112 {dimension_numbers = #tpu.dot_dimension_numbers<[1], [0], [0], [1], [0, 0, 1, 1], [], []>} : vector<8x8xf32>, vector<8x32xf32>, vector<8x32xf32> -> vector<8x32xf32>
    %347 = arith.addf %345, %346 : vector<8x32xf32>
    %348 = vector.extract_strided_slice %347 {offsets = [0, 0], sizes = [8, 8], strides = [1, 1]} : vector<8x32xf32> to vector<8x8xf32>
    %349 = arith.negf %348 : vector<8x8xf32>
    %350 = math.exp %349 : vector<8x8xf32>
    %cst_113 = arith.constant 1.000000e+00 : f32
    %351 = vector.broadcast %cst_113 : f32 to vector<8x8xf32>
    %352 = arith.addf %351, %350 : vector<8x8xf32>
    %353 = arith.divf %351, %352 : vector<8x8xf32>
    %354 = vector.extract_strided_slice %347 {offsets = [0, 8], sizes = [8, 8], strides = [1, 1]} : vector<8x32xf32> to vector<8x8xf32>
    %355 = arith.negf %354 : vector<8x8xf32>
    %356 = math.exp %355 : vector<8x8xf32>
    %cst_114 = arith.constant 1.000000e+00 : f32
    %357 = vector.broadcast %cst_114 : f32 to vector<8x8xf32>
    %358 = arith.addf %357, %356 : vector<8x8xf32>
    %359 = arith.divf %357, %358 : vector<8x8xf32>
    %360 = vector.extract_strided_slice %347 {offsets = [0, 16], sizes = [8, 8], strides = [1, 1]} : vector<8x32xf32> to vector<8x8xf32>
    %361 = math.tanh %360 : vector<8x8xf32>
    %362 = vector.extract_strided_slice %347 {offsets = [0, 24], sizes = [8, 8], strides = [1, 1]} : vector<8x32xf32> to vector<8x8xf32>
    %363 = arith.negf %362 : vector<8x8xf32>
    %364 = math.exp %363 : vector<8x8xf32>
    %cst_115 = arith.constant 1.000000e+00 : f32
    %365 = vector.broadcast %cst_115 : f32 to vector<8x8xf32>
    %366 = arith.addf %365, %364 : vector<8x8xf32>
    %367 = arith.divf %365, %366 : vector<8x8xf32>
    %368 = arith.mulf %359, %341 : vector<8x8xf32>
    %369 = arith.mulf %353, %361 : vector<8x8xf32>
    %370 = arith.addf %368, %369 : vector<8x8xf32>
    %371 = math.tanh %370 : vector<8x8xf32>
    %372 = arith.mulf %367, %371 : vector<8x8xf32>
    %c24_116 = arith.constant 24 : index
    %c0_117 = arith.constant 0 : index
    %373 = vector.load %arg7[%c24_116, %c0_117] : memref<64x8xf32, #tpu.memory_space<vmem>>, vector<8x8xf32>
    tpu.vector_store %arg7[%c24_116, %c0_117], %372 {strides = array<i32>} : memref<64x8xf32, #tpu.memory_space<vmem>>, vector<8x8xf32>,
    %c32_118 = arith.constant 32 : index
    %c0_119 = arith.constant 0 : index
    %374 = vector.load %arg8[%c32_118, %c0_119] : memref<64x32xf32, #tpu.memory_space<vmem>>, vector<8x32xf32>
    %cst_120 = arith.constant dense<0.000000e+00> : vector<8x32xf32>
    %375 = tpu.matmul %372, %255, %cst_120 {dimension_numbers = #tpu.dot_dimension_numbers<[1], [0], [0], [1], [0, 0, 1, 1], [], []>} : vector<8x8xf32>, vector<8x32xf32>, vector<8x32xf32> -> vector<8x32xf32>
    %376 = arith.addf %374, %375 : vector<8x32xf32>
    %377 = vector.extract_strided_slice %376 {offsets = [0, 0], sizes = [8, 8], strides = [1, 1]} : vector<8x32xf32> to vector<8x8xf32>
    %378 = arith.negf %377 : vector<8x8xf32>
    %379 = math.exp %378 : vector<8x8xf32>
    %cst_121 = arith.constant 1.000000e+00 : f32
    %380 = vector.broadcast %cst_121 : f32 to vector<8x8xf32>
    %381 = arith.addf %380, %379 : vector<8x8xf32>
    %382 = arith.divf %380, %381 : vector<8x8xf32>
    %383 = vector.extract_strided_slice %376 {offsets = [0, 8], sizes = [8, 8], strides = [1, 1]} : vector<8x32xf32> to vector<8x8xf32>
    %384 = arith.negf %383 : vector<8x8xf32>
    %385 = math.exp %384 : vector<8x8xf32>
    %cst_122 = arith.constant 1.000000e+00 : f32
    %386 = vector.broadcast %cst_122 : f32 to vector<8x8xf32>
    %387 = arith.addf %386, %385 : vector<8x8xf32>
    %388 = arith.divf %386, %387 : vector<8x8xf32>
    %389 = vector.extract_strided_slice %376 {offsets = [0, 16], sizes = [8, 8], strides = [1, 1]} : vector<8x32xf32> to vector<8x8xf32>
    %390 = math.tanh %389 : vector<8x8xf32>
    %391 = vector.extract_strided_slice %376 {offsets = [0, 24], sizes = [8, 8], strides = [1, 1]} : vector<8x32xf32> to vector<8x8xf32>
    %392 = arith.negf %391 : vector<8x8xf32>
    %393 = math.exp %392 : vector<8x8xf32>
    %cst_123 = arith.constant 1.000000e+00 : f32
    %394 = vector.broadcast %cst_123 : f32 to vector<8x8xf32>
    %395 = arith.addf %394, %393 : vector<8x8xf32>
    %396 = arith.divf %394, %395 : vector<8x8xf32>
    %397 = arith.mulf %388, %370 : vector<8x8xf32>
    %398 = arith.mulf %382, %390 : vector<8x8xf32>
    %399 = arith.addf %397, %398 : vector<8x8xf32>
    %400 = math.tanh %399 : vector<8x8xf32>
    %401 = arith.mulf %396, %400 : vector<8x8xf32>
    %c32_124 = arith.constant 32 : index
    %c0_125 = arith.constant 0 : index
    %402 = vector.load %arg7[%c32_124, %c0_125] : memref<64x8xf32, #tpu.memory_space<vmem>>, vector<8x8xf32>
    tpu.vector_store %arg7[%c32_124, %c0_125], %401 {strides = array<i32>} : memref<64x8xf32, #tpu.memory_space<vmem>>, vector<8x8xf32>,
    %c40_126 = arith.constant 40 : index
    %c0_127 = arith.constant 0 : index
    %403 = vector.load %arg8[%c40_126, %c0_127] : memref<64x32xf32, #tpu.memory_space<vmem>>, vector<8x32xf32>
    %cst_128 = arith.constant dense<0.000000e+00> : vector<8x32xf32>
    %404 = tpu.matmul %401, %255, %cst_128 {dimension_numbers = #tpu.dot_dimension_numbers<[1], [0], [0], [1], [0, 0, 1, 1], [], []>} : vector<8x8xf32>, vector<8x32xf32>, vector<8x32xf32> -> vector<8x32xf32>
    %405 = arith.addf %403, %404 : vector<8x32xf32>
    %406 = vector.extract_strided_slice %405 {offsets = [0, 0], sizes = [8, 8], strides = [1, 1]} : vector<8x32xf32> to vector<8x8xf32>
    %407 = arith.negf %406 : vector<8x8xf32>
    %408 = math.exp %407 : vector<8x8xf32>
    %cst_129 = arith.constant 1.000000e+00 : f32
    %409 = vector.broadcast %cst_129 : f32 to vector<8x8xf32>
    %410 = arith.addf %409, %408 : vector<8x8xf32>
    %411 = arith.divf %409, %410 : vector<8x8xf32>
    %412 = vector.extract_strided_slice %405 {offsets = [0, 8], sizes = [8, 8], strides = [1, 1]} : vector<8x32xf32> to vector<8x8xf32>
    %413 = arith.negf %412 : vector<8x8xf32>
    %414 = math.exp %413 : vector<8x8xf32>
    %cst_130 = arith.constant 1.000000e+00 : f32
    %415 = vector.broadcast %cst_130 : f32 to vector<8x8xf32>
    %416 = arith.addf %415, %414 : vector<8x8xf32>
    %417 = arith.divf %415, %416 : vector<8x8xf32>
    %418 = vector.extract_strided_slice %405 {offsets = [0, 16], sizes = [8, 8], strides = [1, 1]} : vector<8x32xf32> to vector<8x8xf32>
    %419 = math.tanh %418 : vector<8x8xf32>
    %420 = vector.extract_strided_slice %405 {offsets = [0, 24], sizes = [8, 8], strides = [1, 1]} : vector<8x32xf32> to vector<8x8xf32>
    %421 = arith.negf %420 : vector<8x8xf32>
    %422 = math.exp %421 : vector<8x8xf32>
    %cst_131 = arith.constant 1.000000e+00 : f32
    %423 = vector.broadcast %cst_131 : f32 to vector<8x8xf32>
    %424 = arith.addf %423, %422 : vector<8x8xf32>
    %425 = arith.divf %423, %424 : vector<8x8xf32>
    %426 = arith.mulf %417, %399 : vector<8x8xf32>
    %427 = arith.mulf %411, %419 : vector<8x8xf32>
    %428 = arith.addf %426, %427 : vector<8x8xf32>
    %429 = math.tanh %428 : vector<8x8xf32>
    %430 = arith.mulf %425, %429 : vector<8x8xf32>
    %c40_132 = arith.constant 40 : index
    %c0_133 = arith.constant 0 : index
    %431 = vector.load %arg7[%c40_132, %c0_133] : memref<64x8xf32, #tpu.memory_space<vmem>>, vector<8x8xf32>
    tpu.vector_store %arg7[%c40_132, %c0_133], %430 {strides = array<i32>} : memref<64x8xf32, #tpu.memory_space<vmem>>, vector<8x8xf32>,
    %c48_134 = arith.constant 48 : index
    %c0_135 = arith.constant 0 : index
    %432 = vector.load %arg8[%c48_134, %c0_135] : memref<64x32xf32, #tpu.memory_space<vmem>>, vector<8x32xf32>
    %cst_136 = arith.constant dense<0.000000e+00> : vector<8x32xf32>
    %433 = tpu.matmul %430, %255, %cst_136 {dimension_numbers = #tpu.dot_dimension_numbers<[1], [0], [0], [1], [0, 0, 1, 1], [], []>} : vector<8x8xf32>, vector<8x32xf32>, vector<8x32xf32> -> vector<8x32xf32>
    %434 = arith.addf %432, %433 : vector<8x32xf32>
    %435 = vector.extract_strided_slice %434 {offsets = [0, 0], sizes = [8, 8], strides = [1, 1]} : vector<8x32xf32> to vector<8x8xf32>
    %436 = arith.negf %435 : vector<8x8xf32>
    %437 = math.exp %436 : vector<8x8xf32>
    %cst_137 = arith.constant 1.000000e+00 : f32
    %438 = vector.broadcast %cst_137 : f32 to vector<8x8xf32>
    %439 = arith.addf %438, %437 : vector<8x8xf32>
    %440 = arith.divf %438, %439 : vector<8x8xf32>
    %441 = vector.extract_strided_slice %434 {offsets = [0, 8], sizes = [8, 8], strides = [1, 1]} : vector<8x32xf32> to vector<8x8xf32>
    %442 = arith.negf %441 : vector<8x8xf32>
    %443 = math.exp %442 : vector<8x8xf32>
    %cst_138 = arith.constant 1.000000e+00 : f32
    %444 = vector.broadcast %cst_138 : f32 to vector<8x8xf32>
    %445 = arith.addf %444, %443 : vector<8x8xf32>
    %446 = arith.divf %444, %445 : vector<8x8xf32>
    %447 = vector.extract_strided_slice %434 {offsets = [0, 16], sizes = [8, 8], strides = [1, 1]} : vector<8x32xf32> to vector<8x8xf32>
    %448 = math.tanh %447 : vector<8x8xf32>
    %449 = vector.extract_strided_slice %434 {offsets = [0, 24], sizes = [8, 8], strides = [1, 1]} : vector<8x32xf32> to vector<8x8xf32>
    %450 = arith.negf %449 : vector<8x8xf32>
    %451 = math.exp %450 : vector<8x8xf32>
    %cst_139 = arith.constant 1.000000e+00 : f32
    %452 = vector.broadcast %cst_139 : f32 to vector<8x8xf32>
    %453 = arith.addf %452, %451 : vector<8x8xf32>
    %454 = arith.divf %452, %453 : vector<8x8xf32>
    %455 = arith.mulf %446, %428 : vector<8x8xf32>
    %456 = arith.mulf %440, %448 : vector<8x8xf32>
    %457 = arith.addf %455, %456 : vector<8x8xf32>
    %458 = math.tanh %457 : vector<8x8xf32>
    %459 = arith.mulf %454, %458 : vector<8x8xf32>
    %c48_140 = arith.constant 48 : index
    %c0_141 = arith.constant 0 : index
    %460 = vector.load %arg7[%c48_140, %c0_141] : memref<64x8xf32, #tpu.memory_space<vmem>>, vector<8x8xf32>
    tpu.vector_store %arg7[%c48_140, %c0_141], %459 {strides = array<i32>} : memref<64x8xf32, #tpu.memory_space<vmem>>, vector<8x8xf32>,
    %c56_142 = arith.constant 56 : index
    %c0_143 = arith.constant 0 : index
    %461 = vector.load %arg8[%c56_142, %c0_143] : memref<64x32xf32, #tpu.memory_space<vmem>>, vector<8x32xf32>
    %cst_144 = arith.constant dense<0.000000e+00> : vector<8x32xf32>
    %462 = tpu.matmul %459, %255, %cst_144 {dimension_numbers = #tpu.dot_dimension_numbers<[1], [0], [0], [1], [0, 0, 1, 1], [], []>} : vector<8x8xf32>, vector<8x32xf32>, vector<8x32xf32> -> vector<8x32xf32>
    %463 = arith.addf %461, %462 : vector<8x32xf32>
    %464 = vector.extract_strided_slice %463 {offsets = [0, 0], sizes = [8, 8], strides = [1, 1]} : vector<8x32xf32> to vector<8x8xf32>
    %465 = arith.negf %464 : vector<8x8xf32>
    %466 = math.exp %465 : vector<8x8xf32>
    %cst_145 = arith.constant 1.000000e+00 : f32
    %467 = vector.broadcast %cst_145 : f32 to vector<8x8xf32>
    %468 = arith.addf %467, %466 : vector<8x8xf32>
    %469 = arith.divf %467, %468 : vector<8x8xf32>
    %470 = vector.extract_strided_slice %463 {offsets = [0, 8], sizes = [8, 8], strides = [1, 1]} : vector<8x32xf32> to vector<8x8xf32>
    %471 = arith.negf %470 : vector<8x8xf32>
    %472 = math.exp %471 : vector<8x8xf32>
    %cst_146 = arith.constant 1.000000e+00 : f32
    %473 = vector.broadcast %cst_146 : f32 to vector<8x8xf32>
    %474 = arith.addf %473, %472 : vector<8x8xf32>
    %475 = arith.divf %473, %474 : vector<8x8xf32>
    %476 = vector.extract_strided_slice %463 {offsets = [0, 16], sizes = [8, 8], strides = [1, 1]} : vector<8x32xf32> to vector<8x8xf32>
    %477 = math.tanh %476 : vector<8x8xf32>
    %478 = vector.extract_strided_slice %463 {offsets = [0, 24], sizes = [8, 8], strides = [1, 1]} : vector<8x32xf32> to vector<8x8xf32>
    %479 = arith.negf %478 : vector<8x8xf32>
    %480 = math.exp %479 : vector<8x8xf32>
    %cst_147 = arith.constant 1.000000e+00 : f32
    %481 = vector.broadcast %cst_147 : f32 to vector<8x8xf32>
    %482 = arith.addf %481, %480 : vector<8x8xf32>
    %483 = arith.divf %481, %482 : vector<8x8xf32>
    %484 = arith.mulf %475, %457 : vector<8x8xf32>
    %485 = arith.mulf %469, %477 : vector<8x8xf32>
    %486 = arith.addf %484, %485 : vector<8x8xf32>
    %487 = math.tanh %486 : vector<8x8xf32>
    %488 = arith.mulf %483, %487 : vector<8x8xf32>
    %c56_148 = arith.constant 56 : index
    %c0_149 = arith.constant 0 : index
    %489 = vector.load %arg7[%c56_148, %c0_149] : memref<64x8xf32, #tpu.memory_space<vmem>>, vector<8x8xf32>
    tpu.vector_store %arg7[%c56_148, %c0_149], %488 {strides = array<i32>} : memref<64x8xf32, #tpu.memory_space<vmem>>, vector<8x8xf32>,
    %c0_150 = arith.constant 0 : index
    %c0_151 = arith.constant 0 : index
    %490 = vector.load %arg7[%c0_150, %c0_151] : memref<64x8xf32, #tpu.memory_space<vmem>>, vector<64x8xf32>
    %c2 = arith.constant 2 : index
    %c0_152 = arith.constant 0 : index
    %c0_153 = arith.constant 0 : index
    %491 = vector.load %arg1[%c2, %c0_152, %c0_153] : memref<3x8x32xf32, #tpu.memory_space<vmem>>, vector<1x8x32xf32>
    %492 = vector.shape_cast %491 : vector<1x8x32xf32> to vector<8x32xf32>
    %cst_154 = arith.constant dense<0.000000e+00> : vector<64x32xf32>
    %493 = tpu.matmul %490, %492, %cst_154 {dimension_numbers = #tpu.dot_dimension_numbers<[1], [0], [0], [1], [0, 0, 1, 1], [], []>} : vector<64x8xf32>, vector<8x32xf32>, vector<64x32xf32> -> vector<64x32xf32>
    %c2_155 = arith.constant 2 : index
    %c0_156 = arith.constant 0 : index
    %c0_157 = arith.constant 0 : index
    %494 = vector.load %arg3[%c2_155, %c0_156, %c0_157] : memref<3x1x32xf32, #tpu.memory_space<vmem>>, vector<1x1x32xf32>
    %495 = vector.shape_cast %494 : vector<1x1x32xf32> to vector<1x32xf32>
    %496 = vector.broadcast %495 : vector<1x32xf32> to vector<64x32xf32>
    %497 = arith.addf %493, %496 : vector<64x32xf32>
    %c0_158 = arith.constant 0 : index
    %c0_159 = arith.constant 0 : index
    %498 = vector.load %arg8[%c0_158, %c0_159] : memref<64x32xf32, #tpu.memory_space<vmem>>, vector<64x32xf32>
    tpu.vector_store %arg8[%c0_158, %c0_159], %497 {strides = array<i32>} : memref<64x32xf32, #tpu.memory_space<vmem>>, vector<64x32xf32>,
    %c2_160 = arith.constant 2 : index
    %c0_161 = arith.constant 0 : index
    %c0_162 = arith.constant 0 : index
    %499 = vector.load %arg2[%c2_160, %c0_161, %c0_162] : memref<3x8x32xf32, #tpu.memory_space<vmem>>, vector<1x8x32xf32>
    %500 = vector.shape_cast %499 : vector<1x8x32xf32> to vector<8x32xf32>
    %cst_163 = arith.constant 0.000000e+00 : f32
    %501 = vector.broadcast %cst_163 : f32 to vector<8x8xf32>
    %cst_164 = arith.constant 0.000000e+00 : f32
    %502 = vector.broadcast %cst_164 : f32 to vector<8x8xf32>
    %c0_165 = arith.constant 0 : index
    %c0_166 = arith.constant 0 : index
    %503 = vector.load %arg8[%c0_165, %c0_166] : memref<64x32xf32, #tpu.memory_space<vmem>>, vector<8x32xf32>
    %cst_167 = arith.constant dense<0.000000e+00> : vector<8x32xf32>
    %504 = tpu.matmul %501, %500, %cst_167 {dimension_numbers = #tpu.dot_dimension_numbers<[1], [0], [0], [1], [0, 0, 1, 1], [], []>} : vector<8x8xf32>, vector<8x32xf32>, vector<8x32xf32> -> vector<8x32xf32>
    %505 = arith.addf %503, %504 : vector<8x32xf32>
    %506 = vector.extract_strided_slice %505 {offsets = [0, 0], sizes = [8, 8], strides = [1, 1]} : vector<8x32xf32> to vector<8x8xf32>
    %507 = arith.negf %506 : vector<8x8xf32>
    %508 = math.exp %507 : vector<8x8xf32>
    %cst_168 = arith.constant 1.000000e+00 : f32
    %509 = vector.broadcast %cst_168 : f32 to vector<8x8xf32>
    %510 = arith.addf %509, %508 : vector<8x8xf32>
    %511 = arith.divf %509, %510 : vector<8x8xf32>
    %512 = vector.extract_strided_slice %505 {offsets = [0, 8], sizes = [8, 8], strides = [1, 1]} : vector<8x32xf32> to vector<8x8xf32>
    %513 = arith.negf %512 : vector<8x8xf32>
    %514 = math.exp %513 : vector<8x8xf32>
    %cst_169 = arith.constant 1.000000e+00 : f32
    %515 = vector.broadcast %cst_169 : f32 to vector<8x8xf32>
    %516 = arith.addf %515, %514 : vector<8x8xf32>
    %517 = arith.divf %515, %516 : vector<8x8xf32>
    %518 = vector.extract_strided_slice %505 {offsets = [0, 16], sizes = [8, 8], strides = [1, 1]} : vector<8x32xf32> to vector<8x8xf32>
    %519 = math.tanh %518 : vector<8x8xf32>
    %520 = vector.extract_strided_slice %505 {offsets = [0, 24], sizes = [8, 8], strides = [1, 1]} : vector<8x32xf32> to vector<8x8xf32>
    %521 = arith.negf %520 : vector<8x8xf32>
    %522 = math.exp %521 : vector<8x8xf32>
    %cst_170 = arith.constant 1.000000e+00 : f32
    %523 = vector.broadcast %cst_170 : f32 to vector<8x8xf32>
    %524 = arith.addf %523, %522 : vector<8x8xf32>
    %525 = arith.divf %523, %524 : vector<8x8xf32>
    %526 = arith.mulf %517, %502 : vector<8x8xf32>
    %527 = arith.mulf %511, %519 : vector<8x8xf32>
    %528 = arith.addf %526, %527 : vector<8x8xf32>
    %529 = math.tanh %528 : vector<8x8xf32>
    %530 = arith.mulf %525, %529 : vector<8x8xf32>
    %c8_171 = arith.constant 8 : index
    %c0_172 = arith.constant 0 : index
    %531 = vector.load %arg8[%c8_171, %c0_172] : memref<64x32xf32, #tpu.memory_space<vmem>>, vector<8x32xf32>
    %cst_173 = arith.constant dense<0.000000e+00> : vector<8x32xf32>
    %532 = tpu.matmul %530, %500, %cst_173 {dimension_numbers = #tpu.dot_dimension_numbers<[1], [0], [0], [1], [0, 0, 1, 1], [], []>} : vector<8x8xf32>, vector<8x32xf32>, vector<8x32xf32> -> vector<8x32xf32>
    %533 = arith.addf %531, %532 : vector<8x32xf32>
    %534 = vector.extract_strided_slice %533 {offsets = [0, 0], sizes = [8, 8], strides = [1, 1]} : vector<8x32xf32> to vector<8x8xf32>
    %535 = arith.negf %534 : vector<8x8xf32>
    %536 = math.exp %535 : vector<8x8xf32>
    %cst_174 = arith.constant 1.000000e+00 : f32
    %537 = vector.broadcast %cst_174 : f32 to vector<8x8xf32>
    %538 = arith.addf %537, %536 : vector<8x8xf32>
    %539 = arith.divf %537, %538 : vector<8x8xf32>
    %540 = vector.extract_strided_slice %533 {offsets = [0, 8], sizes = [8, 8], strides = [1, 1]} : vector<8x32xf32> to vector<8x8xf32>
    %541 = arith.negf %540 : vector<8x8xf32>
    %542 = math.exp %541 : vector<8x8xf32>
    %cst_175 = arith.constant 1.000000e+00 : f32
    %543 = vector.broadcast %cst_175 : f32 to vector<8x8xf32>
    %544 = arith.addf %543, %542 : vector<8x8xf32>
    %545 = arith.divf %543, %544 : vector<8x8xf32>
    %546 = vector.extract_strided_slice %533 {offsets = [0, 16], sizes = [8, 8], strides = [1, 1]} : vector<8x32xf32> to vector<8x8xf32>
    %547 = math.tanh %546 : vector<8x8xf32>
    %548 = vector.extract_strided_slice %533 {offsets = [0, 24], sizes = [8, 8], strides = [1, 1]} : vector<8x32xf32> to vector<8x8xf32>
    %549 = arith.negf %548 : vector<8x8xf32>
    %550 = math.exp %549 : vector<8x8xf32>
    %cst_176 = arith.constant 1.000000e+00 : f32
    %551 = vector.broadcast %cst_176 : f32 to vector<8x8xf32>
    %552 = arith.addf %551, %550 : vector<8x8xf32>
    %553 = arith.divf %551, %552 : vector<8x8xf32>
    %554 = arith.mulf %545, %528 : vector<8x8xf32>
    %555 = arith.mulf %539, %547 : vector<8x8xf32>
    %556 = arith.addf %554, %555 : vector<8x8xf32>
    %557 = math.tanh %556 : vector<8x8xf32>
    %558 = arith.mulf %553, %557 : vector<8x8xf32>
    %c16_177 = arith.constant 16 : index
    %c0_178 = arith.constant 0 : index
    %559 = vector.load %arg8[%c16_177, %c0_178] : memref<64x32xf32, #tpu.memory_space<vmem>>, vector<8x32xf32>
    %cst_179 = arith.constant dense<0.000000e+00> : vector<8x32xf32>
    %560 = tpu.matmul %558, %500, %cst_179 {dimension_numbers = #tpu.dot_dimension_numbers<[1], [0], [0], [1], [0, 0, 1, 1], [], []>} : vector<8x8xf32>, vector<8x32xf32>, vector<8x32xf32> -> vector<8x32xf32>
    %561 = arith.addf %559, %560 : vector<8x32xf32>
    %562 = vector.extract_strided_slice %561 {offsets = [0, 0], sizes = [8, 8], strides = [1, 1]} : vector<8x32xf32> to vector<8x8xf32>
    %563 = arith.negf %562 : vector<8x8xf32>
    %564 = math.exp %563 : vector<8x8xf32>
    %cst_180 = arith.constant 1.000000e+00 : f32
    %565 = vector.broadcast %cst_180 : f32 to vector<8x8xf32>
    %566 = arith.addf %565, %564 : vector<8x8xf32>
    %567 = arith.divf %565, %566 : vector<8x8xf32>
    %568 = vector.extract_strided_slice %561 {offsets = [0, 8], sizes = [8, 8], strides = [1, 1]} : vector<8x32xf32> to vector<8x8xf32>
    %569 = arith.negf %568 : vector<8x8xf32>
    %570 = math.exp %569 : vector<8x8xf32>
    %cst_181 = arith.constant 1.000000e+00 : f32
    %571 = vector.broadcast %cst_181 : f32 to vector<8x8xf32>
    %572 = arith.addf %571, %570 : vector<8x8xf32>
    %573 = arith.divf %571, %572 : vector<8x8xf32>
    %574 = vector.extract_strided_slice %561 {offsets = [0, 16], sizes = [8, 8], strides = [1, 1]} : vector<8x32xf32> to vector<8x8xf32>
    %575 = math.tanh %574 : vector<8x8xf32>
    %576 = vector.extract_strided_slice %561 {offsets = [0, 24], sizes = [8, 8], strides = [1, 1]} : vector<8x32xf32> to vector<8x8xf32>
    %577 = arith.negf %576 : vector<8x8xf32>
    %578 = math.exp %577 : vector<8x8xf32>
    %cst_182 = arith.constant 1.000000e+00 : f32
    %579 = vector.broadcast %cst_182 : f32 to vector<8x8xf32>
    %580 = arith.addf %579, %578 : vector<8x8xf32>
    %581 = arith.divf %579, %580 : vector<8x8xf32>
    %582 = arith.mulf %573, %556 : vector<8x8xf32>
    %583 = arith.mulf %567, %575 : vector<8x8xf32>
    %584 = arith.addf %582, %583 : vector<8x8xf32>
    %585 = math.tanh %584 : vector<8x8xf32>
    %586 = arith.mulf %581, %585 : vector<8x8xf32>
    %c24_183 = arith.constant 24 : index
    %c0_184 = arith.constant 0 : index
    %587 = vector.load %arg8[%c24_183, %c0_184] : memref<64x32xf32, #tpu.memory_space<vmem>>, vector<8x32xf32>
    %cst_185 = arith.constant dense<0.000000e+00> : vector<8x32xf32>
    %588 = tpu.matmul %586, %500, %cst_185 {dimension_numbers = #tpu.dot_dimension_numbers<[1], [0], [0], [1], [0, 0, 1, 1], [], []>} : vector<8x8xf32>, vector<8x32xf32>, vector<8x32xf32> -> vector<8x32xf32>
    %589 = arith.addf %587, %588 : vector<8x32xf32>
    %590 = vector.extract_strided_slice %589 {offsets = [0, 0], sizes = [8, 8], strides = [1, 1]} : vector<8x32xf32> to vector<8x8xf32>
    %591 = arith.negf %590 : vector<8x8xf32>
    %592 = math.exp %591 : vector<8x8xf32>
    %cst_186 = arith.constant 1.000000e+00 : f32
    %593 = vector.broadcast %cst_186 : f32 to vector<8x8xf32>
    %594 = arith.addf %593, %592 : vector<8x8xf32>
    %595 = arith.divf %593, %594 : vector<8x8xf32>
    %596 = vector.extract_strided_slice %589 {offsets = [0, 8], sizes = [8, 8], strides = [1, 1]} : vector<8x32xf32> to vector<8x8xf32>
    %597 = arith.negf %596 : vector<8x8xf32>
    %598 = math.exp %597 : vector<8x8xf32>
    %cst_187 = arith.constant 1.000000e+00 : f32
    %599 = vector.broadcast %cst_187 : f32 to vector<8x8xf32>
    %600 = arith.addf %599, %598 : vector<8x8xf32>
    %601 = arith.divf %599, %600 : vector<8x8xf32>
    %602 = vector.extract_strided_slice %589 {offsets = [0, 16], sizes = [8, 8], strides = [1, 1]} : vector<8x32xf32> to vector<8x8xf32>
    %603 = math.tanh %602 : vector<8x8xf32>
    %604 = vector.extract_strided_slice %589 {offsets = [0, 24], sizes = [8, 8], strides = [1, 1]} : vector<8x32xf32> to vector<8x8xf32>
    %605 = arith.negf %604 : vector<8x8xf32>
    %606 = math.exp %605 : vector<8x8xf32>
    %cst_188 = arith.constant 1.000000e+00 : f32
    %607 = vector.broadcast %cst_188 : f32 to vector<8x8xf32>
    %608 = arith.addf %607, %606 : vector<8x8xf32>
    %609 = arith.divf %607, %608 : vector<8x8xf32>
    %610 = arith.mulf %601, %584 : vector<8x8xf32>
    %611 = arith.mulf %595, %603 : vector<8x8xf32>
    %612 = arith.addf %610, %611 : vector<8x8xf32>
    %613 = math.tanh %612 : vector<8x8xf32>
    %614 = arith.mulf %609, %613 : vector<8x8xf32>
    %c32_189 = arith.constant 32 : index
    %c0_190 = arith.constant 0 : index
    %615 = vector.load %arg8[%c32_189, %c0_190] : memref<64x32xf32, #tpu.memory_space<vmem>>, vector<8x32xf32>
    %cst_191 = arith.constant dense<0.000000e+00> : vector<8x32xf32>
    %616 = tpu.matmul %614, %500, %cst_191 {dimension_numbers = #tpu.dot_dimension_numbers<[1], [0], [0], [1], [0, 0, 1, 1], [], []>} : vector<8x8xf32>, vector<8x32xf32>, vector<8x32xf32> -> vector<8x32xf32>
    %617 = arith.addf %615, %616 : vector<8x32xf32>
    %618 = vector.extract_strided_slice %617 {offsets = [0, 0], sizes = [8, 8], strides = [1, 1]} : vector<8x32xf32> to vector<8x8xf32>
    %619 = arith.negf %618 : vector<8x8xf32>
    %620 = math.exp %619 : vector<8x8xf32>
    %cst_192 = arith.constant 1.000000e+00 : f32
    %621 = vector.broadcast %cst_192 : f32 to vector<8x8xf32>
    %622 = arith.addf %621, %620 : vector<8x8xf32>
    %623 = arith.divf %621, %622 : vector<8x8xf32>
    %624 = vector.extract_strided_slice %617 {offsets = [0, 8], sizes = [8, 8], strides = [1, 1]} : vector<8x32xf32> to vector<8x8xf32>
    %625 = arith.negf %624 : vector<8x8xf32>
    %626 = math.exp %625 : vector<8x8xf32>
    %cst_193 = arith.constant 1.000000e+00 : f32
    %627 = vector.broadcast %cst_193 : f32 to vector<8x8xf32>
    %628 = arith.addf %627, %626 : vector<8x8xf32>
    %629 = arith.divf %627, %628 : vector<8x8xf32>
    %630 = vector.extract_strided_slice %617 {offsets = [0, 16], sizes = [8, 8], strides = [1, 1]} : vector<8x32xf32> to vector<8x8xf32>
    %631 = math.tanh %630 : vector<8x8xf32>
    %632 = vector.extract_strided_slice %617 {offsets = [0, 24], sizes = [8, 8], strides = [1, 1]} : vector<8x32xf32> to vector<8x8xf32>
    %633 = arith.negf %632 : vector<8x8xf32>
    %634 = math.exp %633 : vector<8x8xf32>
    %cst_194 = arith.constant 1.000000e+00 : f32
    %635 = vector.broadcast %cst_194 : f32 to vector<8x8xf32>
    %636 = arith.addf %635, %634 : vector<8x8xf32>
    %637 = arith.divf %635, %636 : vector<8x8xf32>
    %638 = arith.mulf %629, %612 : vector<8x8xf32>
    %639 = arith.mulf %623, %631 : vector<8x8xf32>
    %640 = arith.addf %638, %639 : vector<8x8xf32>
    %641 = math.tanh %640 : vector<8x8xf32>
    %642 = arith.mulf %637, %641 : vector<8x8xf32>
    %c40_195 = arith.constant 40 : index
    %c0_196 = arith.constant 0 : index
    %643 = vector.load %arg8[%c40_195, %c0_196] : memref<64x32xf32, #tpu.memory_space<vmem>>, vector<8x32xf32>
    %cst_197 = arith.constant dense<0.000000e+00> : vector<8x32xf32>
    %644 = tpu.matmul %642, %500, %cst_197 {dimension_numbers = #tpu.dot_dimension_numbers<[1], [0], [0], [1], [0, 0, 1, 1], [], []>} : vector<8x8xf32>, vector<8x32xf32>, vector<8x32xf32> -> vector<8x32xf32>
    %645 = arith.addf %643, %644 : vector<8x32xf32>
    %646 = vector.extract_strided_slice %645 {offsets = [0, 0], sizes = [8, 8], strides = [1, 1]} : vector<8x32xf32> to vector<8x8xf32>
    %647 = arith.negf %646 : vector<8x8xf32>
    %648 = math.exp %647 : vector<8x8xf32>
    %cst_198 = arith.constant 1.000000e+00 : f32
    %649 = vector.broadcast %cst_198 : f32 to vector<8x8xf32>
    %650 = arith.addf %649, %648 : vector<8x8xf32>
    %651 = arith.divf %649, %650 : vector<8x8xf32>
    %652 = vector.extract_strided_slice %645 {offsets = [0, 8], sizes = [8, 8], strides = [1, 1]} : vector<8x32xf32> to vector<8x8xf32>
    %653 = arith.negf %652 : vector<8x8xf32>
    %654 = math.exp %653 : vector<8x8xf32>
    %cst_199 = arith.constant 1.000000e+00 : f32
    %655 = vector.broadcast %cst_199 : f32 to vector<8x8xf32>
    %656 = arith.addf %655, %654 : vector<8x8xf32>
    %657 = arith.divf %655, %656 : vector<8x8xf32>
    %658 = vector.extract_strided_slice %645 {offsets = [0, 16], sizes = [8, 8], strides = [1, 1]} : vector<8x32xf32> to vector<8x8xf32>
    %659 = math.tanh %658 : vector<8x8xf32>
    %660 = vector.extract_strided_slice %645 {offsets = [0, 24], sizes = [8, 8], strides = [1, 1]} : vector<8x32xf32> to vector<8x8xf32>
    %661 = arith.negf %660 : vector<8x8xf32>
    %662 = math.exp %661 : vector<8x8xf32>
    %cst_200 = arith.constant 1.000000e+00 : f32
    %663 = vector.broadcast %cst_200 : f32 to vector<8x8xf32>
    %664 = arith.addf %663, %662 : vector<8x8xf32>
    %665 = arith.divf %663, %664 : vector<8x8xf32>
    %666 = arith.mulf %657, %640 : vector<8x8xf32>
    %667 = arith.mulf %651, %659 : vector<8x8xf32>
    %668 = arith.addf %666, %667 : vector<8x8xf32>
    %669 = math.tanh %668 : vector<8x8xf32>
    %670 = arith.mulf %665, %669 : vector<8x8xf32>
    %c48_201 = arith.constant 48 : index
    %c0_202 = arith.constant 0 : index
    %671 = vector.load %arg8[%c48_201, %c0_202] : memref<64x32xf32, #tpu.memory_space<vmem>>, vector<8x32xf32>
    %cst_203 = arith.constant dense<0.000000e+00> : vector<8x32xf32>
    %672 = tpu.matmul %670, %500, %cst_203 {dimension_numbers = #tpu.dot_dimension_numbers<[1], [0], [0], [1], [0, 0, 1, 1], [], []>} : vector<8x8xf32>, vector<8x32xf32>, vector<8x32xf32> -> vector<8x32xf32>
    %673 = arith.addf %671, %672 : vector<8x32xf32>
    %674 = vector.extract_strided_slice %673 {offsets = [0, 0], sizes = [8, 8], strides = [1, 1]} : vector<8x32xf32> to vector<8x8xf32>
    %675 = arith.negf %674 : vector<8x8xf32>
    %676 = math.exp %675 : vector<8x8xf32>
    %cst_204 = arith.constant 1.000000e+00 : f32
    %677 = vector.broadcast %cst_204 : f32 to vector<8x8xf32>
    %678 = arith.addf %677, %676 : vector<8x8xf32>
    %679 = arith.divf %677, %678 : vector<8x8xf32>
    %680 = vector.extract_strided_slice %673 {offsets = [0, 8], sizes = [8, 8], strides = [1, 1]} : vector<8x32xf32> to vector<8x8xf32>
    %681 = arith.negf %680 : vector<8x8xf32>
    %682 = math.exp %681 : vector<8x8xf32>
    %cst_205 = arith.constant 1.000000e+00 : f32
    %683 = vector.broadcast %cst_205 : f32 to vector<8x8xf32>
    %684 = arith.addf %683, %682 : vector<8x8xf32>
    %685 = arith.divf %683, %684 : vector<8x8xf32>
    %686 = vector.extract_strided_slice %673 {offsets = [0, 16], sizes = [8, 8], strides = [1, 1]} : vector<8x32xf32> to vector<8x8xf32>
    %687 = math.tanh %686 : vector<8x8xf32>
    %688 = vector.extract_strided_slice %673 {offsets = [0, 24], sizes = [8, 8], strides = [1, 1]} : vector<8x32xf32> to vector<8x8xf32>
    %689 = arith.negf %688 : vector<8x8xf32>
    %690 = math.exp %689 : vector<8x8xf32>
    %cst_206 = arith.constant 1.000000e+00 : f32
    %691 = vector.broadcast %cst_206 : f32 to vector<8x8xf32>
    %692 = arith.addf %691, %690 : vector<8x8xf32>
    %693 = arith.divf %691, %692 : vector<8x8xf32>
    %694 = arith.mulf %685, %668 : vector<8x8xf32>
    %695 = arith.mulf %679, %687 : vector<8x8xf32>
    %696 = arith.addf %694, %695 : vector<8x8xf32>
    %697 = math.tanh %696 : vector<8x8xf32>
    %698 = arith.mulf %693, %697 : vector<8x8xf32>
    %c56_207 = arith.constant 56 : index
    %c0_208 = arith.constant 0 : index
    %699 = vector.load %arg8[%c56_207, %c0_208] : memref<64x32xf32, #tpu.memory_space<vmem>>, vector<8x32xf32>
    %cst_209 = arith.constant dense<0.000000e+00> : vector<8x32xf32>
    %700 = tpu.matmul %698, %500, %cst_209 {dimension_numbers = #tpu.dot_dimension_numbers<[1], [0], [0], [1], [0, 0, 1, 1], [], []>} : vector<8x8xf32>, vector<8x32xf32>, vector<8x32xf32> -> vector<8x32xf32>
    %701 = arith.addf %699, %700 : vector<8x32xf32>
    %702 = vector.extract_strided_slice %701 {offsets = [0, 0], sizes = [8, 8], strides = [1, 1]} : vector<8x32xf32> to vector<8x8xf32>
    %703 = arith.negf %702 : vector<8x8xf32>
    %704 = math.exp %703 : vector<8x8xf32>
    %cst_210 = arith.constant 1.000000e+00 : f32
    %705 = vector.broadcast %cst_210 : f32 to vector<8x8xf32>
    %706 = arith.addf %705, %704 : vector<8x8xf32>
    %707 = arith.divf %705, %706 : vector<8x8xf32>
    %708 = vector.extract_strided_slice %701 {offsets = [0, 8], sizes = [8, 8], strides = [1, 1]} : vector<8x32xf32> to vector<8x8xf32>
    %709 = arith.negf %708 : vector<8x8xf32>
    %710 = math.exp %709 : vector<8x8xf32>
    %cst_211 = arith.constant 1.000000e+00 : f32
    %711 = vector.broadcast %cst_211 : f32 to vector<8x8xf32>
    %712 = arith.addf %711, %710 : vector<8x8xf32>
    %713 = arith.divf %711, %712 : vector<8x8xf32>
    %714 = vector.extract_strided_slice %701 {offsets = [0, 16], sizes = [8, 8], strides = [1, 1]} : vector<8x32xf32> to vector<8x8xf32>
    %715 = math.tanh %714 : vector<8x8xf32>
    %716 = vector.extract_strided_slice %701 {offsets = [0, 24], sizes = [8, 8], strides = [1, 1]} : vector<8x32xf32> to vector<8x8xf32>
    %717 = arith.negf %716 : vector<8x8xf32>
    %718 = math.exp %717 : vector<8x8xf32>
    %cst_212 = arith.constant 1.000000e+00 : f32
    %719 = vector.broadcast %cst_212 : f32 to vector<8x8xf32>
    %720 = arith.addf %719, %718 : vector<8x8xf32>
    %721 = arith.divf %719, %720 : vector<8x8xf32>
    %722 = arith.mulf %713, %696 : vector<8x8xf32>
    %723 = arith.mulf %707, %715 : vector<8x8xf32>
    %724 = arith.addf %722, %723 : vector<8x8xf32>
    %725 = math.tanh %724 : vector<8x8xf32>
    %726 = arith.mulf %721, %725 : vector<8x8xf32>
    %c0_213 = arith.constant 0 : index
    %c0_214 = arith.constant 0 : index
    %727 = vector.load %arg4[%c0_213, %c0_214] : memref<8x1xf32, #tpu.memory_space<vmem>>, vector<8x1xf32>
    %cst_215 = arith.constant dense<0.000000e+00> : vector<8x1xf32>
    %728 = tpu.matmul %726, %727, %cst_215 {dimension_numbers = #tpu.dot_dimension_numbers<[1], [0], [0], [1], [0, 0, 1, 1], [], []>} : vector<8x8xf32>, vector<8x1xf32>, vector<8x1xf32> -> vector<8x1xf32>
    %c0_216 = arith.constant 0 : index
    %c0_217 = arith.constant 0 : index
    %729 = vector.load %arg5[%c0_216, %c0_217] : memref<1x1xf32, #tpu.memory_space<vmem>>, vector<1x1xf32>
    %730 = vector.broadcast %729 : vector<1x1xf32> to vector<8x1xf32>
    %731 = arith.addf %728, %730 : vector<8x1xf32>
    %c0_218 = arith.constant 0 : index
    %c0_219 = arith.constant 0 : index
    %732 = vector.load %arg6[%c0_218, %c0_219] : memref<8x1xf32, #tpu.memory_space<vmem>>, vector<8x1xf32>
    tpu.vector_store %arg6[%c0_218, %c0_219], %731 {strides = array<i32>} : memref<8x1xf32, #tpu.memory_space<vmem>>, vector<8x1xf32>,
    return
  }
}

</mosaic_0001>

<llo_original>
// kernel: tpu_custom_call.1
$region0: #{tpu_custom_call.1}
  #allocation0 [shape = 'u32[]', space=smem, size = 0x4, offset = 0x4, fixed_abs, tag = 'smem constant byte address 0x4 - core index']
  #allocation1 [shape = 'u32[144,128]{1,0:T(1,128)}', space=vmem, size = 0x12000, scoped, tag = 'internal scratch']
  #allocation2 [shape = 'f32[64,8]{1,0:T(8,128)}', space=vmem, size = 0x8000, scoped, tag = 'scratch operand']
  #allocation3 [shape = 'f32[64,32]{1,0:T(8,128)}', space=vmem, size = 0x8000, scoped, tag = 'scratch operand']
  #allocation4 [shape = 'f32[1,1]{1,0:T(1,128)S(1)}', space=vmem, size = 0x200, scoped, tag = 'scoped memory for tpu_custom_call.1']
  %s0 = inlined_call_operand.vmem [shape: f32[64,8], index: 0, kind: input, shape index: {}]
  %s1 = inlined_call_operand.vmem [shape: f32[3,8,32], index: 1, kind: input, shape index: {}]
  %s2 = inlined_call_operand.vmem [shape: f32[3,8,32], index: 2, kind: input, shape index: {}]
  %s3 = inlined_call_operand.vmem [shape: f32[3,1,32], index: 3, kind: input, shape index: {}]
  %s4 = inlined_call_operand.vmem [shape: f32[8,1], index: 4, kind: input, shape index: {}]
  %s5 = inlined_call_operand.<no memory space> [shape: f32[1,1], index: 5, kind: input, shape index: {}]
  %s6 = inlined_call_operand.vmem [shape: f32[8,1], index: 6, kind: output, shape index: {}]
  %s7 = sld [smem:[#allocation0]]
  $region34: #{tpu_custom_call.1} parent=0
    _
  %s9 = ssub.s32 1, %s7
  %s10 = scalar_select 0, %s9, %s7
  %v11 = vstv %s5
  %12 = vst [vmem:[#allocation4] sm:$0x1] %v11
  // Predicated region
  $region2: #{tpu_custom_call.1} parent=0 // pred_check
    _
  $region3: #{tpu_custom_call.1} parent=0 // pred_check_branch
    %14 = sbr.rel (0) target = $region5
  $region4: #{tpu_custom_call.1} parent=0 // pred_region
    _
  $region5: #{tpu_custom_call.1} parent=0 // pred_fallthru
    _
  // Predicated region
  $region6: #{tpu_custom_call.1} parent=0 // pred_check
    _
  $region7: #{tpu_custom_call.1} parent=0 // pred_check_branch
    %16 = sbr.rel (0) target = $region9
  $region8: #{tpu_custom_call.1} parent=0 // pred_region
    _
  $region9: #{tpu_custom_call.1} parent=0 // pred_fallthru
    _
  // Predicated region
  $region10: #{tpu_custom_call.1} parent=0 // pred_check
    _
  $region11: #{tpu_custom_call.1} parent=0 // pred_check_branch
    %18 = sbr.rel (0) target = $region13
  $region12: #{tpu_custom_call.1} parent=0 // pred_region
    _
  $region13: #{tpu_custom_call.1} parent=0 // pred_fallthru
    _
  // Predicated region
  $region14: #{tpu_custom_call.1} parent=0 // pred_check
    _
  $region15: #{tpu_custom_call.1} parent=0 // pred_check_branch
    %20 = sbr.rel (0) target = $region17
  $region16: #{tpu_custom_call.1} parent=0 // pred_region
    _
  $region17: #{tpu_custom_call.1} parent=0 // pred_fallthru
    _
  // Predicated region
  $region18: #{tpu_custom_call.1} parent=0 // pred_check
    _
  $region19: #{tpu_custom_call.1} parent=0 // pred_check_branch
    %22 = sbr.rel (0) target = $region21
  $region20: #{tpu_custom_call.1} parent=0 // pred_region
    _
  $region21: #{tpu_custom_call.1} parent=0 // pred_fallthru
    _
  // Predicated region
  $region22: #{tpu_custom_call.1} parent=0 // pred_check
    _
  $region23: #{tpu_custom_call.1} parent=0 // pred_check_branch
    %24 = sbr.rel (0) target = $region25
  $region24: #{tpu_custom_call.1} parent=0 // pred_region
    _
  $region25: #{tpu_custom_call.1} parent=0 // pred_fallthru
    _
  %v25 = vld [vmem:[%s0] sm:$0xff]
  %v26 = vld [vmem:[%s0 + $0x8] sm:$0xff]
  %v27 = vld [vmem:[%s0 + $0x10] sm:$0xff]
  %v28 = vld [vmem:[%s0 + $0x18] sm:$0xff]
  %v29 = vld [vmem:[%s0 + $0x20] sm:$0xff]
  %v30 = vld [vmem:[%s0 + $0x28] sm:$0xff]
  %v31 = vld [vmem:[%s0 + $0x30] sm:$0xff]
  %v32 = vld [vmem:[%s0 + $0x38] sm:$0xff]
  %v33 = vld [vmem:[%s1] sm:$0xff]
  %v34 = vld [vmem:[%s3] sm:$0x1]
  %v36 = vlaneseq
  %v37 = vshrl.u32 %v36, 7
  %v38 = vsub.s32 0, %v37
  %v39 = vrot.slane %v34, %v38
  %vm41 = vcmask 64512
  %v43 = vsel %vm41, %v25, 0
  %v46 = vsel %vm41, %v26, 0
  %v49 = vsel %vm41, %v27, 0
  %v52 = vsel %vm41, %v28, 0
  %v55 = vsel %vm41, %v29, 0
  %v58 = vsel %vm41, %v30, 0
  %v61 = vsel %vm41, %v31, 0
  %v64 = vsel %vm41, %v32, 0
  %66 = vmatprep.subr.mxu0 0.0
  %67 = vmatpush1.msra.mxu0 %v33
  %68 = vmatprep.subr.mxu0 0.0
  %69 = vmatpush1.msra.mxu0 0.0
  %70 = vmatprep.subr.mxu0 0.0
  %71 = vmatpush1.msra.mxu0 0.0
  %72 = vmatprep.subr.mxu0 0.0
  %73 = vmatpush1.msra.mxu0 0.0
  %74 = vmatprep.subr.mxu0 0.0
  %75 = vmatpush1.msra.mxu0 0.0
  %76 = vmatprep.subr.mxu0 0.0
  %77 = vmatpush1.msra.mxu0 0.0
  %78 = vmatprep.subr.mxu0 0.0
  %79 = vmatpush1.msra.mxu0 0.0
  %80 = vmatprep.subr.mxu0 0.0
  %81 = vmatpush1.msra.mxu0 0.0
  %82 = vmatprep.subr.mxu0 0.0
  %83 = vmatpush1.msra.mxu0 0.0
  %84 = vmatprep.subr.mxu0 0.0
  %85 = vmatpush1.msra.mxu0 0.0
  %86 = vmatprep.subr.mxu0 0.0
  %87 = vmatpush1.msra.mxu0 0.0
  %88 = vmatprep.subr.mxu0 0.0
  %89 = vmatpush1.msra.mxu0 0.0
  %90 = vmatprep.subr.mxu0 0.0
  %91 = vmatpush1.msra.mxu0 0.0
  %92 = vmatprep.subr.mxu0 0.0
  %93 = vmatpush1.msra.mxu0 0.0
  %94 = vmatprep.subr.mxu0 0.0
  %95 = vmatpush1.msra.mxu0 0.0
  %96 = vmatprep.subr.mxu0 0.0
  %97 = vmatpush1.msra.mxu0 0.0
  %98 = vmatprep.subr.mxu0 0.0
  %99 = vmatpush1.msra.mxu0 0.0
  %100 = vmatprep.subr.mxu0 0.0
  %101 = vmatpush1.msra.mxu0 0.0
  %102 = vmatprep.subr.mxu0 0.0
  %103 = vmatpush1.msra.mxu0 0.0
  %104 = vmatprep.subr.mxu0 0.0
  %105 = vmatpush1.msra.mxu0 0.0
  %106 = vmatprep.subr.mxu0 0.0
  %107 = vmatpush1.msra.mxu0 0.0
  %108 = vmatprep.subr.mxu0 0.0
  %109 = vmatpush1.msra.mxu0 0.0
  %110 = vmatprep.subr.mxu0 0.0
  %111 = vmatpush1.msra.mxu0 0.0
  %112 = vmatprep.subr.mxu0 0.0
  %113 = vmatpush1.msra.mxu0 0.0
  %114 = vmatprep.subr.mxu0 0.0
  %115 = vmatpush1.msra.mxu0 0.0
  %116 = vmatprep.subr.mxu0 0.0
  %117 = vmatpush1.msra.mxu0 0.0
  %118 = vmatprep.subr.mxu0 0.0
  %119 = vmatpush1.msra.mxu0 0.0
  %120 = vmatprep.subr.mxu0 0.0
  %121 = vmatpush1.msra.mxu0 0.0
  %122 = vmatprep.subr.mxu0 0.0
  %123 = vmatpush1.msra.mxu0 0.0
  %124 = vmatprep.subr.mxu0 0.0
  %125 = vmatpush1.msra.mxu0 0.0
  %126 = vmatprep.subr.mxu0 0.0
  %127 = vmatpush1.msra.mxu0 0.0
  %128 = vmatprep.subr.mxu0 0.0
  %129 = vmatpush1.msra.mxu0 0.0
  %130 = vmatprep.mubr.f32.mxu0 0.0
  %131 = vmatmul.mubr.f32.gmra.mrb[0].mxu0 %v43
  %v132 = vpop.f32.mrb[0].mxu0
  %v133 = vadd.f32 %v39, %v132
  %v134 = vpop.f32.mrb[0].mxu0
  %135 = vmatprep.mubr.f32.mxu0 0.0
  %136 = vmatmul.mubr.f32.gmra.mrb[0].mxu0 %v46
  %v137 = vpop.f32.mrb[0].mxu0
  %v138 = vadd.f32 %v39, %v137
  %v139 = vpop.f32.mrb[0].mxu0
  %140 = vmatprep.mubr.f32.mxu0 0.0
  %141 = vmatmul.mubr.f32.gmra.mrb[0].mxu0 %v49
  %v142 = vpop.f32.mrb[0].mxu0
  %v143 = vadd.f32 %v39, %v142
  %v144 = vpop.f32.mrb[0].mxu0
  %145 = vmatprep.mubr.f32.mxu0 0.0
  %146 = vmatmul.mubr.f32.gmra.mrb[0].mxu0 %v52
  %v147 = vpop.f32.mrb[0].mxu0
  %v148 = vadd.f32 %v39, %v147
  %v149 = vpop.f32.mrb[0].mxu0
  %150 = vmatprep.mubr.f32.mxu0 0.0
  %151 = vmatmul.mubr.f32.gmra.mrb[0].mxu0 %v55
  %v152 = vpop.f32.mrb[0].mxu0
  %v153 = vadd.f32 %v39, %v152
  %v154 = vpop.f32.mrb[0].mxu0
  %155 = vmatprep.mubr.f32.mxu0 0.0
  %156 = vmatmul.mubr.f32.gmra.mrb[0].mxu0 %v58
  %v157 = vpop.f32.mrb[0].mxu0
  %v158 = vadd.f32 %v39, %v157
  %v159 = vpop.f32.mrb[0].mxu0
  %160 = vmatprep.mubr.f32.mxu0 0.0
  %161 = vmatmul.mubr.f32.gmra.mrb[0].mxu0 %v61
  %v162 = vpop.f32.mrb[0].mxu0
  %v163 = vadd.f32 %v39, %v162
  %v164 = vpop.f32.mrb[0].mxu0
  %165 = vmatprep.mubr.f32.mxu0 0.0
  %166 = vmatmul.mubr.f32.gmra.mrb[0].mxu0 %v64
  %v167 = vpop.f32.mrb[0].mxu0
  %v168 = vadd.f32 %v39, %v167
  %v169 = vpop.f32.mrb[0].mxu0
  %170 = vdwg.mxu0
  %vm171 = vcmask 261120
  %172 = vst.msk [vmem:[#allocation3] sm:$0xff] %vm171, %v133
  %173 = vst.msk [vmem:[#allocation3 + $0x8] sm:$0xff] %vm171, %v138
  %174 = vst.msk [vmem:[#allocation3 + $0x10] sm:$0xff] %vm171, %v143
  %175 = vst.msk [vmem:[#allocation3 + $0x18] sm:$0xff] %vm171, %v148
  %176 = vst.msk [vmem:[#allocation3 + $0x20] sm:$0xff] %vm171, %v153
  %177 = vst.msk [vmem:[#allocation3 + $0x28] sm:$0xff] %vm171, %v158
  %178 = vst.msk [vmem:[#allocation3 + $0x30] sm:$0xff] %vm171, %v163
  %179 = vst.msk [vmem:[#allocation3 + $0x38] sm:$0xff] %vm171, %v168
  %v180 = vld [vmem:[%s2] sm:$0xff]
  %v181 = vld [vmem:[#allocation3] sm:$0xff]
  %v183 = vsel %vm41, 0.0, 0
  %185 = vmatprep.subr.mxu0 0.0
  %186 = vmatpush1.msra.mxu0 %v180
  %187 = vmatprep.subr.mxu0 0.0
  %188 = vmatpush1.msra.mxu0 0.0
  %189 = vmatprep.subr.mxu0 0.0
  %190 = vmatpush1.msra.mxu0 0.0
  %191 = vmatprep.subr.mxu0 0.0
  %192 = vmatpush1.msra.mxu0 0.0
  %193 = vmatprep.subr.mxu0 0.0
  %194 = vmatpush1.msra.mxu0 0.0
  %195 = vmatprep.subr.mxu0 0.0
  %196 = vmatpush1.msra.mxu0 0.0
  %197 = vmatprep.subr.mxu0 0.0
  %198 = vmatpush1.msra.mxu0 0.0
  %199 = vmatprep.subr.mxu0 0.0
  %200 = vmatpush1.msra.mxu0 0.0
  %201 = vmatprep.subr.mxu0 0.0
  %202 = vmatpush1.msra.mxu0 0.0
  %203 = vmatprep.subr.mxu0 0.0
  %204 = vmatpush1.msra.mxu0 0.0
  %205 = vmatprep.subr.mxu0 0.0
  %206 = vmatpush1.msra.mxu0 0.0
  %207 = vmatprep.subr.mxu0 0.0
  %208 = vmatpush1.msra.mxu0 0.0
  %209 = vmatprep.subr.mxu0 0.0
  %210 = vmatpush1.msra.mxu0 0.0
  %211 = vmatprep.subr.mxu0 0.0
  %212 = vmatpush1.msra.mxu0 0.0
  %213 = vmatprep.subr.mxu0 0.0
  %214 = vmatpush1.msra.mxu0 0.0
  %215 = vmatprep.subr.mxu0 0.0
  %216 = vmatpush1.msra.mxu0 0.0
  %217 = vmatprep.subr.mxu0 0.0
  %218 = vmatpush1.msra.mxu0 0.0
  %219 = vmatprep.subr.mxu0 0.0
  %220 = vmatpush1.msra.mxu0 0.0
  %221 = vmatprep.subr.mxu0 0.0
  %222 = vmatpush1.msra.mxu0 0.0
  %223 = vmatprep.subr.mxu0 0.0
  %224 = vmatpush1.msra.mxu0 0.0
  %225 = vmatprep.subr.mxu0 0.0
  %226 = vmatpush1.msra.mxu0 0.0
  %227 = vmatprep.subr.mxu0 0.0
  %228 = vmatpush1.msra.mxu0 0.0
  %229 = vmatprep.subr.mxu0 0.0
  %230 = vmatpush1.msra.mxu0 0.0
  %231 = vmatprep.subr.mxu0 0.0
  %232 = vmatpush1.msra.mxu0 0.0
  %233 = vmatprep.subr.mxu0 0.0
  %234 = vmatpush1.msra.mxu0 0.0
  %235 = vmatprep.subr.mxu0 0.0
  %236 = vmatpush1.msra.mxu0 0.0
  %237 = vmatprep.subr.mxu0 0.0
  %238 = vmatpush1.msra.mxu0 0.0
  %239 = vmatprep.subr.mxu0 0.0
  %240 = vmatpush1.msra.mxu0 0.0
  %241 = vmatprep.subr.mxu0 0.0
  %242 = vmatpush1.msra.mxu0 0.0
  %243 = vmatprep.subr.mxu0 0.0
  %244 = vmatpush1.msra.mxu0 0.0
  %245 = vmatprep.subr.mxu0 0.0
  %246 = vmatpush1.msra.mxu0 0.0
  %247 = vmatprep.subr.mxu0 0.0
  %248 = vmatpush1.msra.mxu0 0.0
  %249 = vmatprep.mubr.f32.mxu0 0.0
  %250 = vmatmul.mubr.f32.gmra.mrb[0].mxu0 %v183
  %v251 = vpop.f32.mrb[0].mxu0
  %v252 = vadd.f32 0.0, %v251
  %v253 = vpop.f32.mrb[0].mxu0
  %254 = vdwg.mxu0
  %v255 = vadd.f32 %v181, %v252
  %v256 = vxor.u32 %v255, 2147483648
  %v257 = vmul.f32 %v256, 1.442695
  %v258 = vpow.pop %v257
  %v259 = vadd.f32 %v258, 1.0
  %v260 = vrcp.pop %v259
  %v261 = vmul.f32 1.0, %v260
  %v262 = vtanh.pop %v255
  %v263 = vmul.f32 %v261, 0.0
  %265 = vrot.lane.b32.xlu0 %v262, 112
  %v266 = vpop.permute.xlu0 %265
  %v268 = vmul.f32 %v261, %v266
  %270 = vrot.lane.b32.xlu0 %v268, 8
  %v271 = vpop.permute.xlu0 %270
  %v273 = vadd.f32 %v263, %v271
  %v274 = vtanh.pop %v273
  %276 = vrot.lane.b32.xlu0 %v274, 16
  %v277 = vpop.permute.xlu0 %276
  %v279 = vmul.f32 %v261, %v277
  %281 = vrot.lane.b32.xlu0 %v279, 104
  %v282 = vpop.permute.xlu0 %281
  %284 = vst.msk [vmem:[#allocation2] sm:$0xff] %vm41, %v282
  %v285 = vld [vmem:[#allocation3 + $0x8] sm:$0xff]
  %v286 = vsel %vm41, %v282, 0
  %288 = vmatprep.subr.mxu0 0.0
  %289 = vmatpush1.msra.mxu0 %v180
  %290 = vmatprep.subr.mxu0 0.0
  %291 = vmatpush1.msra.mxu0 0.0
  %292 = vmatprep.subr.mxu0 0.0
  %293 = vmatpush1.msra.mxu0 0.0
  %294 = vmatprep.subr.mxu0 0.0
  %295 = vmatpush1.msra.mxu0 0.0
  %296 = vmatprep.subr.mxu0 0.0
  %297 = vmatpush1.msra.mxu0 0.0
  %298 = vmatprep.subr.mxu0 0.0
  %299 = vmatpush1.msra.mxu0 0.0
  %300 = vmatprep.subr.mxu0 0.0
  %301 = vmatpush1.msra.mxu0 0.0
  %302 = vmatprep.subr.mxu0 0.0
  %303 = vmatpush1.msra.mxu0 0.0
  %304 = vmatprep.subr.mxu0 0.0
  %305 = vmatpush1.msra.mxu0 0.0
  %306 = vmatprep.subr.mxu0 0.0
  %307 = vmatpush1.msra.mxu0 0.0
  %308 = vmatprep.subr.mxu0 0.0
  %309 = vmatpush1.msra.mxu0 0.0
  %310 = vmatprep.subr.mxu0 0.0
  %311 = vmatpush1.msra.mxu0 0.0
  %312 = vmatprep.subr.mxu0 0.0
  %313 = vmatpush1.msra.mxu0 0.0
  %314 = vmatprep.subr.mxu0 0.0
  %315 = vmatpush1.msra.mxu0 0.0
  %316 = vmatprep.subr.mxu0 0.0
  %317 = vmatpush1.msra.mxu0 0.0
  %318 = vmatprep.subr.mxu0 0.0
  %319 = vmatpush1.msra.mxu0 0.0
  %320 = vmatprep.subr.mxu0 0.0
  %321 = vmatpush1.msra.mxu0 0.0
  %322 = vmatprep.subr.mxu0 0.0
  %323 = vmatpush1.msra.mxu0 0.0
  %324 = vmatprep.subr.mxu0 0.0
  %325 = vmatpush1.msra.mxu0 0.0
  %326 = vmatprep.subr.mxu0 0.0
  %327 = vmatpush1.msra.mxu0 0.0
  %328 = vmatprep.subr.mxu0 0.0
  %329 = vmatpush1.msra.mxu0 0.0
  %330 = vmatprep.subr.mxu0 0.0
  %331 = vmatpush1.msra.mxu0 0.0
  %332 = vmatprep.subr.mxu0 0.0
  %333 = vmatpush1.msra.mxu0 0.0
  %334 = vmatprep.subr.mxu0 0.0
  %335 = vmatpush1.msra.mxu0 0.0
  %336 = vmatprep.subr.mxu0 0.0
  %337 = vmatpush1.msra.mxu0 0.0
  %338 = vmatprep.subr.mxu0 0.0
  %339 = vmatpush1.msra.mxu0 0.0
  %340 = vmatprep.subr.mxu0 0.0
  %341 = vmatpush1.msra.mxu0 0.0
  %342 = vmatprep.subr.mxu0 0.0
  %343 = vmatpush1.msra.mxu0 0.0
  %344 = vmatprep.subr.mxu0 0.0
  %345 = vmatpush1.msra.mxu0 0.0
  %346 = vmatprep.subr.mxu0 0.0
  %347 = vmatpush1.msra.mxu0 0.0
  %348 = vmatprep.subr.mxu0 0.0
  %349 = vmatpush1.msra.mxu0 0.0
  %350 = vmatprep.subr.mxu0 0.0
  %351 = vmatpush1.msra.mxu0 0.0
  %352 = vmatprep.mubr.f32.mxu0 0.0
  %353 = vmatmul.mubr.f32.gmra.mrb[0].mxu0 %v286
  %v354 = vpop.f32.mrb[0].mxu0
  %v355 = vadd.f32 0.0, %v354
  %v356 = vpop.f32.mrb[0].mxu0
  %357 = vdwg.mxu0
  %v358 = vadd.f32 %v285, %v355
  %v359 = vxor.u32 %v358, 2147483648
  %v360 = vmul.f32 %v359, 1.442695
  %v361 = vpow.pop %v360
  %v362 = vadd.f32 %v361, 1.0
  %v363 = vrcp.pop %v362
  %v364 = vmul.f32 1.0, %v363
  %v365 = vtanh.pop %v358
  %v366 = vmul.f32 %v364, %v273
  %368 = vrot.lane.b32.xlu0 %v365, 112
  %v369 = vpop.permute.xlu0 %368
  %v371 = vmul.f32 %v364, %v369
  %373 = vrot.lane.b32.xlu0 %v371, 8
  %v374 = vpop.permute.xlu0 %373
  %v376 = vadd.f32 %v366, %v374
  %v377 = vtanh.pop %v376
  %379 = vrot.lane.b32.xlu0 %v377, 16
  %v380 = vpop.permute.xlu0 %379
  %v382 = vmul.f32 %v364, %v380
  %384 = vrot.lane.b32.xlu0 %v382, 104
  %v385 = vpop.permute.xlu0 %384
  %387 = vst.msk [vmem:[#allocation2 + $0x8] sm:$0xff] %vm41, %v385
  %v388 = vld [vmem:[#allocation3 + $0x10] sm:$0xff]
  %v389 = vsel %vm41, %v385, 0
  %391 = vmatprep.subr.mxu0 0.0
  %392 = vmatpush1.msra.mxu0 %v180
  %393 = vmatprep.subr.mxu0 0.0
  %394 = vmatpush1.msra.mxu0 0.0
  %395 = vmatprep.subr.mxu0 0.0
  %396 = vmatpush1.msra.mxu0 0.0
  %397 = vmatprep.subr.mxu0 0.0
  %398 = vmatpush1.msra.mxu0 0.0
  %399 = vmatprep.subr.mxu0 0.0
  %400 = vmatpush1.msra.mxu0 0.0
  %401 = vmatprep.subr.mxu0 0.0
  %402 = vmatpush1.msra.mxu0 0.0
  %403 = vmatprep.subr.mxu0 0.0
  %404 = vmatpush1.msra.mxu0 0.0
  %405 = vmatprep.subr.mxu0 0.0
  %406 = vmatpush1.msra.mxu0 0.0
  %407 = vmatprep.subr.mxu0 0.0
  %408 = vmatpush1.msra.mxu0 0.0
  %409 = vmatprep.subr.mxu0 0.0
  %410 = vmatpush1.msra.mxu0 0.0
  %411 = vmatprep.subr.mxu0 0.0
  %412 = vmatpush1.msra.mxu0 0.0
  %413 = vmatprep.subr.mxu0 0.0
  %414 = vmatpush1.msra.mxu0 0.0
  %415 = vmatprep.subr.mxu0 0.0
  %416 = vmatpush1.msra.mxu0 0.0
  %417 = vmatprep.subr.mxu0 0.0
  %418 = vmatpush1.msra.mxu0 0.0
  %419 = vmatprep.subr.mxu0 0.0
  %420 = vmatpush1.msra.mxu0 0.0
  %421 = vmatprep.subr.mxu0 0.0
  %422 = vmatpush1.msra.mxu0 0.0
  %423 = vmatprep.subr.mxu0 0.0
  %424 = vmatpush1.msra.mxu0 0.0
  %425 = vmatprep.subr.mxu0 0.0
  %426 = vmatpush1.msra.mxu0 0.0
  %427 = vmatprep.subr.mxu0 0.0
  %428 = vmatpush1.msra.mxu0 0.0
  %429 = vmatprep.subr.mxu0 0.0
  %430 = vmatpush1.msra.mxu0 0.0
  %431 = vmatprep.subr.mxu0 0.0
  %432 = vmatpush1.msra.mxu0 0.0
  %433 = vmatprep.subr.mxu0 0.0
  %434 = vmatpush1.msra.mxu0 0.0
  %435 = vmatprep.subr.mxu0 0.0
  %436 = vmatpush1.msra.mxu0 0.0
  %437 = vmatprep.subr.mxu0 0.0
  %438 = vmatpush1.msra.mxu0 0.0
  %439 = vmatprep.subr.mxu0 0.0
  %440 = vmatpush1.msra.mxu0 0.0
  %441 = vmatprep.subr.mxu0 0.0
  %442 = vmatpush1.msra.mxu0 0.0
  %443 = vmatprep.subr.mxu0 0.0
  %444 = vmatpush1.msra.mxu0 0.0
  %445 = vmatprep.subr.mxu0 0.0
  %446 = vmatpush1.msra.mxu0 0.0
  %447 = vmatprep.subr.mxu0 0.0
  %448 = vmatpush1.msra.mxu0 0.0
  %449 = vmatprep.subr.mxu0 0.0
  %450 = vmatpush1.msra.mxu0 0.0
  %451 = vmatprep.subr.mxu0 0.0
  %452 = vmatpush1.msra.mxu0 0.0
  %453 = vmatprep.subr.mxu0 0.0
  %454 = vmatpush1.msra.mxu0 0.0
  %455 = vmatprep.mubr.f32.mxu0 0.0
  %456 = vmatmul.mubr.f32.gmra.mrb[0].mxu0 %v389
  %v457 = vpop.f32.mrb[0].mxu0
  %v458 = vadd.f32 0.0, %v457
  %v459 = vpop.f32.mrb[0].mxu0
  %460 = vdwg.mxu0
  %v461 = vadd.f32 %v388, %v458
  %v462 = vxor.u32 %v461, 2147483648
  %v463 = vmul.f32 %v462, 1.442695
  %v464 = vpow.pop %v463
  %v465 = vadd.f32 %v464, 1.0
  %v466 = vrcp.pop %v465
  %v467 = vmul.f32 1.0, %v466
  %v468 = vtanh.pop %v461
  %v469 = vmul.f32 %v467, %v376
  %471 = vrot.lane.b32.xlu0 %v468, 112
  %v472 = vpop.permute.xlu0 %471
  %v474 = vmul.f32 %v467, %v472
  %476 = vrot.lane.b32.xlu0 %v474, 8
  %v477 = vpop.permute.xlu0 %476
  %v479 = vadd.f32 %v469, %v477
  %v480 = vtanh.pop %v479
  %482 = vrot.lane.b32.xlu0 %v480, 16
  %v483 = vpop.permute.xlu0 %482
  %v485 = vmul.f32 %v467, %v483
  %487 = vrot.lane.b32.xlu0 %v485, 104
  %v488 = vpop.permute.xlu0 %487
  %490 = vst.msk [vmem:[#allocation2 + $0x10] sm:$0xff] %vm41, %v488
  %v491 = vld [vmem:[#allocation3 + $0x18] sm:$0xff]
  %v492 = vsel %vm41, %v488, 0
  %494 = vmatprep.subr.mxu0 0.0
  %495 = vmatpush1.msra.mxu0 %v180
  %496 = vmatprep.subr.mxu0 0.0
  %497 = vmatpush1.msra.mxu0 0.0
  %498 = vmatprep.subr.mxu0 0.0
  %499 = vmatpush1.msra.mxu0 0.0
  %500 = vmatprep.subr.mxu0 0.0
  %501 = vmatpush1.msra.mxu0 0.0
  %502 = vmatprep.subr.mxu0 0.0
  %503 = vmatpush1.msra.mxu0 0.0
  %504 = vmatprep.subr.mxu0 0.0
  %505 = vmatpush1.msra.mxu0 0.0
  %506 = vmatprep.subr.mxu0 0.0
  %507 = vmatpush1.msra.mxu0 0.0
  %508 = vmatprep.subr.mxu0 0.0
  %509 = vmatpush1.msra.mxu0 0.0
  %510 = vmatprep.subr.mxu0 0.0
  %511 = vmatpush1.msra.mxu0 0.0
  %512 = vmatprep.subr.mxu0 0.0
  %513 = vmatpush1.msra.mxu0 0.0
  %514 = vmatprep.subr.mxu0 0.0
  %515 = vmatpush1.msra.mxu0 0.0
  %516 = vmatprep.subr.mxu0 0.0
  %517 = vmatpush1.msra.mxu0 0.0
  %518 = vmatprep.subr.mxu0 0.0
  %519 = vmatpush1.msra.mxu0 0.0
  %520 = vmatprep.subr.mxu0 0.0
  %521 = vmatpush1.msra.mxu0 0.0
  %522 = vmatprep.subr.mxu0 0.0
  %523 = vmatpush1.msra.mxu0 0.0
  %524 = vmatprep.subr.mxu0 0.0
  %525 = vmatpush1.msra.mxu0 0.0
  %526 = vmatprep.subr.mxu0 0.0
  %527 = vmatpush1.msra.mxu0 0.0
  %528 = vmatprep.subr.mxu0 0.0
  %529 = vmatpush1.msra.mxu0 0.0
  %530 = vmatprep.subr.mxu0 0.0
  %531 = vmatpush1.msra.mxu0 0.0
  %532 = vmatprep.subr.mxu0 0.0
  %533 = vmatpush1.msra.mxu0 0.0
  %534 = vmatprep.subr.mxu0 0.0
  %535 = vmatpush1.msra.mxu0 0.0
  %536 = vmatprep.subr.mxu0 0.0
  %537 = vmatpush1.msra.mxu0 0.0
  %538 = vmatprep.subr.mxu0 0.0
  %539 = vmatpush1.msra.mxu0 0.0
  %540 = vmatprep.subr.mxu0 0.0
  %541 = vmatpush1.msra.mxu0 0.0
  %542 = vmatprep.subr.mxu0 0.0
  %543 = vmatpush1.msra.mxu0 0.0
  %544 = vmatprep.subr.mxu0 0.0
  %545 = vmatpush1.msra.mxu0 0.0
  %546 = vmatprep.subr.mxu0 0.0
  %547 = vmatpush1.msra.mxu0 0.0
  %548 = vmatprep.subr.mxu0 0.0
  %549 = vmatpush1.msra.mxu0 0.0
  %550 = vmatprep.subr.mxu0 0.0
  %551 = vmatpush1.msra.mxu0 0.0
  %552 = vmatprep.subr.mxu0 0.0
  %553 = vmatpush1.msra.mxu0 0.0
  %554 = vmatprep.subr.mxu0 0.0
  %555 = vmatpush1.msra.mxu0 0.0
  %556 = vmatprep.subr.mxu0 0.0
  %557 = vmatpush1.msra.mxu0 0.0
  %558 = vmatprep.mubr.f32.mxu0 0.0
  %559 = vmatmul.mubr.f32.gmra.mrb[0].mxu0 %v492
  %v560 = vpop.f32.mrb[0].mxu0
  %v561 = vadd.f32 0.0, %v560
  %v562 = vpop.f32.mrb[0].mxu0
  %563 = vdwg.mxu0
  %v564 = vadd.f32 %v491, %v561
  %v565 = vxor.u32 %v564, 2147483648
  %v566 = vmul.f32 %v565, 1.442695
  %v567 = vpow.pop %v566
  %v568 = vadd.f32 %v567, 1.0
  %v569 = vrcp.pop %v568
  %v570 = vmul.f32 1.0, %v569
  %v571 = vtanh.pop %v564
  %v572 = vmul.f32 %v570, %v479
  %574 = vrot.lane.b32.xlu0 %v571, 112
  %v575 = vpop.permute.xlu0 %574
  %v577 = vmul.f32 %v570, %v575
  %579 = vrot.lane.b32.xlu0 %v577, 8
  %v580 = vpop.permute.xlu0 %579
  %v582 = vadd.f32 %v572, %v580
  %v583 = vtanh.pop %v582
  %585 = vrot.lane.b32.xlu0 %v583, 16
  %v586 = vpop.permute.xlu0 %585
  %v588 = vmul.f32 %v570, %v586
  %590 = vrot.lane.b32.xlu0 %v588, 104
  %v591 = vpop.permute.xlu0 %590
  %593 = vst.msk [vmem:[#allocation2 + $0x18] sm:$0xff] %vm41, %v591
  %v594 = vld [vmem:[#allocation3 + $0x20] sm:$0xff]
  %v595 = vsel %vm41, %v591, 0
  %597 = vmatprep.subr.mxu0 0.0
  %598 = vmatpush1.msra.mxu0 %v180
  %599 = vmatprep.subr.mxu0 0.0
  %600 = vmatpush1.msra.mxu0 0.0
  %601 = vmatprep.subr.mxu0 0.0
  %602 = vmatpush1.msra.mxu0 0.0
  %603 = vmatprep.subr.mxu0 0.0
  %604 = vmatpush1.msra.mxu0 0.0
  %605 = vmatprep.subr.mxu0 0.0
  %606 = vmatpush1.msra.mxu0 0.0
  %607 = vmatprep.subr.mxu0 0.0
  %608 = vmatpush1.msra.mxu0 0.0
  %609 = vmatprep.subr.mxu0 0.0
  %610 = vmatpush1.msra.mxu0 0.0
  %611 = vmatprep.subr.mxu0 0.0
  %612 = vmatpush1.msra.mxu0 0.0
  %613 = vmatprep.subr.mxu0 0.0
  %614 = vmatpush1.msra.mxu0 0.0
  %615 = vmatprep.subr.mxu0 0.0
  %616 = vmatpush1.msra.mxu0 0.0
  %617 = vmatprep.subr.mxu0 0.0
  %618 = vmatpush1.msra.mxu0 0.0
  %619 = vmatprep.subr.mxu0 0.0
  %620 = vmatpush1.msra.mxu0 0.0
  %621 = vmatprep.subr.mxu0 0.0
  %622 = vmatpush1.msra.mxu0 0.0
  %623 = vmatprep.subr.mxu0 0.0
  %624 = vmatpush1.msra.mxu0 0.0
  %625 = vmatprep.subr.mxu0 0.0
  %626 = vmatpush1.msra.mxu0 0.0
  %627 = vmatprep.subr.mxu0 0.0
  %628 = vmatpush1.msra.mxu0 0.0
  %629 = vmatprep.subr.mxu0 0.0
  %630 = vmatpush1.msra.mxu0 0.0
  %631 = vmatprep.subr.mxu0 0.0
  %632 = vmatpush1.msra.mxu0 0.0
  %633 = vmatprep.subr.mxu0 0.0
  %634 = vmatpush1.msra.mxu0 0.0
  %635 = vmatprep.subr.mxu0 0.0
  %636 = vmatpush1.msra.mxu0 0.0
  %637 = vmatprep.subr.mxu0 0.0
  %638 = vmatpush1.msra.mxu0 0.0
  %639 = vmatprep.subr.mxu0 0.0
  %640 = vmatpush1.msra.mxu0 0.0
  %641 = vmatprep.subr.mxu0 0.0
  %642 = vmatpush1.msra.mxu0 0.0
  %643 = vmatprep.subr.mxu0 0.0
  %644 = vmatpush1.msra.mxu0 0.0
  %645 = vmatprep.subr.mxu0 0.0
  %646 = vmatpush1.msra.mxu0 0.0
  %647 = vmatprep.subr.mxu0 0.0
  %648 = vmatpush1.msra.mxu0 0.0
  %649 = vmatprep.subr.mxu0 0.0
  %650 = vmatpush1.msra.mxu0 0.0
  %651 = vmatprep.subr.mxu0 0.0
  %652 = vmatpush1.msra.mxu0 0.0
  %653 = vmatprep.subr.mxu0 0.0
  %654 = vmatpush1.msra.mxu0 0.0
  %655 = vmatprep.subr.mxu0 0.0
  %656 = vmatpush1.msra.mxu0 0.0
  %657 = vmatprep.subr.mxu0 0.0
  %658 = vmatpush1.msra.mxu0 0.0
  %659 = vmatprep.subr.mxu0 0.0
  %660 = vmatpush1.msra.mxu0 0.0
  %661 = vmatprep.mubr.f32.mxu0 0.0
  %662 = vmatmul.mubr.f32.gmra.mrb[0].mxu0 %v595
  %v663 = vpop.f32.mrb[0].mxu0
  %v664 = vadd.f32 0.0, %v663
  %v665 = vpop.f32.mrb[0].mxu0
  %666 = vdwg.mxu0
  %v667 = vadd.f32 %v594, %v664
  %v668 = vxor.u32 %v667, 2147483648
  %v669 = vmul.f32 %v668, 1.442695
  %v670 = vpow.pop %v669
  %v671 = vadd.f32 %v670, 1.0
  %v672 = vrcp.pop %v671
  %v673 = vmul.f32 1.0, %v672
  %v674 = vtanh.pop %v667
  %v675 = vmul.f32 %v673, %v582
  %677 = vrot.lane.b32.xlu0 %v674, 112
  %v678 = vpop.permute.xlu0 %677
  %v680 = vmul.f32 %v673, %v678
  %682 = vrot.lane.b32.xlu0 %v680, 8
  %v683 = vpop.permute.xlu0 %682
  %v685 = vadd.f32 %v675, %v683
  %v686 = vtanh.pop %v685
  %688 = vrot.lane.b32.xlu0 %v686, 16
  %v689 = vpop.permute.xlu0 %688
  %v691 = vmul.f32 %v673, %v689
  %693 = vrot.lane.b32.xlu0 %v691, 104
  %v694 = vpop.permute.xlu0 %693
  %696 = vst.msk [vmem:[#allocation2 + $0x20] sm:$0xff] %vm41, %v694
  %v697 = vld [vmem:[#allocation3 + $0x28] sm:$0xff]
  %v698 = vsel %vm41, %v694, 0
  %700 = vmatprep.subr.mxu0 0.0
  %701 = vmatpush1.msra.mxu0 %v180
  %702 = vmatprep.subr.mxu0 0.0
  %703 = vmatpush1.msra.mxu0 0.0
  %704 = vmatprep.subr.mxu0 0.0
  %705 = vmatpush1.msra.mxu0 0.0
  %706 = vmatprep.subr.mxu0 0.0
  %707 = vmatpush1.msra.mxu0 0.0
  %708 = vmatprep.subr.mxu0 0.0
  %709 = vmatpush1.msra.mxu0 0.0
  %710 = vmatprep.subr.mxu0 0.0
  %711 = vmatpush1.msra.mxu0 0.0
  %712 = vmatprep.subr.mxu0 0.0
  %713 = vmatpush1.msra.mxu0 0.0
  %714 = vmatprep.subr.mxu0 0.0
  %715 = vmatpush1.msra.mxu0 0.0
  %716 = vmatprep.subr.mxu0 0.0
  %717 = vmatpush1.msra.mxu0 0.0
  %718 = vmatprep.subr.mxu0 0.0
  %719 = vmatpush1.msra.mxu0 0.0
  %720 = vmatprep.subr.mxu0 0.0
  %721 = vmatpush1.msra.mxu0 0.0
  %722 = vmatprep.subr.mxu0 0.0
  %723 = vmatpush1.msra.mxu0 0.0
  %724 = vmatprep.subr.mxu0 0.0
  %725 = vmatpush1.msra.mxu0 0.0
  %726 = vmatprep.subr.mxu0 0.0
  %727 = vmatpush1.msra.mxu0 0.0
  %728 = vmatprep.subr.mxu0 0.0
  %729 = vmatpush1.msra.mxu0 0.0
  %730 = vmatprep.subr.mxu0 0.0
  %731 = vmatpush1.msra.mxu0 0.0
  %732 = vmatprep.subr.mxu0 0.0
  %733 = vmatpush1.msra.mxu0 0.0
  %734 = vmatprep.subr.mxu0 0.0
  %735 = vmatpush1.msra.mxu0 0.0
  %736 = vmatprep.subr.mxu0 0.0
  %737 = vmatpush1.msra.mxu0 0.0
  %738 = vmatprep.subr.mxu0 0.0
  %739 = vmatpush1.msra.mxu0 0.0
  %740 = vmatprep.subr.mxu0 0.0
  %741 = vmatpush1.msra.mxu0 0.0
  %742 = vmatprep.subr.mxu0 0.0
  %743 = vmatpush1.msra.mxu0 0.0
  %744 = vmatprep.subr.mxu0 0.0
  %745 = vmatpush1.msra.mxu0 0.0
  %746 = vmatprep.subr.mxu0 0.0
  %747 = vmatpush1.msra.mxu0 0.0
  %748 = vmatprep.subr.mxu0 0.0
  %749 = vmatpush1.msra.mxu0 0.0
  %750 = vmatprep.subr.mxu0 0.0
  %751 = vmatpush1.msra.mxu0 0.0
  %752 = vmatprep.subr.mxu0 0.0
  %753 = vmatpush1.msra.mxu0 0.0
  %754 = vmatprep.subr.mxu0 0.0
  %755 = vmatpush1.msra.mxu0 0.0
  %756 = vmatprep.subr.mxu0 0.0
  %757 = vmatpush1.msra.mxu0 0.0
  %758 = vmatprep.subr.mxu0 0.0
  %759 = vmatpush1.msra.mxu0 0.0
  %760 = vmatprep.subr.mxu0 0.0
  %761 = vmatpush1.msra.mxu0 0.0
  %762 = vmatprep.subr.mxu0 0.0
  %763 = vmatpush1.msra.mxu0 0.0
  %764 = vmatprep.mubr.f32.mxu0 0.0
  %765 = vmatmul.mubr.f32.gmra.mrb[0].mxu0 %v698
  %v766 = vpop.f32.mrb[0].mxu0
  %v767 = vadd.f32 0.0, %v766
  %v768 = vpop.f32.mrb[0].mxu0
  %769 = vdwg.mxu0
  %v770 = vadd.f32 %v697, %v767
  %v771 = vxor.u32 %v770, 2147483648
  %v772 = vmul.f32 %v771, 1.442695
  %v773 = vpow.pop %v772
  %v774 = vadd.f32 %v773, 1.0
  %v775 = vrcp.pop %v774
  %v776 = vmul.f32 1.0, %v775
  %v777 = vtanh.pop %v770
  %v778 = vmul.f32 %v776, %v685
  %780 = vrot.lane.b32.xlu0 %v777, 112
  %v781 = vpop.permute.xlu0 %780
  %v783 = vmul.f32 %v776, %v781
  %785 = vrot.lane.b32.xlu0 %v783, 8
  %v786 = vpop.permute.xlu0 %785
  %v788 = vadd.f32 %v778, %v786
  %v789 = vtanh.pop %v788
  %791 = vrot.lane.b32.xlu0 %v789, 16
  %v792 = vpop.permute.xlu0 %791
  %v794 = vmul.f32 %v776, %v792
  %796 = vrot.lane.b32.xlu0 %v794, 104
  %v797 = vpop.permute.xlu0 %796
  %799 = vst.msk [vmem:[#allocation2 + $0x28] sm:$0xff] %vm41, %v797
  %v800 = vld [vmem:[#allocation3 + $0x30] sm:$0xff]
  %v801 = vsel %vm41, %v797, 0
  %803 = vmatprep.subr.mxu0 0.0
  %804 = vmatpush1.msra.mxu0 %v180
  %805 = vmatprep.subr.mxu0 0.0
  %806 = vmatpush1.msra.mxu0 0.0
  %807 = vmatprep.subr.mxu0 0.0
  %808 = vmatpush1.msra.mxu0 0.0
  %809 = vmatprep.subr.mxu0 0.0
  %810 = vmatpush1.msra.mxu0 0.0
  %811 = vmatprep.subr.mxu0 0.0
  %812 = vmatpush1.msra.mxu0 0.0
  %813 = vmatprep.subr.mxu0 0.0
  %814 = vmatpush1.msra.mxu0 0.0
  %815 = vmatprep.subr.mxu0 0.0
  %816 = vmatpush1.msra.mxu0 0.0
  %817 = vmatprep.subr.mxu0 0.0
  %818 = vmatpush1.msra.mxu0 0.0
  %819 = vmatprep.subr.mxu0 0.0
  %820 = vmatpush1.msra.mxu0 0.0
  %821 = vmatprep.subr.mxu0 0.0
  %822 = vmatpush1.msra.mxu0 0.0
  %823 = vmatprep.subr.mxu0 0.0
  %824 = vmatpush1.msra.mxu0 0.0
  %825 = vmatprep.subr.mxu0 0.0
  %826 = vmatpush1.msra.mxu0 0.0
  %827 = vmatprep.subr.mxu0 0.0
  %828 = vmatpush1.msra.mxu0 0.0
  %829 = vmatprep.subr.mxu0 0.0
  %830 = vmatpush1.msra.mxu0 0.0
  %831 = vmatprep.subr.mxu0 0.0
  %832 = vmatpush1.msra.mxu0 0.0
  %833 = vmatprep.subr.mxu0 0.0
  %834 = vmatpush1.msra.mxu0 0.0
  %835 = vmatprep.subr.mxu0 0.0
  %836 = vmatpush1.msra.mxu0 0.0
  %837 = vmatprep.subr.mxu0 0.0
  %838 = vmatpush1.msra.mxu0 0.0
  %839 = vmatprep.subr.mxu0 0.0
  %840 = vmatpush1.msra.mxu0 0.0
  %841 = vmatprep.subr.mxu0 0.0
  %842 = vmatpush1.msra.mxu0 0.0
  %843 = vmatprep.subr.mxu0 0.0
  %844 = vmatpush1.msra.mxu0 0.0
  %845 = vmatprep.subr.mxu0 0.0
  %846 = vmatpush1.msra.mxu0 0.0
  %847 = vmatprep.subr.mxu0 0.0
  %848 = vmatpush1.msra.mxu0 0.0
  %849 = vmatprep.subr.mxu0 0.0
  %850 = vmatpush1.msra.mxu0 0.0
  %851 = vmatprep.subr.mxu0 0.0
  %852 = vmatpush1.msra.mxu0 0.0
  %853 = vmatprep.subr.mxu0 0.0
  %854 = vmatpush1.msra.mxu0 0.0
  %855 = vmatprep.subr.mxu0 0.0
  %856 = vmatpush1.msra.mxu0 0.0
  %857 = vmatprep.subr.mxu0 0.0
  %858 = vmatpush1.msra.mxu0 0.0
  %859 = vmatprep.subr.mxu0 0.0
  %860 = vmatpush1.msra.mxu0 0.0
  %861 = vmatprep.subr.mxu0 0.0
  %862 = vmatpush1.msra.mxu0 0.0
  %863 = vmatprep.subr.mxu0 0.0
  %864 = vmatpush1.msra.mxu0 0.0
  %865 = vmatprep.subr.mxu0 0.0
  %866 = vmatpush1.msra.mxu0 0.0
  %867 = vmatprep.mubr.f32.mxu0 0.0
  %868 = vmatmul.mubr.f32.gmra.mrb[0].mxu0 %v801
  %v869 = vpop.f32.mrb[0].mxu0
  %v870 = vadd.f32 0.0, %v869
  %v871 = vpop.f32.mrb[0].mxu0
  %872 = vdwg.mxu0
  %v873 = vadd.f32 %v800, %v870
  %v874 = vxor.u32 %v873, 2147483648
  %v875 = vmul.f32 %v874, 1.442695
  %v876 = vpow.pop %v875
  %v877 = vadd.f32 %v876, 1.0
  %v878 = vrcp.pop %v877
  %v879 = vmul.f32 1.0, %v878
  %v880 = vtanh.pop %v873
  %v881 = vmul.f32 %v879, %v788
  %883 = vrot.lane.b32.xlu0 %v880, 112
  %v884 = vpop.permute.xlu0 %883
  %v886 = vmul.f32 %v879, %v884
  %888 = vrot.lane.b32.xlu0 %v886, 8
  %v889 = vpop.permute.xlu0 %888
  %v891 = vadd.f32 %v881, %v889
  %v892 = vtanh.pop %v891
  %894 = vrot.lane.b32.xlu0 %v892, 16
  %v895 = vpop.permute.xlu0 %894
  %v897 = vmul.f32 %v879, %v895
  %899 = vrot.lane.b32.xlu0 %v897, 104
  %v900 = vpop.permute.xlu0 %899
  %902 = vst.msk [vmem:[#allocation2 + $0x30] sm:$0xff] %vm41, %v900
  %v903 = vld [vmem:[#allocation3 + $0x38] sm:$0xff]
  %v904 = vsel %vm41, %v900, 0
  %906 = vmatprep.subr.mxu0 0.0
  %907 = vmatpush1.msra.mxu0 %v180
  %908 = vmatprep.subr.mxu0 0.0
  %909 = vmatpush1.msra.mxu0 0.0
  %910 = vmatprep.subr.mxu0 0.0
  %911 = vmatpush1.msra.mxu0 0.0
  %912 = vmatprep.subr.mxu0 0.0
  %913 = vmatpush1.msra.mxu0 0.0
  %914 = vmatprep.subr.mxu0 0.0
  %915 = vmatpush1.msra.mxu0 0.0
  %916 = vmatprep.subr.mxu0 0.0
  %917 = vmatpush1.msra.mxu0 0.0
  %918 = vmatprep.subr.mxu0 0.0
  %919 = vmatpush1.msra.mxu0 0.0
  %920 = vmatprep.subr.mxu0 0.0
  %921 = vmatpush1.msra.mxu0 0.0
  %922 = vmatprep.subr.mxu0 0.0
  %923 = vmatpush1.msra.mxu0 0.0
  %924 = vmatprep.subr.mxu0 0.0
  %925 = vmatpush1.msra.mxu0 0.0
  %926 = vmatprep.subr.mxu0 0.0
  %927 = vmatpush1.msra.mxu0 0.0
  %928 = vmatprep.subr.mxu0 0.0
  %929 = vmatpush1.msra.mxu0 0.0
  %930 = vmatprep.subr.mxu0 0.0
  %931 = vmatpush1.msra.mxu0 0.0
  %932 = vmatprep.subr.mxu0 0.0
  %933 = vmatpush1.msra.mxu0 0.0
  %934 = vmatprep.subr.mxu0 0.0
  %935 = vmatpush1.msra.mxu0 0.0
  %936 = vmatprep.subr.mxu0 0.0
  %937 = vmatpush1.msra.mxu0 0.0
  %938 = vmatprep.subr.mxu0 0.0
  %939 = vmatpush1.msra.mxu0 0.0
  %940 = vmatprep.subr.mxu0 0.0
  %941 = vmatpush1.msra.mxu0 0.0
  %942 = vmatprep.subr.mxu0 0.0
  %943 = vmatpush1.msra.mxu0 0.0
  %944 = vmatprep.subr.mxu0 0.0
  %945 = vmatpush1.msra.mxu0 0.0
  %946 = vmatprep.subr.mxu0 0.0
  %947 = vmatpush1.msra.mxu0 0.0
  %948 = vmatprep.subr.mxu0 0.0
  %949 = vmatpush1.msra.mxu0 0.0
  %950 = vmatprep.subr.mxu0 0.0
  %951 = vmatpush1.msra.mxu0 0.0
  %952 = vmatprep.subr.mxu0 0.0
  %953 = vmatpush1.msra.mxu0 0.0
  %954 = vmatprep.subr.mxu0 0.0
  %955 = vmatpush1.msra.mxu0 0.0
  %956 = vmatprep.subr.mxu0 0.0
  %957 = vmatpush1.msra.mxu0 0.0
  %958 = vmatprep.subr.mxu0 0.0
  %959 = vmatpush1.msra.mxu0 0.0
  %960 = vmatprep.subr.mxu0 0.0
  %961 = vmatpush1.msra.mxu0 0.0
  %962 = vmatprep.subr.mxu0 0.0
  %963 = vmatpush1.msra.mxu0 0.0
  %964 = vmatprep.subr.mxu0 0.0
  %965 = vmatpush1.msra.mxu0 0.0
  %966 = vmatprep.subr.mxu0 0.0
  %967 = vmatpush1.msra.mxu0 0.0
  %968 = vmatprep.subr.mxu0 0.0
  %969 = vmatpush1.msra.mxu0 0.0
  %970 = vmatprep.mubr.f32.mxu0 0.0
  %971 = vmatmul.mubr.f32.gmra.mrb[0].mxu0 %v904
  %v972 = vpop.f32.mrb[0].mxu0
  %v973 = vadd.f32 0.0, %v972
  %v974 = vpop.f32.mrb[0].mxu0
  %975 = vdwg.mxu0
  %v976 = vadd.f32 %v903, %v973
  %v977 = vxor.u32 %v976, 2147483648
  %v978 = vmul.f32 %v977, 1.442695
  %v979 = vpow.pop %v978
  %v980 = vadd.f32 %v979, 1.0
  %v981 = vrcp.pop %v980
  %v982 = vmul.f32 1.0, %v981
  %v983 = vtanh.pop %v976
  %v984 = vmul.f32 %v982, %v891
  %986 = vrot.lane.b32.xlu0 %v983, 112
  %v987 = vpop.permute.xlu0 %986
  %v989 = vmul.f32 %v982, %v987
  %991 = vrot.lane.b32.xlu0 %v989, 8
  %v992 = vpop.permute.xlu0 %991
  %v994 = vadd.f32 %v984, %v992
  %v995 = vtanh.pop %v994
  %997 = vrot.lane.b32.xlu0 %v995, 16
  %v998 = vpop.permute.xlu0 %997
  %v1000 = vmul.f32 %v982, %v998
  %1002 = vrot.lane.b32.xlu0 %v1000, 104
  %v1003 = vpop.permute.xlu0 %1002
  %1005 = vst.msk [vmem:[#allocation2 + $0x38] sm:$0xff] %vm41, %v1003
  %v1006 = vld [vmem:[#allocation2] sm:$0xff]
  %v1007 = vld [vmem:[#allocation2 + $0x8] sm:$0xff]
  %v1008 = vld [vmem:[#allocation2 + $0x10] sm:$0xff]
  %v1009 = vld [vmem:[#allocation2 + $0x18] sm:$0xff]
  %v1010 = vld [vmem:[#allocation2 + $0x20] sm:$0xff]
  %v1011 = vld [vmem:[#allocation2 + $0x28] sm:$0xff]
  %v1012 = vld [vmem:[#allocation2 + $0x30] sm:$0xff]
  %v1013 = vld [vmem:[#allocation2 + $0x38] sm:$0xff]
  %s1014 = scalar_lea.vmem %s1, 8
  %v1015 = vld [vmem:[%s1014] sm:$0xff]
  %s1016 = scalar_lea.vmem %s3, 1
  %v1017 = vld [vmem:[%s1016] sm:$0x1]
  %v1019 = vlaneseq
  %v1020 = vshrl.u32 %v1019, 7
  %v1021 = vsub.s32 0, %v1020
  %v1022 = vrot.slane %v1017, %v1021
  %v1025 = vsel %vm41, %v1006, 0
  %v1028 = vsel %vm41, %v1007, 0
  %v1031 = vsel %vm41, %v1008, 0
  %v1034 = vsel %vm41, %v1009, 0
  %v1037 = vsel %vm41, %v1010, 0
  %v1040 = vsel %vm41, %v1011, 0
  %v1043 = vsel %vm41, %v1012, 0
  %v1046 = vsel %vm41, %v1013, 0
  %1048 = vmatprep.subr.mxu0 0.0
  %1049 = vmatpush1.msra.mxu0 %v1015
  %1050 = vmatprep.subr.mxu0 0.0
  %1051 = vmatpush1.msra.mxu0 0.0
  %1052 = vmatprep.subr.mxu0 0.0
  %1053 = vmatpush1.msra.mxu0 0.0
  %1054 = vmatprep.subr.mxu0 0.0
  %1055 = vmatpush1.msra.mxu0 0.0
  %1056 = vmatprep.subr.mxu0 0.0
  %1057 = vmatpush1.msra.mxu0 0.0
  %1058 = vmatprep.subr.mxu0 0.0
  %1059 = vmatpush1.msra.mxu0 0.0
  %1060 = vmatprep.subr.mxu0 0.0
  %1061 = vmatpush1.msra.mxu0 0.0
  %1062 = vmatprep.subr.mxu0 0.0
  %1063 = vmatpush1.msra.mxu0 0.0
  %1064 = vmatprep.subr.mxu0 0.0
  %1065 = vmatpush1.msra.mxu0 0.0
  %1066 = vmatprep.subr.mxu0 0.0
  %1067 = vmatpush1.msra.mxu0 0.0
  %1068 = vmatprep.subr.mxu0 0.0
  %1069 = vmatpush1.msra.mxu0 0.0
  %1070 = vmatprep.subr.mxu0 0.0
  %1071 = vmatpush1.msra.mxu0 0.0
  %1072 = vmatprep.subr.mxu0 0.0
  %1073 = vmatpush1.msra.mxu0 0.0
  %1074 = vmatprep.subr.mxu0 0.0
  %1075 = vmatpush1.msra.mxu0 0.0
  %1076 = vmatprep.subr.mxu0 0.0
  %1077 = vmatpush1.msra.mxu0 0.0
  %1078 = vmatprep.subr.mxu0 0.0
  %1079 = vmatpush1.msra.mxu0 0.0
  %1080 = vmatprep.subr.mxu0 0.0
  %1081 = vmatpush1.msra.mxu0 0.0
  %1082 = vmatprep.subr.mxu0 0.0
  %1083 = vmatpush1.msra.mxu0 0.0
  %1084 = vmatprep.subr.mxu0 0.0
  %1085 = vmatpush1.msra.mxu0 0.0
  %1086 = vmatprep.subr.mxu0 0.0
  %1087 = vmatpush1.msra.mxu0 0.0
  %1088 = vmatprep.subr.mxu0 0.0
  %1089 = vmatpush1.msra.mxu0 0.0
  %1090 = vmatprep.subr.mxu0 0.0
  %1091 = vmatpush1.msra.mxu0 0.0
  %1092 = vmatprep.subr.mxu0 0.0
  %1093 = vmatpush1.msra.mxu0 0.0
  %1094 = vmatprep.subr.mxu0 0.0
  %1095 = vmatpush1.msra.mxu0 0.0
  %1096 = vmatprep.subr.mxu0 0.0
  %1097 = vmatpush1.msra.mxu0 0.0
  %1098 = vmatprep.subr.mxu0 0.0
  %1099 = vmatpush1.msra.mxu0 0.0
  %1100 = vmatprep.subr.mxu0 0.0
  %1101 = vmatpush1.msra.mxu0 0.0
  %1102 = vmatprep.subr.mxu0 0.0
  %1103 = vmatpush1.msra.mxu0 0.0
  %1104 = vmatprep.subr.mxu0 0.0
  %1105 = vmatpush1.msra.mxu0 0.0
  %1106 = vmatprep.subr.mxu0 0.0
  %1107 = vmatpush1.msra.mxu0 0.0
  %1108 = vmatprep.subr.mxu0 0.0
  %1109 = vmatpush1.msra.mxu0 0.0
  %1110 = vmatprep.subr.mxu0 0.0
  %1111 = vmatpush1.msra.mxu0 0.0
  %1112 = vmatprep.mubr.f32.mxu0 0.0
  %1113 = vmatmul.mubr.f32.gmra.mrb[0].mxu0 %v1025
  %v1114 = vpop.f32.mrb[0].mxu0
  %v1115 = vadd.f32 %v1022, %v1114
  %v1116 = vpop.f32.mrb[0].mxu0
  %1117 = vmatprep.mubr.f32.mxu0 0.0
  %1118 = vmatmul.mubr.f32.gmra.mrb[0].mxu0 %v1028
  %v1119 = vpop.f32.mrb[0].mxu0
  %v1120 = vadd.f32 %v1022, %v1119
  %v1121 = vpop.f32.mrb[0].mxu0
  %1122 = vmatprep.mubr.f32.mxu0 0.0
  %1123 = vmatmul.mubr.f32.gmra.mrb[0].mxu0 %v1031
  %v1124 = vpop.f32.mrb[0].mxu0
  %v1125 = vadd.f32 %v1022, %v1124
  %v1126 = vpop.f32.mrb[0].mxu0
  %1127 = vmatprep.mubr.f32.mxu0 0.0
  %1128 = vmatmul.mubr.f32.gmra.mrb[0].mxu0 %v1034
  %v1129 = vpop.f32.mrb[0].mxu0
  %v1130 = vadd.f32 %v1022, %v1129
  %v1131 = vpop.f32.mrb[0].mxu0
  %1132 = vmatprep.mubr.f32.mxu0 0.0
  %1133 = vmatmul.mubr.f32.gmra.mrb[0].mxu0 %v1037
  %v1134 = vpop.f32.mrb[0].mxu0
  %v1135 = vadd.f32 %v1022, %v1134
  %v1136 = vpop.f32.mrb[0].mxu0
  %1137 = vmatprep.mubr.f32.mxu0 0.0
  %1138 = vmatmul.mubr.f32.gmra.mrb[0].mxu0 %v1040
  %v1139 = vpop.f32.mrb[0].mxu0
  %v1140 = vadd.f32 %v1022, %v1139
  %v1141 = vpop.f32.mrb[0].mxu0
  %1142 = vmatprep.mubr.f32.mxu0 0.0
  %1143 = vmatmul.mubr.f32.gmra.mrb[0].mxu0 %v1043
  %v1144 = vpop.f32.mrb[0].mxu0
  %v1145 = vadd.f32 %v1022, %v1144
  %v1146 = vpop.f32.mrb[0].mxu0
  %1147 = vmatprep.mubr.f32.mxu0 0.0
  %1148 = vmatmul.mubr.f32.gmra.mrb[0].mxu0 %v1046
  %v1149 = vpop.f32.mrb[0].mxu0
  %v1150 = vadd.f32 %v1022, %v1149
  %v1151 = vpop.f32.mrb[0].mxu0
  %1152 = vdwg.mxu0
  %1153 = vst.msk [vmem:[#allocation3] sm:$0xff] %vm171, %v1115
  %1154 = vst.msk [vmem:[#allocation3 + $0x8] sm:$0xff] %vm171, %v1120
  %1155 = vst.msk [vmem:[#allocation3 + $0x10] sm:$0xff] %vm171, %v1125
  %1156 = vst.msk [vmem:[#allocation3 + $0x18] sm:$0xff] %vm171, %v1130
  %1157 = vst.msk [vmem:[#allocation3 + $0x20] sm:$0xff] %vm171, %v1135
  %1158 = vst.msk [vmem:[#allocation3 + $0x28] sm:$0xff] %vm171, %v1140
  %1159 = vst.msk [vmem:[#allocation3 + $0x30] sm:$0xff] %vm171, %v1145
  %1160 = vst.msk [vmem:[#allocation3 + $0x38] sm:$0xff] %vm171, %v1150
  %s1161 = scalar_lea.vmem %s2, 8
  %v1162 = vld [vmem:[%s1161] sm:$0xff]
  %v1163 = vld [vmem:[#allocation3] sm:$0xff]
  %1164 = vmatprep.subr.mxu0 0.0
  %1165 = vmatpush1.msra.mxu0 %v1162
  %1166 = vmatprep.subr.mxu0 0.0
  %1167 = vmatpush1.msra.mxu0 0.0
  %1168 = vmatprep.subr.mxu0 0.0
  %1169 = vmatpush1.msra.mxu0 0.0
  %1170 = vmatprep.subr.mxu0 0.0
  %1171 = vmatpush1.msra.mxu0 0.0
  %1172 = vmatprep.subr.mxu0 0.0
  %1173 = vmatpush1.msra.mxu0 0.0
  %1174 = vmatprep.subr.mxu0 0.0
  %1175 = vmatpush1.msra.mxu0 0.0
  %1176 = vmatprep.subr.mxu0 0.0
  %1177 = vmatpush1.msra.mxu0 0.0
  %1178 = vmatprep.subr.mxu0 0.0
  %1179 = vmatpush1.msra.mxu0 0.0
  %1180 = vmatprep.subr.mxu0 0.0
  %1181 = vmatpush1.msra.mxu0 0.0
  %1182 = vmatprep.subr.mxu0 0.0
  %1183 = vmatpush1.msra.mxu0 0.0
  %1184 = vmatprep.subr.mxu0 0.0
  %1185 = vmatpush1.msra.mxu0 0.0
  %1186 = vmatprep.subr.mxu0 0.0
  %1187 = vmatpush1.msra.mxu0 0.0
  %1188 = vmatprep.subr.mxu0 0.0
  %1189 = vmatpush1.msra.mxu0 0.0
  %1190 = vmatprep.subr.mxu0 0.0
  %1191 = vmatpush1.msra.mxu0 0.0
  %1192 = vmatprep.subr.mxu0 0.0
  %1193 = vmatpush1.msra.mxu0 0.0
  %1194 = vmatprep.subr.mxu0 0.0
  %1195 = vmatpush1.msra.mxu0 0.0
  %1196 = vmatprep.subr.mxu0 0.0
  %1197 = vmatpush1.msra.mxu0 0.0
  %1198 = vmatprep.subr.mxu0 0.0
  %1199 = vmatpush1.msra.mxu0 0.0
  %1200 = vmatprep.subr.mxu0 0.0
  %1201 = vmatpush1.msra.mxu0 0.0
  %1202 = vmatprep.subr.mxu0 0.0
  %1203 = vmatpush1.msra.mxu0 0.0
  %1204 = vmatprep.subr.mxu0 0.0
  %1205 = vmatpush1.msra.mxu0 0.0
  %1206 = vmatprep.subr.mxu0 0.0
  %1207 = vmatpush1.msra.mxu0 0.0
  %1208 = vmatprep.subr.mxu0 0.0
  %1209 = vmatpush1.msra.mxu0 0.0
  %1210 = vmatprep.subr.mxu0 0.0
  %1211 = vmatpush1.msra.mxu0 0.0
  %1212 = vmatprep.subr.mxu0 0.0
  %1213 = vmatpush1.msra.mxu0 0.0
  %1214 = vmatprep.subr.mxu0 0.0
  %1215 = vmatpush1.msra.mxu0 0.0
  %1216 = vmatprep.subr.mxu0 0.0
  %1217 = vmatpush1.msra.mxu0 0.0
  %1218 = vmatprep.subr.mxu0 0.0
  %1219 = vmatpush1.msra.mxu0 0.0
  %1220 = vmatprep.subr.mxu0 0.0
  %1221 = vmatpush1.msra.mxu0 0.0
  %1222 = vmatprep.subr.mxu0 0.0
  %1223 = vmatpush1.msra.mxu0 0.0
  %1224 = vmatprep.subr.mxu0 0.0
  %1225 = vmatpush1.msra.mxu0 0.0
  %1226 = vmatprep.subr.mxu0 0.0
  %1227 = vmatpush1.msra.mxu0 0.0
  %1228 = vmatprep.mubr.f32.mxu0 0.0
  %1229 = vmatmul.mubr.f32.gmra.mrb[0].mxu0 %v183
  %v1230 = vpop.f32.mrb[0].mxu0
  %v1231 = vadd.f32 0.0, %v1230
  %v1232 = vpop.f32.mrb[0].mxu0
  %1233 = vdwg.mxu0
  %v1234 = vadd.f32 %v1163, %v1231
  %v1235 = vxor.u32 %v1234, 2147483648
  %v1236 = vmul.f32 %v1235, 1.442695
  %v1237 = vpow.pop %v1236
  %v1238 = vadd.f32 %v1237, 1.0
  %v1239 = vrcp.pop %v1238
  %v1240 = vmul.f32 1.0, %v1239
  %v1241 = vtanh.pop %v1234
  %v1242 = vmul.f32 %v1240, 0.0
  %1244 = vrot.lane.b32.xlu0 %v1241, 112
  %v1245 = vpop.permute.xlu0 %1244
  %v1247 = vmul.f32 %v1240, %v1245
  %1249 = vrot.lane.b32.xlu0 %v1247, 8
  %v1250 = vpop.permute.xlu0 %1249
  %v1252 = vadd.f32 %v1242, %v1250
  %v1253 = vtanh.pop %v1252
  %1255 = vrot.lane.b32.xlu0 %v1253, 16
  %v1256 = vpop.permute.xlu0 %1255
  %v1258 = vmul.f32 %v1240, %v1256
  %1260 = vrot.lane.b32.xlu0 %v1258, 104
  %v1261 = vpop.permute.xlu0 %1260
  %1263 = vst.msk [vmem:[#allocation2] sm:$0xff] %vm41, %v1261
  %v1264 = vld [vmem:[#allocation3 + $0x8] sm:$0xff]
  %v1265 = vsel %vm41, %v1261, 0
  %1267 = vmatprep.subr.mxu0 0.0
  %1268 = vmatpush1.msra.mxu0 %v1162
  %1269 = vmatprep.subr.mxu0 0.0
  %1270 = vmatpush1.msra.mxu0 0.0
  %1271 = vmatprep.subr.mxu0 0.0
  %1272 = vmatpush1.msra.mxu0 0.0
  %1273 = vmatprep.subr.mxu0 0.0
  %1274 = vmatpush1.msra.mxu0 0.0
  %1275 = vmatprep.subr.mxu0 0.0
  %1276 = vmatpush1.msra.mxu0 0.0
  %1277 = vmatprep.subr.mxu0 0.0
  %1278 = vmatpush1.msra.mxu0 0.0
  %1279 = vmatprep.subr.mxu0 0.0
  %1280 = vmatpush1.msra.mxu0 0.0
  %1281 = vmatprep.subr.mxu0 0.0
  %1282 = vmatpush1.msra.mxu0 0.0
  %1283 = vmatprep.subr.mxu0 0.0
  %1284 = vmatpush1.msra.mxu0 0.0
  %1285 = vmatprep.subr.mxu0 0.0
  %1286 = vmatpush1.msra.mxu0 0.0
  %1287 = vmatprep.subr.mxu0 0.0
  %1288 = vmatpush1.msra.mxu0 0.0
  %1289 = vmatprep.subr.mxu0 0.0
  %1290 = vmatpush1.msra.mxu0 0.0
  %1291 = vmatprep.subr.mxu0 0.0
  %1292 = vmatpush1.msra.mxu0 0.0
  %1293 = vmatprep.subr.mxu0 0.0
  %1294 = vmatpush1.msra.mxu0 0.0
  %1295 = vmatprep.subr.mxu0 0.0
  %1296 = vmatpush1.msra.mxu0 0.0
  %1297 = vmatprep.subr.mxu0 0.0
  %1298 = vmatpush1.msra.mxu0 0.0
  %1299 = vmatprep.subr.mxu0 0.0
  %1300 = vmatpush1.msra.mxu0 0.0
  %1301 = vmatprep.subr.mxu0 0.0
  %1302 = vmatpush1.msra.mxu0 0.0
  %1303 = vmatprep.subr.mxu0 0.0
  %1304 = vmatpush1.msra.mxu0 0.0
  %1305 = vmatprep.subr.mxu0 0.0
  %1306 = vmatpush1.msra.mxu0 0.0
  %1307 = vmatprep.subr.mxu0 0.0
  %1308 = vmatpush1.msra.mxu0 0.0
  %1309 = vmatprep.subr.mxu0 0.0
  %1310 = vmatpush1.msra.mxu0 0.0
  %1311 = vmatprep.subr.mxu0 0.0
  %1312 = vmatpush1.msra.mxu0 0.0
  %1313 = vmatprep.subr.mxu0 0.0
  %1314 = vmatpush1.msra.mxu0 0.0
  %1315 = vmatprep.subr.mxu0 0.0
  %1316 = vmatpush1.msra.mxu0 0.0
  %1317 = vmatprep.subr.mxu0 0.0
  %1318 = vmatpush1.msra.mxu0 0.0
  %1319 = vmatprep.subr.mxu0 0.0
  %1320 = vmatpush1.msra.mxu0 0.0
  %1321 = vmatprep.subr.mxu0 0.0
  %1322 = vmatpush1.msra.mxu0 0.0
  %1323 = vmatprep.subr.mxu0 0.0
  %1324 = vmatpush1.msra.mxu0 0.0
  %1325 = vmatprep.subr.mxu0 0.0
  %1326 = vmatpush1.msra.mxu0 0.0
  %1327 = vmatprep.subr.mxu0 0.0
  %1328 = vmatpush1.msra.mxu0 0.0
  %1329 = vmatprep.subr.mxu0 0.0
  %1330 = vmatpush1.msra.mxu0 0.0
  %1331 = vmatprep.mubr.f32.mxu0 0.0
  %1332 = vmatmul.mubr.f32.gmra.mrb[0].mxu0 %v1265
  %v1333 = vpop.f32.mrb[0].mxu0
  %v1334 = vadd.f32 0.0, %v1333
  %v1335 = vpop.f32.mrb[0].mxu0
  %1336 = vdwg.mxu0
  %v1337 = vadd.f32 %v1264, %v1334
  %v1338 = vxor.u32 %v1337, 2147483648
  %v1339 = vmul.f32 %v1338, 1.442695
  %v1340 = vpow.pop %v1339
  %v1341 = vadd.f32 %v1340, 1.0
  %v1342 = vrcp.pop %v1341
  %v1343 = vmul.f32 1.0, %v1342
  %v1344 = vtanh.pop %v1337
  %v1345 = vmul.f32 %v1343, %v1252
  %1347 = vrot.lane.b32.xlu0 %v1344, 112
  %v1348 = vpop.permute.xlu0 %1347
  %v1350 = vmul.f32 %v1343, %v1348
  %1352 = vrot.lane.b32.xlu0 %v1350, 8
  %v1353 = vpop.permute.xlu0 %1352
  %v1355 = vadd.f32 %v1345, %v1353
  %v1356 = vtanh.pop %v1355
  %1358 = vrot.lane.b32.xlu0 %v1356, 16
  %v1359 = vpop.permute.xlu0 %1358
  %v1361 = vmul.f32 %v1343, %v1359
  %1363 = vrot.lane.b32.xlu0 %v1361, 104
  %v1364 = vpop.permute.xlu0 %1363
  %1366 = vst.msk [vmem:[#allocation2 + $0x8] sm:$0xff] %vm41, %v1364
  %v1367 = vld [vmem:[#allocation3 + $0x10] sm:$0xff]
  %v1368 = vsel %vm41, %v1364, 0
  %1370 = vmatprep.subr.mxu0 0.0
  %1371 = vmatpush1.msra.mxu0 %v1162
  %1372 = vmatprep.subr.mxu0 0.0
  %1373 = vmatpush1.msra.mxu0 0.0
  %1374 = vmatprep.subr.mxu0 0.0
  %1375 = vmatpush1.msra.mxu0 0.0
  %1376 = vmatprep.subr.mxu0 0.0
  %1377 = vmatpush1.msra.mxu0 0.0
  %1378 = vmatprep.subr.mxu0 0.0
  %1379 = vmatpush1.msra.mxu0 0.0
  %1380 = vmatprep.subr.mxu0 0.0
  %1381 = vmatpush1.msra.mxu0 0.0
  %1382 = vmatprep.subr.mxu0 0.0
  %1383 = vmatpush1.msra.mxu0 0.0
  %1384 = vmatprep.subr.mxu0 0.0
  %1385 = vmatpush1.msra.mxu0 0.0
  %1386 = vmatprep.subr.mxu0 0.0
  %1387 = vmatpush1.msra.mxu0 0.0
  %1388 = vmatprep.subr.mxu0 0.0
  %1389 = vmatpush1.msra.mxu0 0.0
  %1390 = vmatprep.subr.mxu0 0.0
  %1391 = vmatpush1.msra.mxu0 0.0
  %1392 = vmatprep.subr.mxu0 0.0
  %1393 = vmatpush1.msra.mxu0 0.0
  %1394 = vmatprep.subr.mxu0 0.0
  %1395 = vmatpush1.msra.mxu0 0.0
  %1396 = vmatprep.subr.mxu0 0.0
  %1397 = vmatpush1.msra.mxu0 0.0
  %1398 = vmatprep.subr.mxu0 0.0
  %1399 = vmatpush1.msra.mxu0 0.0
  %1400 = vmatprep.subr.mxu0 0.0
  %1401 = vmatpush1.msra.mxu0 0.0
  %1402 = vmatprep.subr.mxu0 0.0
  %1403 = vmatpush1.msra.mxu0 0.0
  %1404 = vmatprep.subr.mxu0 0.0
  %1405 = vmatpush1.msra.mxu0 0.0
  %1406 = vmatprep.subr.mxu0 0.0
  %1407 = vmatpush1.msra.mxu0 0.0
  %1408 = vmatprep.subr.mxu0 0.0
  %1409 = vmatpush1.msra.mxu0 0.0
  %1410 = vmatprep.subr.mxu0 0.0
  %1411 = vmatpush1.msra.mxu0 0.0
  %1412 = vmatprep.subr.mxu0 0.0
  %1413 = vmatpush1.msra.mxu0 0.0
  %1414 = vmatprep.subr.mxu0 0.0
  %1415 = vmatpush1.msra.mxu0 0.0
  %1416 = vmatprep.subr.mxu0 0.0
  %1417 = vmatpush1.msra.mxu0 0.0
  %1418 = vmatprep.subr.mxu0 0.0
  %1419 = vmatpush1.msra.mxu0 0.0
  %1420 = vmatprep.subr.mxu0 0.0
  %1421 = vmatpush1.msra.mxu0 0.0
  %1422 = vmatprep.subr.mxu0 0.0
  %1423 = vmatpush1.msra.mxu0 0.0
  %1424 = vmatprep.subr.mxu0 0.0
  %1425 = vmatpush1.msra.mxu0 0.0
  %1426 = vmatprep.subr.mxu0 0.0
  %1427 = vmatpush1.msra.mxu0 0.0
  %1428 = vmatprep.subr.mxu0 0.0
  %1429 = vmatpush1.msra.mxu0 0.0
  %1430 = vmatprep.subr.mxu0 0.0
  %1431 = vmatpush1.msra.mxu0 0.0
  %1432 = vmatprep.subr.mxu0 0.0
  %1433 = vmatpush1.msra.mxu0 0.0
  %1434 = vmatprep.mubr.f32.mxu0 0.0
  %1435 = vmatmul.mubr.f32.gmra.mrb[0].mxu0 %v1368
  %v1436 = vpop.f32.mrb[0].mxu0
  %v1437 = vadd.f32 0.0, %v1436
  %v1438 = vpop.f32.mrb[0].mxu0
  %1439 = vdwg.mxu0
  %v1440 = vadd.f32 %v1367, %v1437
  %v1441 = vxor.u32 %v1440, 2147483648
  %v1442 = vmul.f32 %v1441, 1.442695
  %v1443 = vpow.pop %v1442
  %v1444 = vadd.f32 %v1443, 1.0
  %v1445 = vrcp.pop %v1444
  %v1446 = vmul.f32 1.0, %v1445
  %v1447 = vtanh.pop %v1440
  %v1448 = vmul.f32 %v1446, %v1355
  %1450 = vrot.lane.b32.xlu0 %v1447, 112
  %v1451 = vpop.permute.xlu0 %1450
  %v1453 = vmul.f32 %v1446, %v1451
  %1455 = vrot.lane.b32.xlu0 %v1453, 8
  %v1456 = vpop.permute.xlu0 %1455
  %v1458 = vadd.f32 %v1448, %v1456
  %v1459 = vtanh.pop %v1458
  %1461 = vrot.lane.b32.xlu0 %v1459, 16
  %v1462 = vpop.permute.xlu0 %1461
  %v1464 = vmul.f32 %v1446, %v1462
  %1466 = vrot.lane.b32.xlu0 %v1464, 104
  %v1467 = vpop.permute.xlu0 %1466
  %1469 = vst.msk [vmem:[#allocation2 + $0x10] sm:$0xff] %vm41, %v1467
  %v1470 = vld [vmem:[#allocation3 + $0x18] sm:$0xff]
  %v1471 = vsel %vm41, %v1467, 0
  %1473 = vmatprep.subr.mxu0 0.0
  %1474 = vmatpush1.msra.mxu0 %v1162
  %1475 = vmatprep.subr.mxu0 0.0
  %1476 = vmatpush1.msra.mxu0 0.0
  %1477 = vmatprep.subr.mxu0 0.0
  %1478 = vmatpush1.msra.mxu0 0.0
  %1479 = vmatprep.subr.mxu0 0.0
  %1480 = vmatpush1.msra.mxu0 0.0
  %1481 = vmatprep.subr.mxu0 0.0
  %1482 = vmatpush1.msra.mxu0 0.0
  %1483 = vmatprep.subr.mxu0 0.0
  %1484 = vmatpush1.msra.mxu0 0.0
  %1485 = vmatprep.subr.mxu0 0.0
  %1486 = vmatpush1.msra.mxu0 0.0
  %1487 = vmatprep.subr.mxu0 0.0
  %1488 = vmatpush1.msra.mxu0 0.0
  %1489 = vmatprep.subr.mxu0 0.0
  %1490 = vmatpush1.msra.mxu0 0.0
  %1491 = vmatprep.subr.mxu0 0.0
  %1492 = vmatpush1.msra.mxu0 0.0
  %1493 = vmatprep.subr.mxu0 0.0
  %1494 = vmatpush1.msra.mxu0 0.0
  %1495 = vmatprep.subr.mxu0 0.0
  %1496 = vmatpush1.msra.mxu0 0.0
  %1497 = vmatprep.subr.mxu0 0.0
  %1498 = vmatpush1.msra.mxu0 0.0
  %1499 = vmatprep.subr.mxu0 0.0
  %1500 = vmatpush1.msra.mxu0 0.0
  %1501 = vmatprep.subr.mxu0 0.0
  %1502 = vmatpush1.msra.mxu0 0.0
  %1503 = vmatprep.subr.mxu0 0.0
  %1504 = vmatpush1.msra.mxu0 0.0
  %1505 = vmatprep.subr.mxu0 0.0
  %1506 = vmatpush1.msra.mxu0 0.0
  %1507 = vmatprep.subr.mxu0 0.0
  %1508 = vmatpush1.msra.mxu0 0.0
  %1509 = vmatprep.subr.mxu0 0.0
  %1510 = vmatpush1.msra.mxu0 0.0
  %1511 = vmatprep.subr.mxu0 0.0
  %1512 = vmatpush1.msra.mxu0 0.0
  %1513 = vmatprep.subr.mxu0 0.0
  %1514 = vmatpush1.msra.mxu0 0.0
  %1515 = vmatprep.subr.mxu0 0.0
  %1516 = vmatpush1.msra.mxu0 0.0
  %1517 = vmatprep.subr.mxu0 0.0
  %1518 = vmatpush1.msra.mxu0 0.0
  %1519 = vmatprep.subr.mxu0 0.0
  %1520 = vmatpush1.msra.mxu0 0.0
  %1521 = vmatprep.subr.mxu0 0.0
  %1522 = vmatpush1.msra.mxu0 0.0
  %1523 = vmatprep.subr.mxu0 0.0
  %1524 = vmatpush1.msra.mxu0 0.0
  %1525 = vmatprep.subr.mxu0 0.0
  %1526 = vmatpush1.msra.mxu0 0.0
  %1527 = vmatprep.subr.mxu0 0.0
  %1528 = vmatpush1.msra.mxu0 0.0
  %1529 = vmatprep.subr.mxu0 0.0
  %1530 = vmatpush1.msra.mxu0 0.0
  %1531 = vmatprep.subr.mxu0 0.0
  %1532 = vmatpush1.msra.mxu0 0.0
  %1533 = vmatprep.subr.mxu0 0.0
  %1534 = vmatpush1.msra.mxu0 0.0
  %1535 = vmatprep.subr.mxu0 0.0
  %1536 = vmatpush1.msra.mxu0 0.0
  %1537 = vmatprep.mubr.f32.mxu0 0.0
  %1538 = vmatmul.mubr.f32.gmra.mrb[0].mxu0 %v1471
  %v1539 = vpop.f32.mrb[0].mxu0
  %v1540 = vadd.f32 0.0, %v1539
  %v1541 = vpop.f32.mrb[0].mxu0
  %1542 = vdwg.mxu0
  %v1543 = vadd.f32 %v1470, %v1540
  %v1544 = vxor.u32 %v1543, 2147483648
  %v1545 = vmul.f32 %v1544, 1.442695
  %v1546 = vpow.pop %v1545
  %v1547 = vadd.f32 %v1546, 1.0
  %v1548 = vrcp.pop %v1547
  %v1549 = vmul.f32 1.0, %v1548
  %v1550 = vtanh.pop %v1543
  %v1551 = vmul.f32 %v1549, %v1458
  %1553 = vrot.lane.b32.xlu0 %v1550, 112
  %v1554 = vpop.permute.xlu0 %1553
  %v1556 = vmul.f32 %v1549, %v1554
  %1558 = vrot.lane.b32.xlu0 %v1556, 8
  %v1559 = vpop.permute.xlu0 %1558
  %v1561 = vadd.f32 %v1551, %v1559
  %v1562 = vtanh.pop %v1561
  %1564 = vrot.lane.b32.xlu0 %v1562, 16
  %v1565 = vpop.permute.xlu0 %1564
  %v1567 = vmul.f32 %v1549, %v1565
  %1569 = vrot.lane.b32.xlu0 %v1567, 104
  %v1570 = vpop.permute.xlu0 %1569
  %1572 = vst.msk [vmem:[#allocation2 + $0x18] sm:$0xff] %vm41, %v1570
  %v1573 = vld [vmem:[#allocation3 + $0x20] sm:$0xff]
  %v1574 = vsel %vm41, %v1570, 0
  %1576 = vmatprep.subr.mxu0 0.0
  %1577 = vmatpush1.msra.mxu0 %v1162
  %1578 = vmatprep.subr.mxu0 0.0
  %1579 = vmatpush1.msra.mxu0 0.0
  %1580 = vmatprep.subr.mxu0 0.0
  %1581 = vmatpush1.msra.mxu0 0.0
  %1582 = vmatprep.subr.mxu0 0.0
  %1583 = vmatpush1.msra.mxu0 0.0
  %1584 = vmatprep.subr.mxu0 0.0
  %1585 = vmatpush1.msra.mxu0 0.0
  %1586 = vmatprep.subr.mxu0 0.0
  %1587 = vmatpush1.msra.mxu0 0.0
  %1588 = vmatprep.subr.mxu0 0.0
  %1589 = vmatpush1.msra.mxu0 0.0
  %1590 = vmatprep.subr.mxu0 0.0
  %1591 = vmatpush1.msra.mxu0 0.0
  %1592 = vmatprep.subr.mxu0 0.0
  %1593 = vmatpush1.msra.mxu0 0.0
  %1594 = vmatprep.subr.mxu0 0.0
  %1595 = vmatpush1.msra.mxu0 0.0
  %1596 = vmatprep.subr.mxu0 0.0
  %1597 = vmatpush1.msra.mxu0 0.0
  %1598 = vmatprep.subr.mxu0 0.0
  %1599 = vmatpush1.msra.mxu0 0.0
  %1600 = vmatprep.subr.mxu0 0.0
  %1601 = vmatpush1.msra.mxu0 0.0
  %1602 = vmatprep.subr.mxu0 0.0
  %1603 = vmatpush1.msra.mxu0 0.0
  %1604 = vmatprep.subr.mxu0 0.0
  %1605 = vmatpush1.msra.mxu0 0.0
  %1606 = vmatprep.subr.mxu0 0.0
  %1607 = vmatpush1.msra.mxu0 0.0
  %1608 = vmatprep.subr.mxu0 0.0
  %1609 = vmatpush1.msra.mxu0 0.0
  %1610 = vmatprep.subr.mxu0 0.0
  %1611 = vmatpush1.msra.mxu0 0.0
  %1612 = vmatprep.subr.mxu0 0.0
  %1613 = vmatpush1.msra.mxu0 0.0
  %1614 = vmatprep.subr.mxu0 0.0
  %1615 = vmatpush1.msra.mxu0 0.0
  %1616 = vmatprep.subr.mxu0 0.0
  %1617 = vmatpush1.msra.mxu0 0.0
  %1618 = vmatprep.subr.mxu0 0.0
  %1619 = vmatpush1.msra.mxu0 0.0
  %1620 = vmatprep.subr.mxu0 0.0
  %1621 = vmatpush1.msra.mxu0 0.0
  %1622 = vmatprep.subr.mxu0 0.0
  %1623 = vmatpush1.msra.mxu0 0.0
  %1624 = vmatprep.subr.mxu0 0.0
  %1625 = vmatpush1.msra.mxu0 0.0
  %1626 = vmatprep.subr.mxu0 0.0
  %1627 = vmatpush1.msra.mxu0 0.0
  %1628 = vmatprep.subr.mxu0 0.0
  %1629 = vmatpush1.msra.mxu0 0.0
  %1630 = vmatprep.subr.mxu0 0.0
  %1631 = vmatpush1.msra.mxu0 0.0
  %1632 = vmatprep.subr.mxu0 0.0
  %1633 = vmatpush1.msra.mxu0 0.0
  %1634 = vmatprep.subr.mxu0 0.0
  %1635 = vmatpush1.msra.mxu0 0.0
  %1636 = vmatprep.subr.mxu0 0.0
  %1637 = vmatpush1.msra.mxu0 0.0
  %1638 = vmatprep.subr.mxu0 0.0
  %1639 = vmatpush1.msra.mxu0 0.0
  %1640 = vmatprep.mubr.f32.mxu0 0.0
  %1641 = vmatmul.mubr.f32.gmra.mrb[0].mxu0 %v1574
  %v1642 = vpop.f32.mrb[0].mxu0
  %v1643 = vadd.f32 0.0, %v1642
  %v1644 = vpop.f32.mrb[0].mxu0
  %1645 = vdwg.mxu0
  %v1646 = vadd.f32 %v1573, %v1643
  %v1647 = vxor.u32 %v1646, 2147483648
  %v1648 = vmul.f32 %v1647, 1.442695
  %v1649 = vpow.pop %v1648
  %v1650 = vadd.f32 %v1649, 1.0
  %v1651 = vrcp.pop %v1650
  %v1652 = vmul.f32 1.0, %v1651
  %v1653 = vtanh.pop %v1646
  %v1654 = vmul.f32 %v1652, %v1561
  %1656 = vrot.lane.b32.xlu0 %v1653, 112
  %v1657 = vpop.permute.xlu0 %1656
  %v1659 = vmul.f32 %v1652, %v1657
  %1661 = vrot.lane.b32.xlu0 %v1659, 8
  %v1662 = vpop.permute.xlu0 %1661
  %v1664 = vadd.f32 %v1654, %v1662
  %v1665 = vtanh.pop %v1664
  %1667 = vrot.lane.b32.xlu0 %v1665, 16
  %v1668 = vpop.permute.xlu0 %1667
  %v1670 = vmul.f32 %v1652, %v1668
  %1672 = vrot.lane.b32.xlu0 %v1670, 104
  %v1673 = vpop.permute.xlu0 %1672
  %1675 = vst.msk [vmem:[#allocation2 + $0x20] sm:$0xff] %vm41, %v1673
  %v1676 = vld [vmem:[#allocation3 + $0x28] sm:$0xff]
  %v1677 = vsel %vm41, %v1673, 0
  %1679 = vmatprep.subr.mxu0 0.0
  %1680 = vmatpush1.msra.mxu0 %v1162
  %1681 = vmatprep.subr.mxu0 0.0
  %1682 = vmatpush1.msra.mxu0 0.0
  %1683 = vmatprep.subr.mxu0 0.0
  %1684 = vmatpush1.msra.mxu0 0.0
  %1685 = vmatprep.subr.mxu0 0.0
  %1686 = vmatpush1.msra.mxu0 0.0
  %1687 = vmatprep.subr.mxu0 0.0
  %1688 = vmatpush1.msra.mxu0 0.0
  %1689 = vmatprep.subr.mxu0 0.0
  %1690 = vmatpush1.msra.mxu0 0.0
  %1691 = vmatprep.subr.mxu0 0.0
  %1692 = vmatpush1.msra.mxu0 0.0
  %1693 = vmatprep.subr.mxu0 0.0
  %1694 = vmatpush1.msra.mxu0 0.0
  %1695 = vmatprep.subr.mxu0 0.0
  %1696 = vmatpush1.msra.mxu0 0.0
  %1697 = vmatprep.subr.mxu0 0.0
  %1698 = vmatpush1.msra.mxu0 0.0
  %1699 = vmatprep.subr.mxu0 0.0
  %1700 = vmatpush1.msra.mxu0 0.0
  %1701 = vmatprep.subr.mxu0 0.0
  %1702 = vmatpush1.msra.mxu0 0.0
  %1703 = vmatprep.subr.mxu0 0.0
  %1704 = vmatpush1.msra.mxu0 0.0
  %1705 = vmatprep.subr.mxu0 0.0
  %1706 = vmatpush1.msra.mxu0 0.0
  %1707 = vmatprep.subr.mxu0 0.0
  %1708 = vmatpush1.msra.mxu0 0.0
  %1709 = vmatprep.subr.mxu0 0.0
  %1710 = vmatpush1.msra.mxu0 0.0
  %1711 = vmatprep.subr.mxu0 0.0
  %1712 = vmatpush1.msra.mxu0 0.0
  %1713 = vmatprep.subr.mxu0 0.0
  %1714 = vmatpush1.msra.mxu0 0.0
  %1715 = vmatprep.subr.mxu0 0.0
  %1716 = vmatpush1.msra.mxu0 0.0
  %1717 = vmatprep.subr.mxu0 0.0
  %1718 = vmatpush1.msra.mxu0 0.0
  %1719 = vmatprep.subr.mxu0 0.0
  %1720 = vmatpush1.msra.mxu0 0.0
  %1721 = vmatprep.subr.mxu0 0.0
  %1722 = vmatpush1.msra.mxu0 0.0
  %1723 = vmatprep.subr.mxu0 0.0
  %1724 = vmatpush1.msra.mxu0 0.0
  %1725 = vmatprep.subr.mxu0 0.0
  %1726 = vmatpush1.msra.mxu0 0.0
  %1727 = vmatprep.subr.mxu0 0.0
  %1728 = vmatpush1.msra.mxu0 0.0
  %1729 = vmatprep.subr.mxu0 0.0
  %1730 = vmatpush1.msra.mxu0 0.0
  %1731 = vmatprep.subr.mxu0 0.0
  %1732 = vmatpush1.msra.mxu0 0.0
  %1733 = vmatprep.subr.mxu0 0.0
  %1734 = vmatpush1.msra.mxu0 0.0
  %1735 = vmatprep.subr.mxu0 0.0
  %1736 = vmatpush1.msra.mxu0 0.0
  %1737 = vmatprep.subr.mxu0 0.0
  %1738 = vmatpush1.msra.mxu0 0.0
  %1739 = vmatprep.subr.mxu0 0.0
  %1740 = vmatpush1.msra.mxu0 0.0
  %1741 = vmatprep.subr.mxu0 0.0
  %1742 = vmatpush1.msra.mxu0 0.0
  %1743 = vmatprep.mubr.f32.mxu0 0.0
  %1744 = vmatmul.mubr.f32.gmra.mrb[0].mxu0 %v1677
  %v1745 = vpop.f32.mrb[0].mxu0
  %v1746 = vadd.f32 0.0, %v1745
  %v1747 = vpop.f32.mrb[0].mxu0
  %1748 = vdwg.mxu0
  %v1749 = vadd.f32 %v1676, %v1746
  %v1750 = vxor.u32 %v1749, 2147483648
  %v1751 = vmul.f32 %v1750, 1.442695
  %v1752 = vpow.pop %v1751
  %v1753 = vadd.f32 %v1752, 1.0
  %v1754 = vrcp.pop %v1753
  %v1755 = vmul.f32 1.0, %v1754
  %v1756 = vtanh.pop %v1749
  %v1757 = vmul.f32 %v1755, %v1664
  %1759 = vrot.lane.b32.xlu0 %v1756, 112
  %v1760 = vpop.permute.xlu0 %1759
  %v1762 = vmul.f32 %v1755, %v1760
  %1764 = vrot.lane.b32.xlu0 %v1762, 8
  %v1765 = vpop.permute.xlu0 %1764
  %v1767 = vadd.f32 %v1757, %v1765
  %v1768 = vtanh.pop %v1767
  %1770 = vrot.lane.b32.xlu0 %v1768, 16
  %v1771 = vpop.permute.xlu0 %1770
  %v1773 = vmul.f32 %v1755, %v1771
  %1775 = vrot.lane.b32.xlu0 %v1773, 104
  %v1776 = vpop.permute.xlu0 %1775
  %1778 = vst.msk [vmem:[#allocation2 + $0x28] sm:$0xff] %vm41, %v1776
  %v1779 = vld [vmem:[#allocation3 + $0x30] sm:$0xff]
  %v1780 = vsel %vm41, %v1776, 0
  %1782 = vmatprep.subr.mxu0 0.0
  %1783 = vmatpush1.msra.mxu0 %v1162
  %1784 = vmatprep.subr.mxu0 0.0
  %1785 = vmatpush1.msra.mxu0 0.0
  %1786 = vmatprep.subr.mxu0 0.0
  %1787 = vmatpush1.msra.mxu0 0.0
  %1788 = vmatprep.subr.mxu0 0.0
  %1789 = vmatpush1.msra.mxu0 0.0
  %1790 = vmatprep.subr.mxu0 0.0
  %1791 = vmatpush1.msra.mxu0 0.0
  %1792 = vmatprep.subr.mxu0 0.0
  %1793 = vmatpush1.msra.mxu0 0.0
  %1794 = vmatprep.subr.mxu0 0.0
  %1795 = vmatpush1.msra.mxu0 0.0
  %1796 = vmatprep.subr.mxu0 0.0
  %1797 = vmatpush1.msra.mxu0 0.0
  %1798 = vmatprep.subr.mxu0 0.0
  %1799 = vmatpush1.msra.mxu0 0.0
  %1800 = vmatprep.subr.mxu0 0.0
  %1801 = vmatpush1.msra.mxu0 0.0
  %1802 = vmatprep.subr.mxu0 0.0
  %1803 = vmatpush1.msra.mxu0 0.0
  %1804 = vmatprep.subr.mxu0 0.0
  %1805 = vmatpush1.msra.mxu0 0.0
  %1806 = vmatprep.subr.mxu0 0.0
  %1807 = vmatpush1.msra.mxu0 0.0
  %1808 = vmatprep.subr.mxu0 0.0
  %1809 = vmatpush1.msra.mxu0 0.0
  %1810 = vmatprep.subr.mxu0 0.0
  %1811 = vmatpush1.msra.mxu0 0.0
  %1812 = vmatprep.subr.mxu0 0.0
  %1813 = vmatpush1.msra.mxu0 0.0
  %1814 = vmatprep.subr.mxu0 0.0
  %1815 = vmatpush1.msra.mxu0 0.0
  %1816 = vmatprep.subr.mxu0 0.0
  %1817 = vmatpush1.msra.mxu0 0.0
  %1818 = vmatprep.subr.mxu0 0.0
  %1819 = vmatpush1.msra.mxu0 0.0
  %1820 = vmatprep.subr.mxu0 0.0
  %1821 = vmatpush1.msra.mxu0 0.0
  %1822 = vmatprep.subr.mxu0 0.0
  %1823 = vmatpush1.msra.mxu0 0.0
  %1824 = vmatprep.subr.mxu0 0.0
  %1825 = vmatpush1.msra.mxu0 0.0
  %1826 = vmatprep.subr.mxu0 0.0
  %1827 = vmatpush1.msra.mxu0 0.0
  %1828 = vmatprep.subr.mxu0 0.0
  %1829 = vmatpush1.msra.mxu0 0.0
  %1830 = vmatprep.subr.mxu0 0.0
  %1831 = vmatpush1.msra.mxu0 0.0
  %1832 = vmatprep.subr.mxu0 0.0
  %1833 = vmatpush1.msra.mxu0 0.0
  %1834 = vmatprep.subr.mxu0 0.0
  %1835 = vmatpush1.msra.mxu0 0.0
  %1836 = vmatprep.subr.mxu0 0.0
  %1837 = vmatpush1.msra.mxu0 0.0
  %1838 = vmatprep.subr.mxu0 0.0
  %1839 = vmatpush1.msra.mxu0 0.0
  %1840 = vmatprep.subr.mxu0 0.0
  %1841 = vmatpush1.msra.mxu0 0.0
  %1842 = vmatprep.subr.mxu0 0.0
  %1843 = vmatpush1.msra.mxu0 0.0
  %1844 = vmatprep.subr.mxu0 0.0
  %1845 = vmatpush1.msra.mxu0 0.0
  %1846 = vmatprep.mubr.f32.mxu0 0.0
  %1847 = vmatmul.mubr.f32.gmra.mrb[0].mxu0 %v1780
  %v1848 = vpop.f32.mrb[0].mxu0
  %v1849 = vadd.f32 0.0, %v1848
  %v1850 = vpop.f32.mrb[0].mxu0
  %1851 = vdwg.mxu0
  %v1852 = vadd.f32 %v1779, %v1849
  %v1853 = vxor.u32 %v1852, 2147483648
  %v1854 = vmul.f32 %v1853, 1.442695
  %v1855 = vpow.pop %v1854
  %v1856 = vadd.f32 %v1855, 1.0
  %v1857 = vrcp.pop %v1856
  %v1858 = vmul.f32 1.0, %v1857
  %v1859 = vtanh.pop %v1852
  %v1860 = vmul.f32 %v1858, %v1767
  %1862 = vrot.lane.b32.xlu0 %v1859, 112
  %v1863 = vpop.permute.xlu0 %1862
  %v1865 = vmul.f32 %v1858, %v1863
  %1867 = vrot.lane.b32.xlu0 %v1865, 8
  %v1868 = vpop.permute.xlu0 %1867
  %v1870 = vadd.f32 %v1860, %v1868
  %v1871 = vtanh.pop %v1870
  %1873 = vrot.lane.b32.xlu0 %v1871, 16
  %v1874 = vpop.permute.xlu0 %1873
  %v1876 = vmul.f32 %v1858, %v1874
  %1878 = vrot.lane.b32.xlu0 %v1876, 104
  %v1879 = vpop.permute.xlu0 %1878
  %1881 = vst.msk [vmem:[#allocation2 + $0x30] sm:$0xff] %vm41, %v1879
  %v1882 = vld [vmem:[#allocation3 + $0x38] sm:$0xff]
  %v1883 = vsel %vm41, %v1879, 0
  %1885 = vmatprep.subr.mxu0 0.0
  %1886 = vmatpush1.msra.mxu0 %v1162
  %1887 = vmatprep.subr.mxu0 0.0
  %1888 = vmatpush1.msra.mxu0 0.0
  %1889 = vmatprep.subr.mxu0 0.0
  %1890 = vmatpush1.msra.mxu0 0.0
  %1891 = vmatprep.subr.mxu0 0.0
  %1892 = vmatpush1.msra.mxu0 0.0
  %1893 = vmatprep.subr.mxu0 0.0
  %1894 = vmatpush1.msra.mxu0 0.0
  %1895 = vmatprep.subr.mxu0 0.0
  %1896 = vmatpush1.msra.mxu0 0.0
  %1897 = vmatprep.subr.mxu0 0.0
  %1898 = vmatpush1.msra.mxu0 0.0
  %1899 = vmatprep.subr.mxu0 0.0
  %1900 = vmatpush1.msra.mxu0 0.0
  %1901 = vmatprep.subr.mxu0 0.0
  %1902 = vmatpush1.msra.mxu0 0.0
  %1903 = vmatprep.subr.mxu0 0.0
  %1904 = vmatpush1.msra.mxu0 0.0
  %1905 = vmatprep.subr.mxu0 0.0
  %1906 = vmatpush1.msra.mxu0 0.0
  %1907 = vmatprep.subr.mxu0 0.0
  %1908 = vmatpush1.msra.mxu0 0.0
  %1909 = vmatprep.subr.mxu0 0.0
  %1910 = vmatpush1.msra.mxu0 0.0
  %1911 = vmatprep.subr.mxu0 0.0
  %1912 = vmatpush1.msra.mxu0 0.0
  %1913 = vmatprep.subr.mxu0 0.0
  %1914 = vmatpush1.msra.mxu0 0.0
  %1915 = vmatprep.subr.mxu0 0.0
  %1916 = vmatpush1.msra.mxu0 0.0
  %1917 = vmatprep.subr.mxu0 0.0
  %1918 = vmatpush1.msra.mxu0 0.0
  %1919 = vmatprep.subr.mxu0 0.0
  %1920 = vmatpush1.msra.mxu0 0.0
  %1921 = vmatprep.subr.mxu0 0.0
  %1922 = vmatpush1.msra.mxu0 0.0
  %1923 = vmatprep.subr.mxu0 0.0
  %1924 = vmatpush1.msra.mxu0 0.0
  %1925 = vmatprep.subr.mxu0 0.0
  %1926 = vmatpush1.msra.mxu0 0.0
  %1927 = vmatprep.subr.mxu0 0.0
  %1928 = vmatpush1.msra.mxu0 0.0
  %1929 = vmatprep.subr.mxu0 0.0
  %1930 = vmatpush1.msra.mxu0 0.0
  %1931 = vmatprep.subr.mxu0 0.0
  %1932 = vmatpush1.msra.mxu0 0.0
  %1933 = vmatprep.subr.mxu0 0.0
  %1934 = vmatpush1.msra.mxu0 0.0
  %1935 = vmatprep.subr.mxu0 0.0
  %1936 = vmatpush1.msra.mxu0 0.0
  %1937 = vmatprep.subr.mxu0 0.0
  %1938 = vmatpush1.msra.mxu0 0.0
  %1939 = vmatprep.subr.mxu0 0.0
  %1940 = vmatpush1.msra.mxu0 0.0
  %1941 = vmatprep.subr.mxu0 0.0
  %1942 = vmatpush1.msra.mxu0 0.0
  %1943 = vmatprep.subr.mxu0 0.0
  %1944 = vmatpush1.msra.mxu0 0.0
  %1945 = vmatprep.subr.mxu0 0.0
  %1946 = vmatpush1.msra.mxu0 0.0
  %1947 = vmatprep.subr.mxu0 0.0
  %1948 = vmatpush1.msra.mxu0 0.0
  %1949 = vmatprep.mubr.f32.mxu0 0.0
  %1950 = vmatmul.mubr.f32.gmra.mrb[0].mxu0 %v1883
  %v1951 = vpop.f32.mrb[0].mxu0
  %v1952 = vadd.f32 0.0, %v1951
  %v1953 = vpop.f32.mrb[0].mxu0
  %1954 = vdwg.mxu0
  %v1955 = vadd.f32 %v1882, %v1952
  %v1956 = vxor.u32 %v1955, 2147483648
  %v1957 = vmul.f32 %v1956, 1.442695
  %v1958 = vpow.pop %v1957
  %v1959 = vadd.f32 %v1958, 1.0
  %v1960 = vrcp.pop %v1959
  %v1961 = vmul.f32 1.0, %v1960
  %v1962 = vtanh.pop %v1955
  %v1963 = vmul.f32 %v1961, %v1870
  %1965 = vrot.lane.b32.xlu0 %v1962, 112
  %v1966 = vpop.permute.xlu0 %1965
  %v1968 = vmul.f32 %v1961, %v1966
  %1970 = vrot.lane.b32.xlu0 %v1968, 8
  %v1971 = vpop.permute.xlu0 %1970
  %v1973 = vadd.f32 %v1963, %v1971
  %v1974 = vtanh.pop %v1973
  %1976 = vrot.lane.b32.xlu0 %v1974, 16
  %v1977 = vpop.permute.xlu0 %1976
  %v1979 = vmul.f32 %v1961, %v1977
  %1981 = vrot.lane.b32.xlu0 %v1979, 104
  %v1982 = vpop.permute.xlu0 %1981
  %1984 = vst.msk [vmem:[#allocation2 + $0x38] sm:$0xff] %vm41, %v1982
  %v1985 = vld [vmem:[#allocation2] sm:$0xff]
  %v1986 = vld [vmem:[#allocation2 + $0x8] sm:$0xff]
  %v1987 = vld [vmem:[#allocation2 + $0x10] sm:$0xff]
  %v1988 = vld [vmem:[#allocation2 + $0x18] sm:$0xff]
  %v1989 = vld [vmem:[#allocation2 + $0x20] sm:$0xff]
  %v1990 = vld [vmem:[#allocation2 + $0x28] sm:$0xff]
  %v1991 = vld [vmem:[#allocation2 + $0x30] sm:$0xff]
  %v1992 = vld [vmem:[#allocation2 + $0x38] sm:$0xff]
  %s1993 = scalar_lea.vmem %s1, 16
  %v1994 = vld [vmem:[%s1993] sm:$0xff]
  %s1995 = scalar_lea.vmem %s3, 2
  %v1996 = vld [vmem:[%s1995] sm:$0x1]
  %v1998 = vlaneseq
  %v1999 = vshrl.u32 %v1998, 7
  %v2000 = vsub.s32 0, %v1999
  %v2001 = vrot.slane %v1996, %v2000
  %v2004 = vsel %vm41, %v1985, 0
  %v2007 = vsel %vm41, %v1986, 0
  %v2010 = vsel %vm41, %v1987, 0
  %v2013 = vsel %vm41, %v1988, 0
  %v2016 = vsel %vm41, %v1989, 0
  %v2019 = vsel %vm41, %v1990, 0
  %v2022 = vsel %vm41, %v1991, 0
  %v2025 = vsel %vm41, %v1992, 0
  %2027 = vmatprep.subr.mxu0 0.0
  %2028 = vmatpush1.msra.mxu0 %v1994
  %2029 = vmatprep.subr.mxu0 0.0
  %2030 = vmatpush1.msra.mxu0 0.0
  %2031 = vmatprep.subr.mxu0 0.0
  %2032 = vmatpush1.msra.mxu0 0.0
  %2033 = vmatprep.subr.mxu0 0.0
  %2034 = vmatpush1.msra.mxu0 0.0
  %2035 = vmatprep.subr.mxu0 0.0
  %2036 = vmatpush1.msra.mxu0 0.0
  %2037 = vmatprep.subr.mxu0 0.0
  %2038 = vmatpush1.msra.mxu0 0.0
  %2039 = vmatprep.subr.mxu0 0.0
  %2040 = vmatpush1.msra.mxu0 0.0
  %2041 = vmatprep.subr.mxu0 0.0
  %2042 = vmatpush1.msra.mxu0 0.0
  %2043 = vmatprep.subr.mxu0 0.0
  %2044 = vmatpush1.msra.mxu0 0.0
  %2045 = vmatprep.subr.mxu0 0.0
  %2046 = vmatpush1.msra.mxu0 0.0
  %2047 = vmatprep.subr.mxu0 0.0
  %2048 = vmatpush1.msra.mxu0 0.0
  %2049 = vmatprep.subr.mxu0 0.0
  %2050 = vmatpush1.msra.mxu0 0.0
  %2051 = vmatprep.subr.mxu0 0.0
  %2052 = vmatpush1.msra.mxu0 0.0
  %2053 = vmatprep.subr.mxu0 0.0
  %2054 = vmatpush1.msra.mxu0 0.0
  %2055 = vmatprep.subr.mxu0 0.0
  %2056 = vmatpush1.msra.mxu0 0.0
  %2057 = vmatprep.subr.mxu0 0.0
  %2058 = vmatpush1.msra.mxu0 0.0
  %2059 = vmatprep.subr.mxu0 0.0
  %2060 = vmatpush1.msra.mxu0 0.0
  %2061 = vmatprep.subr.mxu0 0.0
  %2062 = vmatpush1.msra.mxu0 0.0
  %2063 = vmatprep.subr.mxu0 0.0
  %2064 = vmatpush1.msra.mxu0 0.0
  %2065 = vmatprep.subr.mxu0 0.0
  %2066 = vmatpush1.msra.mxu0 0.0
  %2067 = vmatprep.subr.mxu0 0.0
  %2068 = vmatpush1.msra.mxu0 0.0
  %2069 = vmatprep.subr.mxu0 0.0
  %2070 = vmatpush1.msra.mxu0 0.0
  %2071 = vmatprep.subr.mxu0 0.0
  %2072 = vmatpush1.msra.mxu0 0.0
  %2073 = vmatprep.subr.mxu0 0.0
  %2074 = vmatpush1.msra.mxu0 0.0
  %2075 = vmatprep.subr.mxu0 0.0
  %2076 = vmatpush1.msra.mxu0 0.0
  %2077 = vmatprep.subr.mxu0 0.0
  %2078 = vmatpush1.msra.mxu0 0.0
  %2079 = vmatprep.subr.mxu0 0.0
  %2080 = vmatpush1.msra.mxu0 0.0
  %2081 = vmatprep.subr.mxu0 0.0
  %2082 = vmatpush1.msra.mxu0 0.0
  %2083 = vmatprep.subr.mxu0 0.0
  %2084 = vmatpush1.msra.mxu0 0.0
  %2085 = vmatprep.subr.mxu0 0.0
  %2086 = vmatpush1.msra.mxu0 0.0
  %2087 = vmatprep.subr.mxu0 0.0
  %2088 = vmatpush1.msra.mxu0 0.0
  %2089 = vmatprep.subr.mxu0 0.0
  %2090 = vmatpush1.msra.mxu0 0.0
  %2091 = vmatprep.mubr.f32.mxu0 0.0
  %2092 = vmatmul.mubr.f32.gmra.mrb[0].mxu0 %v2004
  %v2093 = vpop.f32.mrb[0].mxu0
  %v2094 = vadd.f32 %v2001, %v2093
  %v2095 = vpop.f32.mrb[0].mxu0
  %2096 = vmatprep.mubr.f32.mxu0 0.0
  %2097 = vmatmul.mubr.f32.gmra.mrb[0].mxu0 %v2007
  %v2098 = vpop.f32.mrb[0].mxu0
  %v2099 = vadd.f32 %v2001, %v2098
  %v2100 = vpop.f32.mrb[0].mxu0
  %2101 = vmatprep.mubr.f32.mxu0 0.0
  %2102 = vmatmul.mubr.f32.gmra.mrb[0].mxu0 %v2010
  %v2103 = vpop.f32.mrb[0].mxu0
  %v2104 = vadd.f32 %v2001, %v2103
  %v2105 = vpop.f32.mrb[0].mxu0
  %2106 = vmatprep.mubr.f32.mxu0 0.0
  %2107 = vmatmul.mubr.f32.gmra.mrb[0].mxu0 %v2013
  %v2108 = vpop.f32.mrb[0].mxu0
  %v2109 = vadd.f32 %v2001, %v2108
  %v2110 = vpop.f32.mrb[0].mxu0
  %2111 = vmatprep.mubr.f32.mxu0 0.0
  %2112 = vmatmul.mubr.f32.gmra.mrb[0].mxu0 %v2016
  %v2113 = vpop.f32.mrb[0].mxu0
  %v2114 = vadd.f32 %v2001, %v2113
  %v2115 = vpop.f32.mrb[0].mxu0
  %2116 = vmatprep.mubr.f32.mxu0 0.0
  %2117 = vmatmul.mubr.f32.gmra.mrb[0].mxu0 %v2019
  %v2118 = vpop.f32.mrb[0].mxu0
  %v2119 = vadd.f32 %v2001, %v2118
  %v2120 = vpop.f32.mrb[0].mxu0
  %2121 = vmatprep.mubr.f32.mxu0 0.0
  %2122 = vmatmul.mubr.f32.gmra.mrb[0].mxu0 %v2022
  %v2123 = vpop.f32.mrb[0].mxu0
  %v2124 = vadd.f32 %v2001, %v2123
  %v2125 = vpop.f32.mrb[0].mxu0
  %2126 = vmatprep.mubr.f32.mxu0 0.0
  %2127 = vmatmul.mubr.f32.gmra.mrb[0].mxu0 %v2025
  %v2128 = vpop.f32.mrb[0].mxu0
  %v2129 = vadd.f32 %v2001, %v2128
  %v2130 = vpop.f32.mrb[0].mxu0
  %2131 = vdwg.mxu0
  %2132 = vst.msk [vmem:[#allocation3] sm:$0xff] %vm171, %v2094
  %2133 = vst.msk [vmem:[#allocation3 + $0x8] sm:$0xff] %vm171, %v2099
  %2134 = vst.msk [vmem:[#allocation3 + $0x10] sm:$0xff] %vm171, %v2104
  %2135 = vst.msk [vmem:[#allocation3 + $0x18] sm:$0xff] %vm171, %v2109
  %2136 = vst.msk [vmem:[#allocation3 + $0x20] sm:$0xff] %vm171, %v2114
  %2137 = vst.msk [vmem:[#allocation3 + $0x28] sm:$0xff] %vm171, %v2119
  %2138 = vst.msk [vmem:[#allocation3 + $0x30] sm:$0xff] %vm171, %v2124
  %2139 = vst.msk [vmem:[#allocation3 + $0x38] sm:$0xff] %vm171, %v2129
  %s2140 = scalar_lea.vmem %s2, 16
  %v2141 = vld [vmem:[%s2140] sm:$0xff]
  %v2142 = vld [vmem:[#allocation3] sm:$0xff]
  %2143 = vmatprep.subr.mxu0 0.0
  %2144 = vmatpush1.msra.mxu0 %v2141
  %2145 = vmatprep.subr.mxu0 0.0
  %2146 = vmatpush1.msra.mxu0 0.0
  %2147 = vmatprep.subr.mxu0 0.0
  %2148 = vmatpush1.msra.mxu0 0.0
  %2149 = vmatprep.subr.mxu0 0.0
  %2150 = vmatpush1.msra.mxu0 0.0
  %2151 = vmatprep.subr.mxu0 0.0
  %2152 = vmatpush1.msra.mxu0 0.0
  %2153 = vmatprep.subr.mxu0 0.0
  %2154 = vmatpush1.msra.mxu0 0.0
  %2155 = vmatprep.subr.mxu0 0.0
  %2156 = vmatpush1.msra.mxu0 0.0
  %2157 = vmatprep.subr.mxu0 0.0
  %2158 = vmatpush1.msra.mxu0 0.0
  %2159 = vmatprep.subr.mxu0 0.0
  %2160 = vmatpush1.msra.mxu0 0.0
  %2161 = vmatprep.subr.mxu0 0.0
  %2162 = vmatpush1.msra.mxu0 0.0
  %2163 = vmatprep.subr.mxu0 0.0
  %2164 = vmatpush1.msra.mxu0 0.0
  %2165 = vmatprep.subr.mxu0 0.0
  %2166 = vmatpush1.msra.mxu0 0.0
  %2167 = vmatprep.subr.mxu0 0.0
  %2168 = vmatpush1.msra.mxu0 0.0
  %2169 = vmatprep.subr.mxu0 0.0
  %2170 = vmatpush1.msra.mxu0 0.0
  %2171 = vmatprep.subr.mxu0 0.0
  %2172 = vmatpush1.msra.mxu0 0.0
  %2173 = vmatprep.subr.mxu0 0.0
  %2174 = vmatpush1.msra.mxu0 0.0
  %2175 = vmatprep.subr.mxu0 0.0
  %2176 = vmatpush1.msra.mxu0 0.0
  %2177 = vmatprep.subr.mxu0 0.0
  %2178 = vmatpush1.msra.mxu0 0.0
  %2179 = vmatprep.subr.mxu0 0.0
  %2180 = vmatpush1.msra.mxu0 0.0
  %2181 = vmatprep.subr.mxu0 0.0
  %2182 = vmatpush1.msra.mxu0 0.0
  %2183 = vmatprep.subr.mxu0 0.0
  %2184 = vmatpush1.msra.mxu0 0.0
  %2185 = vmatprep.subr.mxu0 0.0
  %2186 = vmatpush1.msra.mxu0 0.0
  %2187 = vmatprep.subr.mxu0 0.0
  %2188 = vmatpush1.msra.mxu0 0.0
  %2189 = vmatprep.subr.mxu0 0.0
  %2190 = vmatpush1.msra.mxu0 0.0
  %2191 = vmatprep.subr.mxu0 0.0
  %2192 = vmatpush1.msra.mxu0 0.0
  %2193 = vmatprep.subr.mxu0 0.0
  %2194 = vmatpush1.msra.mxu0 0.0
  %2195 = vmatprep.subr.mxu0 0.0
  %2196 = vmatpush1.msra.mxu0 0.0
  %2197 = vmatprep.subr.mxu0 0.0
  %2198 = vmatpush1.msra.mxu0 0.0
  %2199 = vmatprep.subr.mxu0 0.0
  %2200 = vmatpush1.msra.mxu0 0.0
  %2201 = vmatprep.subr.mxu0 0.0
  %2202 = vmatpush1.msra.mxu0 0.0
  %2203 = vmatprep.subr.mxu0 0.0
  %2204 = vmatpush1.msra.mxu0 0.0
  %2205 = vmatprep.subr.mxu0 0.0
  %2206 = vmatpush1.msra.mxu0 0.0
  %2207 = vmatprep.mubr.f32.mxu0 0.0
  %2208 = vmatmul.mubr.f32.gmra.mrb[0].mxu0 %v183
  %v2209 = vpop.f32.mrb[0].mxu0
  %v2210 = vadd.f32 0.0, %v2209
  %v2211 = vpop.f32.mrb[0].mxu0
  %2212 = vdwg.mxu0
  %v2213 = vadd.f32 %v2142, %v2210
  %v2214 = vxor.u32 %v2213, 2147483648
  %v2215 = vmul.f32 %v2214, 1.442695
  %v2216 = vpow.pop %v2215
  %v2217 = vadd.f32 %v2216, 1.0
  %v2218 = vrcp.pop %v2217
  %v2219 = vmul.f32 1.0, %v2218
  %v2220 = vtanh.pop %v2213
  %v2221 = vmul.f32 %v2219, 0.0
  %2223 = vrot.lane.b32.xlu0 %v2220, 112
  %v2224 = vpop.permute.xlu0 %2223
  %v2226 = vmul.f32 %v2219, %v2224
  %2228 = vrot.lane.b32.xlu0 %v2226, 8
  %v2229 = vpop.permute.xlu0 %2228
  %v2231 = vadd.f32 %v2221, %v2229
  %v2232 = vtanh.pop %v2231
  %2234 = vrot.lane.b32.xlu0 %v2232, 16
  %v2235 = vpop.permute.xlu0 %2234
  %v2237 = vmul.f32 %v2219, %v2235
  %v2238 = vld [vmem:[#allocation3 + $0x8] sm:$0xff]
  %2240 = vrot.lane.b32.xlu0 %v2237, 104
  %v2241 = vpop.permute.xlu0 %2240
  %v2242 = vsel %vm41, %v2241, 0
  %2244 = vmatprep.subr.mxu0 0.0
  %2245 = vmatpush1.msra.mxu0 %v2141
  %2246 = vmatprep.subr.mxu0 0.0
  %2247 = vmatpush1.msra.mxu0 0.0
  %2248 = vmatprep.subr.mxu0 0.0
  %2249 = vmatpush1.msra.mxu0 0.0
  %2250 = vmatprep.subr.mxu0 0.0
  %2251 = vmatpush1.msra.mxu0 0.0
  %2252 = vmatprep.subr.mxu0 0.0
  %2253 = vmatpush1.msra.mxu0 0.0
  %2254 = vmatprep.subr.mxu0 0.0
  %2255 = vmatpush1.msra.mxu0 0.0
  %2256 = vmatprep.subr.mxu0 0.0
  %2257 = vmatpush1.msra.mxu0 0.0
  %2258 = vmatprep.subr.mxu0 0.0
  %2259 = vmatpush1.msra.mxu0 0.0
  %2260 = vmatprep.subr.mxu0 0.0
  %2261 = vmatpush1.msra.mxu0 0.0
  %2262 = vmatprep.subr.mxu0 0.0
  %2263 = vmatpush1.msra.mxu0 0.0
  %2264 = vmatprep.subr.mxu0 0.0
  %2265 = vmatpush1.msra.mxu0 0.0
  %2266 = vmatprep.subr.mxu0 0.0
  %2267 = vmatpush1.msra.mxu0 0.0
  %2268 = vmatprep.subr.mxu0 0.0
  %2269 = vmatpush1.msra.mxu0 0.0
  %2270 = vmatprep.subr.mxu0 0.0
  %2271 = vmatpush1.msra.mxu0 0.0
  %2272 = vmatprep.subr.mxu0 0.0
  %2273 = vmatpush1.msra.mxu0 0.0
  %2274 = vmatprep.subr.mxu0 0.0
  %2275 = vmatpush1.msra.mxu0 0.0
  %2276 = vmatprep.subr.mxu0 0.0
  %2277 = vmatpush1.msra.mxu0 0.0
  %2278 = vmatprep.subr.mxu0 0.0
  %2279 = vmatpush1.msra.mxu0 0.0
  %2280 = vmatprep.subr.mxu0 0.0
  %2281 = vmatpush1.msra.mxu0 0.0
  %2282 = vmatprep.subr.mxu0 0.0
  %2283 = vmatpush1.msra.mxu0 0.0
  %2284 = vmatprep.subr.mxu0 0.0
  %2285 = vmatpush1.msra.mxu0 0.0
  %2286 = vmatprep.subr.mxu0 0.0
  %2287 = vmatpush1.msra.mxu0 0.0
  %2288 = vmatprep.subr.mxu0 0.0
  %2289 = vmatpush1.msra.mxu0 0.0
  %2290 = vmatprep.subr.mxu0 0.0
  %2291 = vmatpush1.msra.mxu0 0.0
  %2292 = vmatprep.subr.mxu0 0.0
  %2293 = vmatpush1.msra.mxu0 0.0
  %2294 = vmatprep.subr.mxu0 0.0
  %2295 = vmatpush1.msra.mxu0 0.0
  %2296 = vmatprep.subr.mxu0 0.0
  %2297 = vmatpush1.msra.mxu0 0.0
  %2298 = vmatprep.subr.mxu0 0.0
  %2299 = vmatpush1.msra.mxu0 0.0
  %2300 = vmatprep.subr.mxu0 0.0
  %2301 = vmatpush1.msra.mxu0 0.0
  %2302 = vmatprep.subr.mxu0 0.0
  %2303 = vmatpush1.msra.mxu0 0.0
  %2304 = vmatprep.subr.mxu0 0.0
  %2305 = vmatpush1.msra.mxu0 0.0
  %2306 = vmatprep.subr.mxu0 0.0
  %2307 = vmatpush1.msra.mxu0 0.0
  %2308 = vmatprep.mubr.f32.mxu0 0.0
  %2309 = vmatmul.mubr.f32.gmra.mrb[0].mxu0 %v2242
  %v2310 = vpop.f32.mrb[0].mxu0
  %v2311 = vadd.f32 0.0, %v2310
  %v2312 = vpop.f32.mrb[0].mxu0
  %2313 = vdwg.mxu0
  %v2314 = vadd.f32 %v2238, %v2311
  %v2315 = vxor.u32 %v2314, 2147483648
  %v2316 = vmul.f32 %v2315, 1.442695
  %v2317 = vpow.pop %v2316
  %v2318 = vadd.f32 %v2317, 1.0
  %v2319 = vrcp.pop %v2318
  %v2320 = vmul.f32 1.0, %v2319
  %v2321 = vtanh.pop %v2314
  %v2322 = vmul.f32 %v2320, %v2231
  %2324 = vrot.lane.b32.xlu0 %v2321, 112
  %v2325 = vpop.permute.xlu0 %2324
  %v2327 = vmul.f32 %v2320, %v2325
  %2329 = vrot.lane.b32.xlu0 %v2327, 8
  %v2330 = vpop.permute.xlu0 %2329
  %v2332 = vadd.f32 %v2322, %v2330
  %v2333 = vtanh.pop %v2332
  %2335 = vrot.lane.b32.xlu0 %v2333, 16
  %v2336 = vpop.permute.xlu0 %2335
  %v2338 = vmul.f32 %v2320, %v2336
  %v2339 = vld [vmem:[#allocation3 + $0x10] sm:$0xff]
  %2341 = vrot.lane.b32.xlu0 %v2338, 104
  %v2342 = vpop.permute.xlu0 %2341
  %v2343 = vsel %vm41, %v2342, 0
  %2345 = vmatprep.subr.mxu0 0.0
  %2346 = vmatpush1.msra.mxu0 %v2141
  %2347 = vmatprep.subr.mxu0 0.0
  %2348 = vmatpush1.msra.mxu0 0.0
  %2349 = vmatprep.subr.mxu0 0.0
  %2350 = vmatpush1.msra.mxu0 0.0
  %2351 = vmatprep.subr.mxu0 0.0
  %2352 = vmatpush1.msra.mxu0 0.0
  %2353 = vmatprep.subr.mxu0 0.0
  %2354 = vmatpush1.msra.mxu0 0.0
  %2355 = vmatprep.subr.mxu0 0.0
  %2356 = vmatpush1.msra.mxu0 0.0
  %2357 = vmatprep.subr.mxu0 0.0
  %2358 = vmatpush1.msra.mxu0 0.0
  %2359 = vmatprep.subr.mxu0 0.0
  %2360 = vmatpush1.msra.mxu0 0.0
  %2361 = vmatprep.subr.mxu0 0.0
  %2362 = vmatpush1.msra.mxu0 0.0
  %2363 = vmatprep.subr.mxu0 0.0
  %2364 = vmatpush1.msra.mxu0 0.0
  %2365 = vmatprep.subr.mxu0 0.0
  %2366 = vmatpush1.msra.mxu0 0.0
  %2367 = vmatprep.subr.mxu0 0.0
  %2368 = vmatpush1.msra.mxu0 0.0
  %2369 = vmatprep.subr.mxu0 0.0
  %2370 = vmatpush1.msra.mxu0 0.0
  %2371 = vmatprep.subr.mxu0 0.0
  %2372 = vmatpush1.msra.mxu0 0.0
  %2373 = vmatprep.subr.mxu0 0.0
  %2374 = vmatpush1.msra.mxu0 0.0
  %2375 = vmatprep.subr.mxu0 0.0
  %2376 = vmatpush1.msra.mxu0 0.0
  %2377 = vmatprep.subr.mxu0 0.0
  %2378 = vmatpush1.msra.mxu0 0.0
  %2379 = vmatprep.subr.mxu0 0.0
  %2380 = vmatpush1.msra.mxu0 0.0
  %2381 = vmatprep.subr.mxu0 0.0
  %2382 = vmatpush1.msra.mxu0 0.0
  %2383 = vmatprep.subr.mxu0 0.0
  %2384 = vmatpush1.msra.mxu0 0.0
  %2385 = vmatprep.subr.mxu0 0.0
  %2386 = vmatpush1.msra.mxu0 0.0
  %2387 = vmatprep.subr.mxu0 0.0
  %2388 = vmatpush1.msra.mxu0 0.0
  %2389 = vmatprep.subr.mxu0 0.0
  %2390 = vmatpush1.msra.mxu0 0.0
  %2391 = vmatprep.subr.mxu0 0.0
  %2392 = vmatpush1.msra.mxu0 0.0
  %2393 = vmatprep.subr.mxu0 0.0
  %2394 = vmatpush1.msra.mxu0 0.0
  %2395 = vmatprep.subr.mxu0 0.0
  %2396 = vmatpush1.msra.mxu0 0.0
  %2397 = vmatprep.subr.mxu0 0.0
  %2398 = vmatpush1.msra.mxu0 0.0
  %2399 = vmatprep.subr.mxu0 0.0
  %2400 = vmatpush1.msra.mxu0 0.0
  %2401 = vmatprep.subr.mxu0 0.0
  %2402 = vmatpush1.msra.mxu0 0.0
  %2403 = vmatprep.subr.mxu0 0.0
  %2404 = vmatpush1.msra.mxu0 0.0
  %2405 = vmatprep.subr.mxu0 0.0
  %2406 = vmatpush1.msra.mxu0 0.0
  %2407 = vmatprep.subr.mxu0 0.0
  %2408 = vmatpush1.msra.mxu0 0.0
  %2409 = vmatprep.mubr.f32.mxu0 0.0
  %2410 = vmatmul.mubr.f32.gmra.mrb[0].mxu0 %v2343
  %v2411 = vpop.f32.mrb[0].mxu0
  %v2412 = vadd.f32 0.0, %v2411
  %v2413 = vpop.f32.mrb[0].mxu0
  %2414 = vdwg.mxu0
  %v2415 = vadd.f32 %v2339, %v2412
  %v2416 = vxor.u32 %v2415, 2147483648
  %v2417 = vmul.f32 %v2416, 1.442695
  %v2418 = vpow.pop %v2417
  %v2419 = vadd.f32 %v2418, 1.0
  %v2420 = vrcp.pop %v2419
  %v2421 = vmul.f32 1.0, %v2420
  %v2422 = vtanh.pop %v2415
  %v2423 = vmul.f32 %v2421, %v2332
  %2425 = vrot.lane.b32.xlu0 %v2422, 112
  %v2426 = vpop.permute.xlu0 %2425
  %v2428 = vmul.f32 %v2421, %v2426
  %2430 = vrot.lane.b32.xlu0 %v2428, 8
  %v2431 = vpop.permute.xlu0 %2430
  %v2433 = vadd.f32 %v2423, %v2431
  %v2434 = vtanh.pop %v2433
  %2436 = vrot.lane.b32.xlu0 %v2434, 16
  %v2437 = vpop.permute.xlu0 %2436
  %v2439 = vmul.f32 %v2421, %v2437
  %v2440 = vld [vmem:[#allocation3 + $0x18] sm:$0xff]
  %2442 = vrot.lane.b32.xlu0 %v2439, 104
  %v2443 = vpop.permute.xlu0 %2442
  %v2444 = vsel %vm41, %v2443, 0
  %2446 = vmatprep.subr.mxu0 0.0
  %2447 = vmatpush1.msra.mxu0 %v2141
  %2448 = vmatprep.subr.mxu0 0.0
  %2449 = vmatpush1.msra.mxu0 0.0
  %2450 = vmatprep.subr.mxu0 0.0
  %2451 = vmatpush1.msra.mxu0 0.0
  %2452 = vmatprep.subr.mxu0 0.0
  %2453 = vmatpush1.msra.mxu0 0.0
  %2454 = vmatprep.subr.mxu0 0.0
  %2455 = vmatpush1.msra.mxu0 0.0
  %2456 = vmatprep.subr.mxu0 0.0
  %2457 = vmatpush1.msra.mxu0 0.0
  %2458 = vmatprep.subr.mxu0 0.0
  %2459 = vmatpush1.msra.mxu0 0.0
  %2460 = vmatprep.subr.mxu0 0.0
  %2461 = vmatpush1.msra.mxu0 0.0
  %2462 = vmatprep.subr.mxu0 0.0
  %2463 = vmatpush1.msra.mxu0 0.0
  %2464 = vmatprep.subr.mxu0 0.0
  %2465 = vmatpush1.msra.mxu0 0.0
  %2466 = vmatprep.subr.mxu0 0.0
  %2467 = vmatpush1.msra.mxu0 0.0
  %2468 = vmatprep.subr.mxu0 0.0
  %2469 = vmatpush1.msra.mxu0 0.0
  %2470 = vmatprep.subr.mxu0 0.0
  %2471 = vmatpush1.msra.mxu0 0.0
  %2472 = vmatprep.subr.mxu0 0.0
  %2473 = vmatpush1.msra.mxu0 0.0
  %2474 = vmatprep.subr.mxu0 0.0
  %2475 = vmatpush1.msra.mxu0 0.0
  %2476 = vmatprep.subr.mxu0 0.0
  %2477 = vmatpush1.msra.mxu0 0.0
  %2478 = vmatprep.subr.mxu0 0.0
  %2479 = vmatpush1.msra.mxu0 0.0
  %2480 = vmatprep.subr.mxu0 0.0
  %2481 = vmatpush1.msra.mxu0 0.0
  %2482 = vmatprep.subr.mxu0 0.0
  %2483 = vmatpush1.msra.mxu0 0.0
  %2484 = vmatprep.subr.mxu0 0.0
  %2485 = vmatpush1.msra.mxu0 0.0
  %2486 = vmatprep.subr.mxu0 0.0
  %2487 = vmatpush1.msra.mxu0 0.0
  %2488 = vmatprep.subr.mxu0 0.0
  %2489 = vmatpush1.msra.mxu0 0.0
  %2490 = vmatprep.subr.mxu0 0.0
  %2491 = vmatpush1.msra.mxu0 0.0
  %2492 = vmatprep.subr.mxu0 0.0
  %2493 = vmatpush1.msra.mxu0 0.0
  %2494 = vmatprep.subr.mxu0 0.0
  %2495 = vmatpush1.msra.mxu0 0.0
  %2496 = vmatprep.subr.mxu0 0.0
  %2497 = vmatpush1.msra.mxu0 0.0
  %2498 = vmatprep.subr.mxu0 0.0
  %2499 = vmatpush1.msra.mxu0 0.0
  %2500 = vmatprep.subr.mxu0 0.0
  %2501 = vmatpush1.msra.mxu0 0.0
  %2502 = vmatprep.subr.mxu0 0.0
  %2503 = vmatpush1.msra.mxu0 0.0
  %2504 = vmatprep.subr.mxu0 0.0
  %2505 = vmatpush1.msra.mxu0 0.0
  %2506 = vmatprep.subr.mxu0 0.0
  %2507 = vmatpush1.msra.mxu0 0.0
  %2508 = vmatprep.subr.mxu0 0.0
  %2509 = vmatpush1.msra.mxu0 0.0
  %2510 = vmatprep.mubr.f32.mxu0 0.0
  %2511 = vmatmul.mubr.f32.gmra.mrb[0].mxu0 %v2444
  %v2512 = vpop.f32.mrb[0].mxu0
  %v2513 = vadd.f32 0.0, %v2512
  %v2514 = vpop.f32.mrb[0].mxu0
  %2515 = vdwg.mxu0
  %v2516 = vadd.f32 %v2440, %v2513
  %v2517 = vxor.u32 %v2516, 2147483648
  %v2518 = vmul.f32 %v2517, 1.442695
  %v2519 = vpow.pop %v2518
  %v2520 = vadd.f32 %v2519, 1.0
  %v2521 = vrcp.pop %v2520
  %v2522 = vmul.f32 1.0, %v2521
  %v2523 = vtanh.pop %v2516
  %v2524 = vmul.f32 %v2522, %v2433
  %2526 = vrot.lane.b32.xlu0 %v2523, 112
  %v2527 = vpop.permute.xlu0 %2526
  %v2529 = vmul.f32 %v2522, %v2527
  %2531 = vrot.lane.b32.xlu0 %v2529, 8
  %v2532 = vpop.permute.xlu0 %2531
  %v2534 = vadd.f32 %v2524, %v2532
  %v2535 = vtanh.pop %v2534
  %2537 = vrot.lane.b32.xlu0 %v2535, 16
  %v2538 = vpop.permute.xlu0 %2537
  %v2540 = vmul.f32 %v2522, %v2538
  %v2541 = vld [vmem:[#allocation3 + $0x20] sm:$0xff]
  %2543 = vrot.lane.b32.xlu0 %v2540, 104
  %v2544 = vpop.permute.xlu0 %2543
  %v2545 = vsel %vm41, %v2544, 0
  %2547 = vmatprep.subr.mxu0 0.0
  %2548 = vmatpush1.msra.mxu0 %v2141
  %2549 = vmatprep.subr.mxu0 0.0
  %2550 = vmatpush1.msra.mxu0 0.0
  %2551 = vmatprep.subr.mxu0 0.0
  %2552 = vmatpush1.msra.mxu0 0.0
  %2553 = vmatprep.subr.mxu0 0.0
  %2554 = vmatpush1.msra.mxu0 0.0
  %2555 = vmatprep.subr.mxu0 0.0
  %2556 = vmatpush1.msra.mxu0 0.0
  %2557 = vmatprep.subr.mxu0 0.0
  %2558 = vmatpush1.msra.mxu0 0.0
  %2559 = vmatprep.subr.mxu0 0.0
  %2560 = vmatpush1.msra.mxu0 0.0
  %2561 = vmatprep.subr.mxu0 0.0
  %2562 = vmatpush1.msra.mxu0 0.0
  %2563 = vmatprep.subr.mxu0 0.0
  %2564 = vmatpush1.msra.mxu0 0.0
  %2565 = vmatprep.subr.mxu0 0.0
  %2566 = vmatpush1.msra.mxu0 0.0
  %2567 = vmatprep.subr.mxu0 0.0
  %2568 = vmatpush1.msra.mxu0 0.0
  %2569 = vmatprep.subr.mxu0 0.0
  %2570 = vmatpush1.msra.mxu0 0.0
  %2571 = vmatprep.subr.mxu0 0.0
  %2572 = vmatpush1.msra.mxu0 0.0
  %2573 = vmatprep.subr.mxu0 0.0
  %2574 = vmatpush1.msra.mxu0 0.0
  %2575 = vmatprep.subr.mxu0 0.0
  %2576 = vmatpush1.msra.mxu0 0.0
  %2577 = vmatprep.subr.mxu0 0.0
  %2578 = vmatpush1.msra.mxu0 0.0
  %2579 = vmatprep.subr.mxu0 0.0
  %2580 = vmatpush1.msra.mxu0 0.0
  %2581 = vmatprep.subr.mxu0 0.0
  %2582 = vmatpush1.msra.mxu0 0.0
  %2583 = vmatprep.subr.mxu0 0.0
  %2584 = vmatpush1.msra.mxu0 0.0
  %2585 = vmatprep.subr.mxu0 0.0
  %2586 = vmatpush1.msra.mxu0 0.0
  %2587 = vmatprep.subr.mxu0 0.0
  %2588 = vmatpush1.msra.mxu0 0.0
  %2589 = vmatprep.subr.mxu0 0.0
  %2590 = vmatpush1.msra.mxu0 0.0
  %2591 = vmatprep.subr.mxu0 0.0
  %2592 = vmatpush1.msra.mxu0 0.0
  %2593 = vmatprep.subr.mxu0 0.0
  %2594 = vmatpush1.msra.mxu0 0.0
  %2595 = vmatprep.subr.mxu0 0.0
  %2596 = vmatpush1.msra.mxu0 0.0
  %2597 = vmatprep.subr.mxu0 0.0
  %2598 = vmatpush1.msra.mxu0 0.0
  %2599 = vmatprep.subr.mxu0 0.0
  %2600 = vmatpush1.msra.mxu0 0.0
  %2601 = vmatprep.subr.mxu0 0.0
  %2602 = vmatpush1.msra.mxu0 0.0
  %2603 = vmatprep.subr.mxu0 0.0
  %2604 = vmatpush1.msra.mxu0 0.0
  %2605 = vmatprep.subr.mxu0 0.0
  %2606 = vmatpush1.msra.mxu0 0.0
  %2607 = vmatprep.subr.mxu0 0.0
  %2608 = vmatpush1.msra.mxu0 0.0
  %2609 = vmatprep.subr.mxu0 0.0
  %2610 = vmatpush1.msra.mxu0 0.0
  %2611 = vmatprep.mubr.f32.mxu0 0.0
  %2612 = vmatmul.mubr.f32.gmra.mrb[0].mxu0 %v2545
  %v2613 = vpop.f32.mrb[0].mxu0
  %v2614 = vadd.f32 0.0, %v2613
  %v2615 = vpop.f32.mrb[0].mxu0
  %2616 = vdwg.mxu0
  %v2617 = vadd.f32 %v2541, %v2614
  %v2618 = vxor.u32 %v2617, 2147483648
  %v2619 = vmul.f32 %v2618, 1.442695
  %v2620 = vpow.pop %v2619
  %v2621 = vadd.f32 %v2620, 1.0
  %v2622 = vrcp.pop %v2621
  %v2623 = vmul.f32 1.0, %v2622
  %v2624 = vtanh.pop %v2617
  %v2625 = vmul.f32 %v2623, %v2534
  %2627 = vrot.lane.b32.xlu0 %v2624, 112
  %v2628 = vpop.permute.xlu0 %2627
  %v2630 = vmul.f32 %v2623, %v2628
  %2632 = vrot.lane.b32.xlu0 %v2630, 8
  %v2633 = vpop.permute.xlu0 %2632
  %v2635 = vadd.f32 %v2625, %v2633
  %v2636 = vtanh.pop %v2635
  %2638 = vrot.lane.b32.xlu0 %v2636, 16
  %v2639 = vpop.permute.xlu0 %2638
  %v2641 = vmul.f32 %v2623, %v2639
  %v2642 = vld [vmem:[#allocation3 + $0x28] sm:$0xff]
  %2644 = vrot.lane.b32.xlu0 %v2641, 104
  %v2645 = vpop.permute.xlu0 %2644
  %v2646 = vsel %vm41, %v2645, 0
  %2648 = vmatprep.subr.mxu0 0.0
  %2649 = vmatpush1.msra.mxu0 %v2141
  %2650 = vmatprep.subr.mxu0 0.0
  %2651 = vmatpush1.msra.mxu0 0.0
  %2652 = vmatprep.subr.mxu0 0.0
  %2653 = vmatpush1.msra.mxu0 0.0
  %2654 = vmatprep.subr.mxu0 0.0
  %2655 = vmatpush1.msra.mxu0 0.0
  %2656 = vmatprep.subr.mxu0 0.0
  %2657 = vmatpush1.msra.mxu0 0.0
  %2658 = vmatprep.subr.mxu0 0.0
  %2659 = vmatpush1.msra.mxu0 0.0
  %2660 = vmatprep.subr.mxu0 0.0
  %2661 = vmatpush1.msra.mxu0 0.0
  %2662 = vmatprep.subr.mxu0 0.0
  %2663 = vmatpush1.msra.mxu0 0.0
  %2664 = vmatprep.subr.mxu0 0.0
  %2665 = vmatpush1.msra.mxu0 0.0
  %2666 = vmatprep.subr.mxu0 0.0
  %2667 = vmatpush1.msra.mxu0 0.0
  %2668 = vmatprep.subr.mxu0 0.0
  %2669 = vmatpush1.msra.mxu0 0.0
  %2670 = vmatprep.subr.mxu0 0.0
  %2671 = vmatpush1.msra.mxu0 0.0
  %2672 = vmatprep.subr.mxu0 0.0
  %2673 = vmatpush1.msra.mxu0 0.0
  %2674 = vmatprep.subr.mxu0 0.0
  %2675 = vmatpush1.msra.mxu0 0.0
  %2676 = vmatprep.subr.mxu0 0.0
  %2677 = vmatpush1.msra.mxu0 0.0
  %2678 = vmatprep.subr.mxu0 0.0
  %2679 = vmatpush1.msra.mxu0 0.0
  %2680 = vmatprep.subr.mxu0 0.0
  %2681 = vmatpush1.msra.mxu0 0.0
  %2682 = vmatprep.subr.mxu0 0.0
  %2683 = vmatpush1.msra.mxu0 0.0
  %2684 = vmatprep.subr.mxu0 0.0
  %2685 = vmatpush1.msra.mxu0 0.0
  %2686 = vmatprep.subr.mxu0 0.0
  %2687 = vmatpush1.msra.mxu0 0.0
  %2688 = vmatprep.subr.mxu0 0.0
  %2689 = vmatpush1.msra.mxu0 0.0
  %2690 = vmatprep.subr.mxu0 0.0
  %2691 = vmatpush1.msra.mxu0 0.0
  %2692 = vmatprep.subr.mxu0 0.0
  %2693 = vmatpush1.msra.mxu0 0.0
  %2694 = vmatprep.subr.mxu0 0.0
  %2695 = vmatpush1.msra.mxu0 0.0
  %2696 = vmatprep.subr.mxu0 0.0
  %2697 = vmatpush1.msra.mxu0 0.0
  %2698 = vmatprep.subr.mxu0 0.0
  %2699 = vmatpush1.msra.mxu0 0.0
  %2700 = vmatprep.subr.mxu0 0.0
  %2701 = vmatpush1.msra.mxu0 0.0
  %2702 = vmatprep.subr.mxu0 0.0
  %2703 = vmatpush1.msra.mxu0 0.0
  %2704 = vmatprep.subr.mxu0 0.0
  %2705 = vmatpush1.msra.mxu0 0.0
  %2706 = vmatprep.subr.mxu0 0.0
  %2707 = vmatpush1.msra.mxu0 0.0
  %2708 = vmatprep.subr.mxu0 0.0
  %2709 = vmatpush1.msra.mxu0 0.0
  %2710 = vmatprep.subr.mxu0 0.0
  %2711 = vmatpush1.msra.mxu0 0.0
  %2712 = vmatprep.mubr.f32.mxu0 0.0
  %2713 = vmatmul.mubr.f32.gmra.mrb[0].mxu0 %v2646
  %v2714 = vpop.f32.mrb[0].mxu0
  %v2715 = vadd.f32 0.0, %v2714
  %v2716 = vpop.f32.mrb[0].mxu0
  %2717 = vdwg.mxu0
  %v2718 = vadd.f32 %v2642, %v2715
  %v2719 = vxor.u32 %v2718, 2147483648
  %v2720 = vmul.f32 %v2719, 1.442695
  %v2721 = vpow.pop %v2720
  %v2722 = vadd.f32 %v2721, 1.0
  %v2723 = vrcp.pop %v2722
  %v2724 = vmul.f32 1.0, %v2723
  %v2725 = vtanh.pop %v2718
  %v2726 = vmul.f32 %v2724, %v2635
  %2728 = vrot.lane.b32.xlu0 %v2725, 112
  %v2729 = vpop.permute.xlu0 %2728
  %v2731 = vmul.f32 %v2724, %v2729
  %2733 = vrot.lane.b32.xlu0 %v2731, 8
  %v2734 = vpop.permute.xlu0 %2733
  %v2736 = vadd.f32 %v2726, %v2734
  %v2737 = vtanh.pop %v2736
  %2739 = vrot.lane.b32.xlu0 %v2737, 16
  %v2740 = vpop.permute.xlu0 %2739
  %v2742 = vmul.f32 %v2724, %v2740
  %v2743 = vld [vmem:[#allocation3 + $0x30] sm:$0xff]
  %2745 = vrot.lane.b32.xlu0 %v2742, 104
  %v2746 = vpop.permute.xlu0 %2745
  %v2747 = vsel %vm41, %v2746, 0
  %2749 = vmatprep.subr.mxu0 0.0
  %2750 = vmatpush1.msra.mxu0 %v2141
  %2751 = vmatprep.subr.mxu0 0.0
  %2752 = vmatpush1.msra.mxu0 0.0
  %2753 = vmatprep.subr.mxu0 0.0
  %2754 = vmatpush1.msra.mxu0 0.0
  %2755 = vmatprep.subr.mxu0 0.0
  %2756 = vmatpush1.msra.mxu0 0.0
  %2757 = vmatprep.subr.mxu0 0.0
  %2758 = vmatpush1.msra.mxu0 0.0
  %2759 = vmatprep.subr.mxu0 0.0
  %2760 = vmatpush1.msra.mxu0 0.0
  %2761 = vmatprep.subr.mxu0 0.0
  %2762 = vmatpush1.msra.mxu0 0.0
  %2763 = vmatprep.subr.mxu0 0.0
  %2764 = vmatpush1.msra.mxu0 0.0
  %2765 = vmatprep.subr.mxu0 0.0
  %2766 = vmatpush1.msra.mxu0 0.0
  %2767 = vmatprep.subr.mxu0 0.0
  %2768 = vmatpush1.msra.mxu0 0.0
  %2769 = vmatprep.subr.mxu0 0.0
  %2770 = vmatpush1.msra.mxu0 0.0
  %2771 = vmatprep.subr.mxu0 0.0
  %2772 = vmatpush1.msra.mxu0 0.0
  %2773 = vmatprep.subr.mxu0 0.0
  %2774 = vmatpush1.msra.mxu0 0.0
  %2775 = vmatprep.subr.mxu0 0.0
  %2776 = vmatpush1.msra.mxu0 0.0
  %2777 = vmatprep.subr.mxu0 0.0
  %2778 = vmatpush1.msra.mxu0 0.0
  %2779 = vmatprep.subr.mxu0 0.0
  %2780 = vmatpush1.msra.mxu0 0.0
  %2781 = vmatprep.subr.mxu0 0.0
  %2782 = vmatpush1.msra.mxu0 0.0
  %2783 = vmatprep.subr.mxu0 0.0
  %2784 = vmatpush1.msra.mxu0 0.0
  %2785 = vmatprep.subr.mxu0 0.0
  %2786 = vmatpush1.msra.mxu0 0.0
  %2787 = vmatprep.subr.mxu0 0.0
  %2788 = vmatpush1.msra.mxu0 0.0
  %2789 = vmatprep.subr.mxu0 0.0
  %2790 = vmatpush1.msra.mxu0 0.0
  %2791 = vmatprep.subr.mxu0 0.0
  %2792 = vmatpush1.msra.mxu0 0.0
  %2793 = vmatprep.subr.mxu0 0.0
  %2794 = vmatpush1.msra.mxu0 0.0
  %2795 = vmatprep.subr.mxu0 0.0
  %2796 = vmatpush1.msra.mxu0 0.0
  %2797 = vmatprep.subr.mxu0 0.0
  %2798 = vmatpush1.msra.mxu0 0.0
  %2799 = vmatprep.subr.mxu0 0.0
  %2800 = vmatpush1.msra.mxu0 0.0
  %2801 = vmatprep.subr.mxu0 0.0
  %2802 = vmatpush1.msra.mxu0 0.0
  %2803 = vmatprep.subr.mxu0 0.0
  %2804 = vmatpush1.msra.mxu0 0.0
  %2805 = vmatprep.subr.mxu0 0.0
  %2806 = vmatpush1.msra.mxu0 0.0
  %2807 = vmatprep.subr.mxu0 0.0
  %2808 = vmatpush1.msra.mxu0 0.0
  %2809 = vmatprep.subr.mxu0 0.0
  %2810 = vmatpush1.msra.mxu0 0.0
  %2811 = vmatprep.subr.mxu0 0.0
  %2812 = vmatpush1.msra.mxu0 0.0
  %2813 = vmatprep.mubr.f32.mxu0 0.0
  %2814 = vmatmul.mubr.f32.gmra.mrb[0].mxu0 %v2747
  %v2815 = vpop.f32.mrb[0].mxu0
  %v2816 = vadd.f32 0.0, %v2815
  %v2817 = vpop.f32.mrb[0].mxu0
  %2818 = vdwg.mxu0
  %v2819 = vadd.f32 %v2743, %v2816
  %v2820 = vxor.u32 %v2819, 2147483648
  %v2821 = vmul.f32 %v2820, 1.442695
  %v2822 = vpow.pop %v2821
  %v2823 = vadd.f32 %v2822, 1.0
  %v2824 = vrcp.pop %v2823
  %v2825 = vmul.f32 1.0, %v2824
  %v2826 = vtanh.pop %v2819
  %v2827 = vmul.f32 %v2825, %v2736
  %2829 = vrot.lane.b32.xlu0 %v2826, 112
  %v2830 = vpop.permute.xlu0 %2829
  %v2832 = vmul.f32 %v2825, %v2830
  %2834 = vrot.lane.b32.xlu0 %v2832, 8
  %v2835 = vpop.permute.xlu0 %2834
  %v2837 = vadd.f32 %v2827, %v2835
  %v2838 = vtanh.pop %v2837
  %2840 = vrot.lane.b32.xlu0 %v2838, 16
  %v2841 = vpop.permute.xlu0 %2840
  %v2843 = vmul.f32 %v2825, %v2841
  %v2844 = vld [vmem:[#allocation3 + $0x38] sm:$0xff]
  %2846 = vrot.lane.b32.xlu0 %v2843, 104
  %v2847 = vpop.permute.xlu0 %2846
  %v2848 = vsel %vm41, %v2847, 0
  %2850 = vmatprep.subr.mxu0 0.0
  %2851 = vmatpush1.msra.mxu0 %v2141
  %2852 = vmatprep.subr.mxu0 0.0
  %2853 = vmatpush1.msra.mxu0 0.0
  %2854 = vmatprep.subr.mxu0 0.0
  %2855 = vmatpush1.msra.mxu0 0.0
  %2856 = vmatprep.subr.mxu0 0.0
  %2857 = vmatpush1.msra.mxu0 0.0
  %2858 = vmatprep.subr.mxu0 0.0
  %2859 = vmatpush1.msra.mxu0 0.0
  %2860 = vmatprep.subr.mxu0 0.0
  %2861 = vmatpush1.msra.mxu0 0.0
  %2862 = vmatprep.subr.mxu0 0.0
  %2863 = vmatpush1.msra.mxu0 0.0
  %2864 = vmatprep.subr.mxu0 0.0
  %2865 = vmatpush1.msra.mxu0 0.0
  %2866 = vmatprep.subr.mxu0 0.0
  %2867 = vmatpush1.msra.mxu0 0.0
  %2868 = vmatprep.subr.mxu0 0.0
  %2869 = vmatpush1.msra.mxu0 0.0
  %2870 = vmatprep.subr.mxu0 0.0
  %2871 = vmatpush1.msra.mxu0 0.0
  %2872 = vmatprep.subr.mxu0 0.0
  %2873 = vmatpush1.msra.mxu0 0.0
  %2874 = vmatprep.subr.mxu0 0.0
  %2875 = vmatpush1.msra.mxu0 0.0
  %2876 = vmatprep.subr.mxu0 0.0
  %2877 = vmatpush1.msra.mxu0 0.0
  %2878 = vmatprep.subr.mxu0 0.0
  %2879 = vmatpush1.msra.mxu0 0.0
  %2880 = vmatprep.subr.mxu0 0.0
  %2881 = vmatpush1.msra.mxu0 0.0
  %2882 = vmatprep.subr.mxu0 0.0
  %2883 = vmatpush1.msra.mxu0 0.0
  %2884 = vmatprep.subr.mxu0 0.0
  %2885 = vmatpush1.msra.mxu0 0.0
  %2886 = vmatprep.subr.mxu0 0.0
  %2887 = vmatpush1.msra.mxu0 0.0
  %2888 = vmatprep.subr.mxu0 0.0
  %2889 = vmatpush1.msra.mxu0 0.0
  %2890 = vmatprep.subr.mxu0 0.0
  %2891 = vmatpush1.msra.mxu0 0.0
  %2892 = vmatprep.subr.mxu0 0.0
  %2893 = vmatpush1.msra.mxu0 0.0
  %2894 = vmatprep.subr.mxu0 0.0
  %2895 = vmatpush1.msra.mxu0 0.0
  %2896 = vmatprep.subr.mxu0 0.0
  %2897 = vmatpush1.msra.mxu0 0.0
  %2898 = vmatprep.subr.mxu0 0.0
  %2899 = vmatpush1.msra.mxu0 0.0
  %2900 = vmatprep.subr.mxu0 0.0
  %2901 = vmatpush1.msra.mxu0 0.0
  %2902 = vmatprep.subr.mxu0 0.0
  %2903 = vmatpush1.msra.mxu0 0.0
  %2904 = vmatprep.subr.mxu0 0.0
  %2905 = vmatpush1.msra.mxu0 0.0
  %2906 = vmatprep.subr.mxu0 0.0
  %2907 = vmatpush1.msra.mxu0 0.0
  %2908 = vmatprep.subr.mxu0 0.0
  %2909 = vmatpush1.msra.mxu0 0.0
  %2910 = vmatprep.subr.mxu0 0.0
  %2911 = vmatpush1.msra.mxu0 0.0
  %2912 = vmatprep.subr.mxu0 0.0
  %2913 = vmatpush1.msra.mxu0 0.0
  %2914 = vmatprep.mubr.f32.mxu0 0.0
  %2915 = vmatmul.mubr.f32.gmra.mrb[0].mxu0 %v2848
  %v2916 = vpop.f32.mrb[0].mxu0
  %v2917 = vadd.f32 0.0, %v2916
  %v2918 = vpop.f32.mrb[0].mxu0
  %2919 = vdwg.mxu0
  %v2920 = vadd.f32 %v2844, %v2917
  %v2921 = vxor.u32 %v2920, 2147483648
  %v2922 = vmul.f32 %v2921, 1.442695
  %v2923 = vpow.pop %v2922
  %v2924 = vadd.f32 %v2923, 1.0
  %v2925 = vrcp.pop %v2924
  %v2926 = vmul.f32 1.0, %v2925
  %v2927 = vtanh.pop %v2920
  %v2928 = vmul.f32 %v2926, %v2837
  %2930 = vrot.lane.b32.xlu0 %v2927, 112
  %v2931 = vpop.permute.xlu0 %2930
  %v2933 = vmul.f32 %v2926, %v2931
  %2935 = vrot.lane.b32.xlu0 %v2933, 8
  %v2936 = vpop.permute.xlu0 %2935
  %v2938 = vadd.f32 %v2928, %v2936
  %v2939 = vtanh.pop %v2938
  %2941 = vrot.lane.b32.xlu0 %v2939, 16
  %v2942 = vpop.permute.xlu0 %2941
  %v2944 = vmul.f32 %v2926, %v2942
  %v2945 = vld [vmem:[%s4] sm:$0xff]
  %v2946 = vld [vmem:[#allocation4] sm:$0x1]
  %v2948 = vlaneseq
  %v2949 = vshrl.u32 %v2948, 7
  %v2950 = vsub.s32 0, %v2949
  %v2951 = vrot.slane %v2946, %v2950
  %2954 = vrot.lane.b32.xlu0 %v2944, 104
  %v2955 = vpop.permute.xlu0 %2954
  %v2956 = vsel %vm41, %v2955, 0
  %2958 = vmatprep.subr.mxu0 0.0
  %2959 = vmatpush1.msra.mxu0 %v2945
  %2960 = vmatprep.subr.mxu0 0.0
  %2961 = vmatpush1.msra.mxu0 0.0
  %2962 = vmatprep.subr.mxu0 0.0
  %2963 = vmatpush1.msra.mxu0 0.0
  %2964 = vmatprep.subr.mxu0 0.0
  %2965 = vmatpush1.msra.mxu0 0.0
  %2966 = vmatprep.subr.mxu0 0.0
  %2967 = vmatpush1.msra.mxu0 0.0
  %2968 = vmatprep.subr.mxu0 0.0
  %2969 = vmatpush1.msra.mxu0 0.0
  %2970 = vmatprep.subr.mxu0 0.0
  %2971 = vmatpush1.msra.mxu0 0.0
  %2972 = vmatprep.subr.mxu0 0.0
  %2973 = vmatpush1.msra.mxu0 0.0
  %2974 = vmatprep.subr.mxu0 0.0
  %2975 = vmatpush1.msra.mxu0 0.0
  %2976 = vmatprep.subr.mxu0 0.0
  %2977 = vmatpush1.msra.mxu0 0.0
  %2978 = vmatprep.subr.mxu0 0.0
  %2979 = vmatpush1.msra.mxu0 0.0
  %2980 = vmatprep.subr.mxu0 0.0
  %2981 = vmatpush1.msra.mxu0 0.0
  %2982 = vmatprep.subr.mxu0 0.0
  %2983 = vmatpush1.msra.mxu0 0.0
  %2984 = vmatprep.subr.mxu0 0.0
  %2985 = vmatpush1.msra.mxu0 0.0
  %2986 = vmatprep.subr.mxu0 0.0
  %2987 = vmatpush1.msra.mxu0 0.0
  %2988 = vmatprep.subr.mxu0 0.0
  %2989 = vmatpush1.msra.mxu0 0.0
  %2990 = vmatprep.subr.mxu0 0.0
  %2991 = vmatpush1.msra.mxu0 0.0
  %2992 = vmatprep.subr.mxu0 0.0
  %2993 = vmatpush1.msra.mxu0 0.0
  %2994 = vmatprep.subr.mxu0 0.0
  %2995 = vmatpush1.msra.mxu0 0.0
  %2996 = vmatprep.subr.mxu0 0.0
  %2997 = vmatpush1.msra.mxu0 0.0
  %2998 = vmatprep.subr.mxu0 0.0
  %2999 = vmatpush1.msra.mxu0 0.0
  %3000 = vmatprep.subr.mxu0 0.0
  %3001 = vmatpush1.msra.mxu0 0.0
  %3002 = vmatprep.subr.mxu0 0.0
  %3003 = vmatpush1.msra.mxu0 0.0
  %3004 = vmatprep.subr.mxu0 0.0
  %3005 = vmatpush1.msra.mxu0 0.0
  %3006 = vmatprep.subr.mxu0 0.0
  %3007 = vmatpush1.msra.mxu0 0.0
  %3008 = vmatprep.subr.mxu0 0.0
  %3009 = vmatpush1.msra.mxu0 0.0
  %3010 = vmatprep.subr.mxu0 0.0
  %3011 = vmatpush1.msra.mxu0 0.0
  %3012 = vmatprep.subr.mxu0 0.0
  %3013 = vmatpush1.msra.mxu0 0.0
  %3014 = vmatprep.subr.mxu0 0.0
  %3015 = vmatpush1.msra.mxu0 0.0
  %3016 = vmatprep.subr.mxu0 0.0
  %3017 = vmatpush1.msra.mxu0 0.0
  %3018 = vmatprep.subr.mxu0 0.0
  %3019 = vmatpush1.msra.mxu0 0.0
  %3020 = vmatprep.subr.mxu0 0.0
  %3021 = vmatpush1.msra.mxu0 0.0
  %3022 = vmatprep.mubr.f32.mxu0 0.0
  %3023 = vmatmul.mubr.f32.gmra.mrb[0].mxu0 %v2956
  %v3024 = vpop.f32.mrb[0].mxu0
  %v3025 = vadd.f32 %v2951, %v3024
  %v3026 = vpop.f32.mrb[0].mxu0
  %3027 = vdwg.mxu0
  %vm3028 = vcmask 7168
  %3029 = vst.msk [vmem:[%s6] sm:$0xff] %vm3028, %v3025
  // Predicated region
  $region26: #{tpu_custom_call.1} parent=0 // pred_check
    _
  $region27: #{tpu_custom_call.1} parent=0 // pred_check_branch
    %3031 = sbr.rel (0) target = $region29
  $region28: #{tpu_custom_call.1} parent=0 // pred_region
    _
  $region29: #{tpu_custom_call.1} parent=0 // pred_fallthru
    _
  // Predicated region
  $region30: #{tpu_custom_call.1} parent=0 // pred_check
    _
  $region31: #{tpu_custom_call.1} parent=0 // pred_check_branch
    %3033 = sbr.rel (0) target = $region33
  $region32: #{tpu_custom_call.1} parent=0 // pred_region
    _
  $region33: #{tpu_custom_call.1} parent=0 // pred_fallthru
    _

</llo_original>
